<compile_context>
chip_gen: v6e
topology: v6e:2x2x1
jax: 0.10.0
libtpu: 0.0.40
codegen_flags: <defaults>
</compile_context>

<pallas_src>
import functools
import math

import jax
import jax.numpy as jnp
from jax import lax
from jax.experimental import pallas as pl
from jax.experimental.pallas import tpu as pltpu


def _recurrence_kernel(Tc, H, unroll,
                       x0_ref,        # (B, E)      bf16   flattened encoder features
                       mean_ref,      # (B, E)      bf16   pixel-mean of encoder features
                       emb_ref,       # (Tc*B, E)   bf16   embedded captions, this chunk (time-major)
                       w_ih_ref,      # (E, 4H)     bf16   LSTM input weights (i,f,g,o)
                       w_hh_ref,      # (H, 4H)     bf16   LSTM hidden weights
                       b_lstm_ref,    # (1, 4H)     f32    b_ih + b_hh (combined)
                       w_h0_ref,      # (E, H)      bf16   init_h weight
                       b_h0_ref,      # (1, H)      f32    init_h bias
                       w_c0_ref,      # (E, H)      bf16   init_c weight
                       b_c0_ref,      # (1, H)      f32    init_c bias
                       h_out_ref,     # (Tc*B, H)   bf16   hidden states, this chunk
                       h_sc, c_sc,    # (B, H)      f32    carried LSTM state (scratch)
                       gx_sc,         # (Tc*B, 4H)  f32    hoisted input gates (scratch)
                       hout_sc):      # (Tc*B, H)   f32    chunk hidden states (scratch)
    c_idx = pl.program_id(0)
    B = x0_ref.shape[0]

    w_ih = w_ih_ref[...]
    w_hh = w_hh_ref[...]
    b_lstm = b_lstm_ref[...]

    def gate_math(gates, c):
        i = jax.nn.sigmoid(gates[:, 0 * H:1 * H])
        f = jax.nn.sigmoid(gates[:, 1 * H:2 * H])
        g = jnp.tanh(gates[:, 2 * H:3 * H])
        o = jax.nn.sigmoid(gates[:, 3 * H:4 * H])
        c_new = f * c + i * g
        h_new = o * jnp.tanh(c_new)
        return h_new, c_new

    # init_hidden_state + the initial LSTM step on the flattened encoder
    # features, only once (first grid step).
    @pl.when(c_idx == 0)
    def _():
        mean_enc = mean_ref[...]
        h0 = (jnp.dot(mean_enc, w_h0_ref[...],
                      preferred_element_type=jnp.float32) + b_h0_ref[...])
        c0 = (jnp.dot(mean_enc, w_c0_ref[...],
                      preferred_element_type=jnp.float32) + b_c0_ref[...])
        g0 = (jnp.dot(x0_ref[...], w_ih, preferred_element_type=jnp.float32)
              + jnp.dot(h0.astype(jnp.bfloat16), w_hh,
                        preferred_element_type=jnp.float32)
              + b_lstm)
        h1, c1 = gate_math(g0, c0)
        h_sc[...] = h1
        c_sc[...] = c1

    # Hoisted input projection: one MXU-shaped matmul for the whole chunk.
    gx_sc[...] = (jnp.dot(emb_ref[...], w_ih, preferred_element_type=jnp.float32)
                  + b_lstm)

    # Serial recurrence.  No per-step `decode_length > t` masking: decode
    # lengths are fixed per row (rows never reactivate), so inactive rows'
    # states only feed their own logits, which Phase 2 zeroes.
    def body(i, carry):
        h, c = carry
        row = pl.multiple_of(i * B, B)
        gates = (gx_sc[pl.ds(row, B), :]
                 + jnp.dot(h.astype(jnp.bfloat16), w_hh,
                           preferred_element_type=jnp.float32))
        h_new, c_new = gate_math(gates, c)
        hout_sc[pl.ds(row, B), :] = h_new
        return h_new, c_new

    h_fin, c_fin = lax.fori_loop(0, Tc, body, (h_sc[...], c_sc[...]),
                                 unroll=unroll)
    h_sc[...] = h_fin
    c_sc[...] = c_fin
    # One aligned, lane-dense bf16 writeback of the whole chunk.
    h_out_ref[...] = hout_sc[...].astype(h_out_ref.dtype)


def _fc_kernel(dec_len_ref, h_ref, w_fc_ref, b_fc_ref, out_ref):
    # TODO(synk): nn.Dropout(p=0.5) implemented as identity (eval-mode semantics).
    Bt, T_pad, Vt = out_ref.shape
    preds = (jnp.dot(h_ref[...], w_fc_ref[...],
                     preferred_element_type=jnp.float32) + b_fc_ref[...])
    # Rows are batch-major (row = b_local * T_pad + t); T_pad % 8 == 0, so this
    # leading-dim split is layout-preserving.
    preds = preds.reshape(Bt, T_pad, Vt)
    t = lax.broadcasted_iota(jnp.int32, (Bt, T_pad, 1), 1)
    active = dec_len_ref[...] > t            # (Bt,1,1) vs (Bt,T_pad,1)
    out_ref[...] = jnp.where(active, preds, 0.0)


def decoder_forward(params, encoder_out, encoded_captions, caption_lengths,
                    *, time_chunk=None):
    """Mirrors Decoder.forward (eval mode). Returns (predictions,
    sorted_captions, decode_lengths, sort_idx). predictions has the static
    time extent (max_caption_len - 1); steps past the true max decode length
    stay zero, matching the zero-initialised predictions tensor."""
    B, num_pixels, enc_dim = encoder_out.shape
    E = params['embedding'].shape[1]
    H = params['w_hh'].shape[0]
    V = params['w_fc'].shape[1]
    T = encoded_captions.shape[1]
    assert num_pixels * enc_dim == E and enc_dim == E, (
        "module shape constraints require num_pixels == 1, encoder_dim == embed_dim")
    assert T >= 2
    # TODO(synk): pad B/E/H/V in the wrapper for sizes not aligned to (8, 128).
    assert B % 8 == 0 and E % 128 == 0 and H % 128 == 0 and V % 128 == 0

    bf16 = jnp.bfloat16

    # Sort by caption length, descending (as in the PyTorch module).
    lengths = caption_lengths[:, 0]
    sort_idx = jnp.argsort(-lengths)
    lengths = lengths[sort_idx]
    encoder_out = encoder_out[sort_idx]
    encoded_captions = encoded_captions[sort_idx]

    # Plain-JAX glue: embedding gather, pixel mean, flattening.
    embeddings = jnp.take(params['embedding'], encoded_captions, axis=0)   # (B,T,E)
    mean_enc = jnp.mean(encoder_out.astype(jnp.float32), axis=1)           # (B,E)
    x0 = encoder_out.reshape(B, -1).astype(jnp.float32)                    # (B,E)

    decode_lengths = (lengths - 1).astype(jnp.int32)
    # Static decode horizon — avoids the host round-trip on max(decode_lengths).
    T_dec = T - 1

    # Time-chunk selection: feed the MXU >= 256 rows per hoisted matmul and
    # keep the chunk sublane-aligned (Tc % 8 == 0 -> T_pad % 8 == 0).
    if time_chunk is None:
        time_chunk = max(8, -(-256 // B))
    Tc = min(time_chunk, T_dec)
    Tc = ((Tc + 7) // 8) * 8
    n_chunks = -(-T_dec // Tc)
    T_pad = n_chunks * Tc
    rows = T_pad * B

    emb_tm = jnp.transpose(embeddings[:, :T_dec, :], (1, 0, 2))            # (T_dec,B,E)
    emb_tm = jnp.pad(emb_tm, ((0, T_pad - T_dec), (0, 0), (0, 0)))
    emb_flat = emb_tm.reshape(rows, E).astype(bf16)                        # time-major

    def nbytes(shape, dt):
        return math.prod(shape) * jnp.dtype(dt).itemsize

    # ---------------- Phase 1: LSTM recurrence over time chunks ----------------
    p1_blocks = [((B, E), bf16), ((B, E), bf16), ((Tc * B, E), bf16),
                 ((E, 4 * H), bf16), ((H, 4 * H), bf16), ((1, 4 * H), jnp.float32),
                 ((E, H), bf16), ((1, H), jnp.float32),
                 ((E, H), bf16), ((1, H), jnp.float32),
                 ((Tc * B, H), bf16)]
    p1_scratch = [((B, H), jnp.float32), ((B, H), jnp.float32),
                  ((Tc * B, 4 * H), jnp.float32), ((Tc * B, H), jnp.float32)]
    # The pipeline double-buffers every block (even constant-index weights).
    # TODO(synk): on v7x (64 MiB VMEM) with large E/H, single-buffer the
    # constant-index weight specs via pipeline_mode=pl.Buffered(1).
    p1_vmem = (2 * sum(nbytes(s, d) for s, d in p1_blocks)
               + sum(nbytes(s, d) for s, d in p1_scratch))
    p1_limit = int(min(112 << 20, max(32 << 20, int(p1_vmem * 1.5) + (4 << 20))))

    unroll = 4 if Tc > 8 else True   # partial unroll for long chunks (vreg pressure)

    h_tm = pl.pallas_call(
        functools.partial(_recurrence_kernel, Tc, H, unroll),
        out_shape=jax.ShapeDtypeStruct((rows, H), bf16),
        grid_spec=pltpu.PrefetchScalarGridSpec(
            num_scalar_prefetch=0,
            grid=(n_chunks,),
            in_specs=[
                pl.BlockSpec((B, E), lambda c: (0, 0)),           # x0
                pl.BlockSpec((B, E), lambda c: (0, 0)),           # mean
                pl.BlockSpec((Tc * B, E), lambda c: (c, 0)),      # emb chunk (pipelined)
                pl.BlockSpec((E, 4 * H), lambda c: (0, 0)),       # w_ih (resident)
                pl.BlockSpec((H, 4 * H), lambda c: (0, 0)),       # w_hh (resident)
                pl.BlockSpec((1, 4 * H), lambda c: (0, 0)),       # b_lstm
                pl.BlockSpec((E, H), lambda c: (0, 0)),           # w_h0
                pl.BlockSpec((1, H), lambda c: (0, 0)),           # b_h0
                pl.BlockSpec((E, H), lambda c: (0, 0)),           # w_c0
                pl.BlockSpec((1, H), lambda c: (0, 0)),           # b_c0
            ],
            out_specs=pl.BlockSpec((Tc * B, H), lambda c: (c, 0)),
            scratch_shapes=[
                pltpu.VMEM((B, H), jnp.float32),                  # h carry
                pltpu.VMEM((B, H), jnp.float32),                  # c carry
                pltpu.VMEM((Tc * B, 4 * H), jnp.float32),         # hoisted input gates
                pltpu.VMEM((Tc * B, H), jnp.float32),             # chunk hidden states
            ]),
        compiler_params=pltpu.CompilerParams(
            dimension_semantics=("arbitrary",),
            vmem_limit_bytes=p1_limit),
    )(x0.astype(bf16), mean_enc.astype(bf16), emb_flat,
      params['w_ih'].astype(bf16), params['w_hh'].astype(bf16), params['b_lstm'],
      params['w_h0'].astype(bf16), params['b_h0'],
      params['w_c0'].astype(bf16), params['b_c0'])

    # Relayout the SMALL bf16 hidden tensor to batch-major so Phase 2 emits the
    # logits directly in (B, T_pad, V) layout — no HBM round-trip transpose of
    # the (much larger) f32 logits tensor.
    h_bm = h_tm.reshape(T_pad, B, H).transpose(1, 0, 2).reshape(rows, H)

    # ---------------- Phase 2: deferred, tiled fc projection ----------------
    Vt = next(v for v in (512, 256, 128) if V % v == 0)    # 256-wide-MXU friendly
    bt_cands = [d for d in range(8, B + 1, 8) if B % d == 0]
    Bt = bt_cands[0]
    for d in bt_cands:                                     # biggest tile <= ~1024 rows
        if d * T_pad <= 1024:
            Bt = d
    Rt = Bt * T_pad                                        # multiple of 8 by construction

    p2_blocks = [((Bt, 1, 1), jnp.int32), ((Rt, H), bf16),
                 ((H, Vt), bf16), ((1, Vt), jnp.float32),
                 ((Bt, T_pad, Vt), jnp.float32)]
    p2_vmem = 2 * sum(nbytes(s, d) for s, d in p2_blocks)
    p2_limit = int(min(112 << 20, max(32 << 20, int(p2_vmem * 1.5) + (4 << 20))))

    dec_len_3d = decode_lengths.reshape(B, 1, 1)

    out = pl.pallas_call(
        _fc_kernel,
        out_shape=jax.ShapeDtypeStruct((B, T_pad, V), jnp.float32),
        grid_spec=pltpu.PrefetchScalarGridSpec(
            num_scalar_prefetch=0,
            grid=(B // Bt, V // Vt),
            in_specs=[
                pl.BlockSpec((Bt, 1, 1), lambda r, j: (r, 0, 0)),   # decode lengths
                pl.BlockSpec((Rt, H), lambda r, j: (r, 0)),         # hidden states (bf16)
                pl.BlockSpec((H, Vt), lambda r, j: (0, j)),         # w_fc tile
                pl.BlockSpec((1, Vt), lambda r, j: (0, j)),         # b_fc tile
            ],
            out_specs=pl.BlockSpec((Bt, T_pad, Vt), lambda r, j: (r, 0, j))),
        compiler_params=pltpu.CompilerParams(
            dimension_semantics=("parallel", "parallel"),
            vmem_limit_bytes=p2_limit),
    )(dec_len_3d, h_bm, params['w_fc'].astype(bf16), params['b_fc'])

    # NOTE: logits kept f32 to match the PyTorch predictions tensor; emit bf16
    # from _fc_kernel if the downstream loss accepts it (halves the largest
    # HBM store).
    predictions = out[:, :T_dec, :]
    return predictions, encoded_captions, decode_lengths, sort_idx


def decoder_reference(params, encoder_out, encoded_captions, caption_lengths):
    """Pure-JAX reference mirroring the PyTorch forward (eval mode), with the
    same bf16-weight / f32-accumulate precision policy as the kernels."""
    bf16 = jnp.bfloat16
    B = encoder_out.shape[0]
    H = params['w_hh'].shape[0]
    T = encoded_captions.shape[1]

    lengths = caption_lengths[:, 0]
    sort_idx = jnp.argsort(-lengths)
    lengths = lengths[sort_idx]
    encoder_out = encoder_out[sort_idx]
    encoded_captions = encoded_captions[sort_idx]

    emb = jnp.take(params['embedding'], encoded_captions, axis=0).astype(bf16)
    mean_enc = jnp.mean(encoder_out.astype(jnp.float32), axis=1).astype(bf16)
    x0 = encoder_out.reshape(B, -1).astype(bf16)
    dec_len = (lengths - 1).astype(jnp.int32)[:, None]
    T_dec = T - 1

    w_ih = params['w_ih'].astype(bf16)
    w_hh = params['w_hh'].astype(bf16)
    w_fc = params['w_fc'].astype(bf16)

    def lstm(x_bf, h, c):
        gates = (jnp.dot(x_bf, w_ih, preferred_element_type=jnp.float32)
                 + jnp.dot(h.astype(bf16), w_hh, preferred_element_type=jnp.float32)
                 + params['b_lstm'])
        i = jax.nn.sigmoid(gates[:, 0 * H:1 * H])
        f = jax.nn.sigmoid(gates[:, 1 * H:2 * H])
        g = jnp.tanh(gates[:, 2 * H:3 * H])
        o = jax.nn.sigmoid(gates[:, 3 * H:4 * H])
        c_new = f * c + i * g
        return o * jnp.tanh(c_new), c_new

    h = (jnp.dot(mean_enc, params['w_h0'].astype(bf16),
                 preferred_element_type=jnp.float32) + params['b_h0'])
    c = (jnp.dot(mean_enc, params['w_c0'].astype(bf16),
                 preferred_element_type=jnp.float32) + params['b_c0'])
    h, c = lstm(x0, h, c)

    preds = []
    for t in range(T_dec):
        h_new, c_new = lstm(emb[:, t, :], h, c)
        p = (jnp.dot(h_new.astype(bf16), w_fc,
                     preferred_element_type=jnp.float32) + params['b_fc'])
        active = dec_len > t
        preds.append(jnp.where(active, p, 0.0))
        h = jnp.where(active, h_new, h)
        c = jnp.where(active, c_new, c)
    return jnp.stack(preds, axis=1)


def init_params(key, embed_dim, decoder_dim, vocab_size):
    E, H, V = embed_dim, decoder_dim, vocab_size
    ks = jax.random.split(key, 9)

    def u(k, shape, a):
        return jax.random.uniform(k, shape, jnp.float32, -a, a)

    k_lstm = 1.0 / (H ** 0.5)
    k_lin = 1.0 / (E ** 0.5)
    return dict(
        embedding=u(ks[0], (V, E), 0.1),        # embedding.weight ~ U(-0.1, 0.1)
        w_ih=u(ks[1], (E, 4 * H), k_lstm),      # LSTMCell weight_ih^T
        w_hh=u(ks[2], (H, 4 * H), k_lstm),      # LSTMCell weight_hh^T
        b_lstm=u(ks[3], (1, 4 * H), k_lstm),    # b_ih + b_hh (combined)
        w_h0=u(ks[4], (E, H), k_lin),           # init_h.weight^T
        b_h0=u(ks[5], (1, H), k_lin),           # init_h.bias
        w_c0=u(ks[6], (E, H), k_lin),           # init_c.weight^T
        b_c0=u(ks[7], (1, H), k_lin),           # init_c.bias
        w_fc=u(ks[8], (H, V), 0.1),             # fc.weight^T ~ U(-0.1, 0.1)
        b_fc=jnp.zeros((1, V), jnp.float32),    # fc.bias = 0
    )


if __name__ == "__main__":
    embed_dim, decoder_dim, vocab_size = 128, 128, 256
    B, num_pixels, max_cap_len = 8, 1, 8   # num_pixels must be 1 (see layout note)

    key = jax.random.PRNGKey(0)
    pkey, k1, k2, k3 = jax.random.split(key, 4)
    params = init_params(pkey, embed_dim, decoder_dim, vocab_size)

    encoder_out = jax.random.normal(k1, (B, num_pixels, embed_dim), jnp.float32)
    encoded_captions = jax.random.randint(k2, (B, max_cap_len), 0, vocab_size,
                                          dtype=jnp.int32)
    caption_lengths = jax.random.randint(k3, (B, 1), 2, max_cap_len + 1,
                                         dtype=jnp.int32)
    caption_lengths = caption_lengths.at[0, 0].set(max_cap_len)

    preds, sorted_caps, dec_lens, sort_idx = decoder_forward(
        params, encoder_out, encoded_captions, caption_lengths)
    jax.block_until_ready(preds)
    assert preds.shape == (B, max_cap_len - 1, vocab_size)

    preds_ref = decoder_reference(params, encoder_out, encoded_captions,
                                  caption_lengths)
    max_err = float(jnp.max(jnp.abs(preds - preds_ref)))
    assert max_err < 5e-2, f"kernel/reference mismatch: max|diff|={max_err}"
    print("KERNEL_OK")
</pallas_src>

<mosaic_0001>
module attributes {stable_mosaic.version = 11 : i64} {
  func.func @_recurrence_kernel(%arg0: i32, %arg1: memref<8x128xbf16, #tpu.memory_space<vmem>>, %arg2: memref<8x128xbf16, #tpu.memory_space<vmem>>, %arg3: memref<64x128xbf16, #tpu.memory_space<vmem>>, %arg4: memref<128x512xbf16, #tpu.memory_space<vmem>>, %arg5: memref<128x512xbf16, #tpu.memory_space<vmem>>, %arg6: memref<1x512xf32, #tpu.memory_space<vmem>>, %arg7: memref<128x128xbf16, #tpu.memory_space<vmem>>, %arg8: memref<1x128xf32, #tpu.memory_space<vmem>>, %arg9: memref<128x128xbf16, #tpu.memory_space<vmem>>, %arg10: memref<1x128xf32, #tpu.memory_space<vmem>>, %arg11: memref<64x128xbf16, #tpu.memory_space<vmem>>, %arg12: memref<8x128xf32, #tpu.memory_space<vmem>>, %arg13: memref<8x128xf32, #tpu.memory_space<vmem>>, %arg14: memref<64x512xf32, #tpu.memory_space<vmem>>, %arg15: memref<64x128xf32, #tpu.memory_space<vmem>>) attributes {dimension_semantics = [#tpu.dimension_semantics<arbitrary>], iteration_bounds = array<i64: 1>, scalar_prefetch = 0 : i64, scratch_operands = 4 : i64, tpu.core_type = #tpu.core_type<tc>, window_params = [{pipeline_mode = #tpu.pipeline_mode<synchronous>, transform_indices = @transform_0, window_bounds = array<i64: 8, 128>}, {pipeline_mode = #tpu.pipeline_mode<synchronous>, transform_indices = @transform_1, window_bounds = array<i64: 8, 128>}, {transform_indices = @transform_2, window_bounds = array<i64: 64, 128>}, {pipeline_mode = #tpu.pipeline_mode<synchronous>, transform_indices = @transform_3, window_bounds = array<i64: 128, 512>}, {pipeline_mode = #tpu.pipeline_mode<synchronous>, transform_indices = @transform_4, window_bounds = array<i64: 128, 512>}, {pipeline_mode = #tpu.pipeline_mode<synchronous>, transform_indices = @transform_5, window_bounds = array<i64: 1, 512>}, {pipeline_mode = #tpu.pipeline_mode<synchronous>, transform_indices = @transform_6, window_bounds = array<i64: 128, 128>}, {pipeline_mode = #tpu.pipeline_mode<synchronous>, transform_indices = @transform_7, window_bounds = array<i64: 1, 128>}, {pipeline_mode = #tpu.pipeline_mode<synchronous>, transform_indices = @transform_8, window_bounds = array<i64: 128, 128>}, {pipeline_mode = #tpu.pipeline_mode<synchronous>, transform_indices = @transform_9, window_bounds = array<i64: 1, 128>}, {transform_indices = @transform_10, window_bounds = array<i64: 64, 128>}]} {
    %c0 = arith.constant 0 : index
    %c0_0 = arith.constant 0 : index
    %0 = vector.load %arg4[%c0, %c0_0] : memref<128x512xbf16, #tpu.memory_space<vmem>>, vector<128x512xbf16>
    %c0_1 = arith.constant 0 : index
    %c0_2 = arith.constant 0 : index
    %1 = vector.load %arg5[%c0_1, %c0_2] : memref<128x512xbf16, #tpu.memory_space<vmem>>, vector<128x512xbf16>
    %c0_3 = arith.constant 0 : index
    %c0_4 = arith.constant 0 : index
    %2 = vector.load %arg6[%c0_3, %c0_4] : memref<1x512xf32, #tpu.memory_space<vmem>>, vector<1x512xf32>
    %c0_i32 = arith.constant 0 : i32
    %3 = arith.cmpi eq, %arg0, %c0_i32 : i32
    %4 = arith.extui %3 : i1 to i32
    %c0_i32_5 = arith.constant 0 : i32
    %5 = arith.cmpi ne, %4, %c0_i32_5 : i32
    scf.if %5 {
      %c0_79 = arith.constant 0 : index
      %c0_80 = arith.constant 0 : index
      %290 = vector.load %arg2[%c0_79, %c0_80] : memref<8x128xbf16, #tpu.memory_space<vmem>>, vector<8x128xbf16>
      %c0_81 = arith.constant 0 : index
      %c0_82 = arith.constant 0 : index
      %291 = vector.load %arg7[%c0_81, %c0_82] : memref<128x128xbf16, #tpu.memory_space<vmem>>, vector<128x128xbf16>
      %cst_83 = arith.constant dense<0.000000e+00> : vector<8x128xf32>
      %292 = tpu.matmul %290, %291, %cst_83 {dimension_numbers = #tpu.dot_dimension_numbers<[1], [0], [0], [1], [0, 0, 1, 1], [], []>} : vector<8x128xbf16>, vector<128x128xbf16>, vector<8x128xf32> -> vector<8x128xf32>
      %c0_84 = arith.constant 0 : index
      %c0_85 = arith.constant 0 : index
      %293 = vector.load %arg8[%c0_84, %c0_85] : memref<1x128xf32, #tpu.memory_space<vmem>>, vector<1x128xf32>
      %294 = vector.broadcast %293 : vector<1x128xf32> to vector<8x128xf32>
      %295 = arith.addf %292, %294 : vector<8x128xf32>
      %c0_86 = arith.constant 0 : index
      %c0_87 = arith.constant 0 : index
      %296 = vector.load %arg9[%c0_86, %c0_87] : memref<128x128xbf16, #tpu.memory_space<vmem>>, vector<128x128xbf16>
      %cst_88 = arith.constant dense<0.000000e+00> : vector<8x128xf32>
      %297 = tpu.matmul %290, %296, %cst_88 {dimension_numbers = #tpu.dot_dimension_numbers<[1], [0], [0], [1], [0, 0, 1, 1], [], []>} : vector<8x128xbf16>, vector<128x128xbf16>, vector<8x128xf32> -> vector<8x128xf32>
      %c0_89 = arith.constant 0 : index
      %c0_90 = arith.constant 0 : index
      %298 = vector.load %arg10[%c0_89, %c0_90] : memref<1x128xf32, #tpu.memory_space<vmem>>, vector<1x128xf32>
      %299 = vector.broadcast %298 : vector<1x128xf32> to vector<8x128xf32>
      %300 = arith.addf %297, %299 : vector<8x128xf32>
      %c0_91 = arith.constant 0 : index
      %c0_92 = arith.constant 0 : index
      %301 = vector.load %arg1[%c0_91, %c0_92] : memref<8x128xbf16, #tpu.memory_space<vmem>>, vector<8x128xbf16>
      %cst_93 = arith.constant dense<0.000000e+00> : vector<8x512xf32>
      %302 = tpu.matmul %301, %0, %cst_93 {dimension_numbers = #tpu.dot_dimension_numbers<[1], [0], [0], [1], [0, 0, 1, 1], [], []>} : vector<8x128xbf16>, vector<128x512xbf16>, vector<8x512xf32> -> vector<8x512xf32>
      %303 = arith.truncf %295 : vector<8x128xf32> to vector<8x128xbf16>
      %cst_94 = arith.constant dense<0.000000e+00> : vector<8x512xf32>
      %304 = tpu.matmul %303, %1, %cst_94 {dimension_numbers = #tpu.dot_dimension_numbers<[1], [0], [0], [1], [0, 0, 1, 1], [], []>} : vector<8x128xbf16>, vector<128x512xbf16>, vector<8x512xf32> -> vector<8x512xf32>
      %305 = arith.addf %302, %304 : vector<8x512xf32>
      %306 = vector.broadcast %2 : vector<1x512xf32> to vector<8x512xf32>
      %307 = arith.addf %305, %306 : vector<8x512xf32>
      %308 = vector.extract_strided_slice %307 {offsets = [0, 0], sizes = [8, 128], strides = [1, 1]} : vector<8x512xf32> to vector<8x128xf32>
      %309 = arith.negf %308 : vector<8x128xf32>
      %310 = math.exp %309 : vector<8x128xf32>
      %cst_95 = arith.constant 1.000000e+00 : f32
      %311 = vector.broadcast %cst_95 : f32 to vector<8x128xf32>
      %312 = arith.addf %311, %310 : vector<8x128xf32>
      %313 = arith.divf %311, %312 : vector<8x128xf32>
      %314 = vector.extract_strided_slice %307 {offsets = [0, 128], sizes = [8, 128], strides = [1, 1]} : vector<8x512xf32> to vector<8x128xf32>
      %315 = arith.negf %314 : vector<8x128xf32>
      %316 = math.exp %315 : vector<8x128xf32>
      %cst_96 = arith.constant 1.000000e+00 : f32
      %317 = vector.broadcast %cst_96 : f32 to vector<8x128xf32>
      %318 = arith.addf %317, %316 : vector<8x128xf32>
      %319 = arith.divf %317, %318 : vector<8x128xf32>
      %320 = vector.extract_strided_slice %307 {offsets = [0, 256], sizes = [8, 128], strides = [1, 1]} : vector<8x512xf32> to vector<8x128xf32>
      %321 = math.tanh %320 : vector<8x128xf32>
      %322 = vector.extract_strided_slice %307 {offsets = [0, 384], sizes = [8, 128], strides = [1, 1]} : vector<8x512xf32> to vector<8x128xf32>
      %323 = arith.negf %322 : vector<8x128xf32>
      %324 = math.exp %323 : vector<8x128xf32>
      %cst_97 = arith.constant 1.000000e+00 : f32
      %325 = vector.broadcast %cst_97 : f32 to vector<8x128xf32>
      %326 = arith.addf %325, %324 : vector<8x128xf32>
      %327 = arith.divf %325, %326 : vector<8x128xf32>
      %328 = arith.mulf %319, %300 : vector<8x128xf32>
      %329 = arith.mulf %313, %321 : vector<8x128xf32>
      %330 = arith.addf %328, %329 : vector<8x128xf32>
      %331 = math.tanh %330 : vector<8x128xf32>
      %332 = arith.mulf %327, %331 : vector<8x128xf32>
      %c0_98 = arith.constant 0 : index
      %c0_99 = arith.constant 0 : index
      %333 = vector.load %arg12[%c0_98, %c0_99] : memref<8x128xf32, #tpu.memory_space<vmem>>, vector<8x128xf32>
      tpu.vector_store %arg12[%c0_98, %c0_99], %332 {strides = array<i32>} : memref<8x128xf32, #tpu.memory_space<vmem>>, vector<8x128xf32>,
      %c0_100 = arith.constant 0 : index
      %c0_101 = arith.constant 0 : index
      %334 = vector.load %arg13[%c0_100, %c0_101] : memref<8x128xf32, #tpu.memory_space<vmem>>, vector<8x128xf32>
      tpu.vector_store %arg13[%c0_100, %c0_101], %330 {strides = array<i32>} : memref<8x128xf32, #tpu.memory_space<vmem>>, vector<8x128xf32>,
    } else {
    }
    %c0_6 = arith.constant 0 : index
    %c0_7 = arith.constant 0 : index
    %6 = vector.load %arg3[%c0_6, %c0_7] : memref<64x128xbf16, #tpu.memory_space<vmem>>, vector<64x128xbf16>
    %cst = arith.constant dense<0.000000e+00> : vector<64x512xf32>
    %7 = tpu.matmul %6, %0, %cst {dimension_numbers = #tpu.dot_dimension_numbers<[1], [0], [0], [1], [0, 0, 1, 1], [], []>} : vector<64x128xbf16>, vector<128x512xbf16>, vector<64x512xf32> -> vector<64x512xf32>
    %8 = vector.broadcast %2 : vector<1x512xf32> to vector<64x512xf32>
    %9 = arith.addf %7, %8 : vector<64x512xf32>
    %c0_8 = arith.constant 0 : index
    %c0_9 = arith.constant 0 : index
    %10 = vector.load %arg14[%c0_8, %c0_9] : memref<64x512xf32, #tpu.memory_space<vmem>>, vector<64x512xf32>
    tpu.vector_store %arg14[%c0_8, %c0_9], %9 {strides = array<i32>} : memref<64x512xf32, #tpu.memory_space<vmem>>, vector<64x512xf32>,
    %c0_10 = arith.constant 0 : index
    %c0_11 = arith.constant 0 : index
    %11 = vector.load %arg12[%c0_10, %c0_11] : memref<8x128xf32, #tpu.memory_space<vmem>>, vector<8x128xf32>
    %c0_12 = arith.constant 0 : index
    %c0_13 = arith.constant 0 : index
    %12 = vector.load %arg13[%c0_12, %c0_13] : memref<8x128xf32, #tpu.memory_space<vmem>>, vector<8x128xf32>
    %c0_i32_14 = arith.constant 0 : i32
    %c8_i32 = arith.constant 8 : i32
    %13 = arith.muli %c0_i32_14, %c8_i32 : i32
    %14 = tpu.assume_multiple %13, 8 : i32
    %15 = arith.index_cast %14 : i32 to index
    %c0_15 = arith.constant 0 : index
    %16 = vector.load %arg14[%15, %c0_15] : memref<64x512xf32, #tpu.memory_space<vmem>>, vector<8x512xf32>
    %17 = arith.truncf %11 : vector<8x128xf32> to vector<8x128xbf16>
    %cst_16 = arith.constant dense<0.000000e+00> : vector<8x512xf32>
    %18 = tpu.matmul %17, %1, %cst_16 {dimension_numbers = #tpu.dot_dimension_numbers<[1], [0], [0], [1], [0, 0, 1, 1], [], []>} : vector<8x128xbf16>, vector<128x512xbf16>, vector<8x512xf32> -> vector<8x512xf32>
    %19 = arith.addf %16, %18 : vector<8x512xf32>
    %20 = vector.extract_strided_slice %19 {offsets = [0, 0], sizes = [8, 128], strides = [1, 1]} : vector<8x512xf32> to vector<8x128xf32>
    %21 = arith.negf %20 : vector<8x128xf32>
    %22 = math.exp %21 : vector<8x128xf32>
    %cst_17 = arith.constant 1.000000e+00 : f32
    %23 = vector.broadcast %cst_17 : f32 to vector<8x128xf32>
    %24 = arith.addf %23, %22 : vector<8x128xf32>
    %25 = arith.divf %23, %24 : vector<8x128xf32>
    %26 = vector.extract_strided_slice %19 {offsets = [0, 128], sizes = [8, 128], strides = [1, 1]} : vector<8x512xf32> to vector<8x128xf32>
    %27 = arith.negf %26 : vector<8x128xf32>
    %28 = math.exp %27 : vector<8x128xf32>
    %cst_18 = arith.constant 1.000000e+00 : f32
    %29 = vector.broadcast %cst_18 : f32 to vector<8x128xf32>
    %30 = arith.addf %29, %28 : vector<8x128xf32>
    %31 = arith.divf %29, %30 : vector<8x128xf32>
    %32 = vector.extract_strided_slice %19 {offsets = [0, 256], sizes = [8, 128], strides = [1, 1]} : vector<8x512xf32> to vector<8x128xf32>
    %33 = math.tanh %32 : vector<8x128xf32>
    %34 = vector.extract_strided_slice %19 {offsets = [0, 384], sizes = [8, 128], strides = [1, 1]} : vector<8x512xf32> to vector<8x128xf32>
    %35 = arith.negf %34 : vector<8x128xf32>
    %36 = math.exp %35 : vector<8x128xf32>
    %cst_19 = arith.constant 1.000000e+00 : f32
    %37 = vector.broadcast %cst_19 : f32 to vector<8x128xf32>
    %38 = arith.addf %37, %36 : vector<8x128xf32>
    %39 = arith.divf %37, %38 : vector<8x128xf32>
    %40 = arith.mulf %31, %12 : vector<8x128xf32>
    %41 = arith.mulf %25, %33 : vector<8x128xf32>
    %42 = arith.addf %40, %41 : vector<8x128xf32>
    %43 = math.tanh %42 : vector<8x128xf32>
    %44 = arith.mulf %39, %43 : vector<8x128xf32>
    %45 = arith.index_cast %14 : i32 to index
    %c0_20 = arith.constant 0 : index
    %46 = vector.load %arg15[%45, %c0_20] : memref<64x128xf32, #tpu.memory_space<vmem>>, vector<8x128xf32>
    tpu.vector_store %arg15[%45, %c0_20], %44 {strides = array<i32>} : memref<64x128xf32, #tpu.memory_space<vmem>>, vector<8x128xf32>,
    %c1_i32 = arith.constant 1 : i32
    %c8_i32_21 = arith.constant 8 : i32
    %47 = arith.muli %c1_i32, %c8_i32_21 : i32
    %48 = tpu.assume_multiple %47, 8 : i32
    %49 = arith.index_cast %48 : i32 to index
    %c0_22 = arith.constant 0 : index
    %50 = vector.load %arg14[%49, %c0_22] : memref<64x512xf32, #tpu.memory_space<vmem>>, vector<8x512xf32>
    %51 = arith.truncf %44 : vector<8x128xf32> to vector<8x128xbf16>
    %cst_23 = arith.constant dense<0.000000e+00> : vector<8x512xf32>
    %52 = tpu.matmul %51, %1, %cst_23 {dimension_numbers = #tpu.dot_dimension_numbers<[1], [0], [0], [1], [0, 0, 1, 1], [], []>} : vector<8x128xbf16>, vector<128x512xbf16>, vector<8x512xf32> -> vector<8x512xf32>
    %53 = arith.addf %50, %52 : vector<8x512xf32>
    %54 = vector.extract_strided_slice %53 {offsets = [0, 0], sizes = [8, 128], strides = [1, 1]} : vector<8x512xf32> to vector<8x128xf32>
    %55 = arith.negf %54 : vector<8x128xf32>
    %56 = math.exp %55 : vector<8x128xf32>
    %cst_24 = arith.constant 1.000000e+00 : f32
    %57 = vector.broadcast %cst_24 : f32 to vector<8x128xf32>
    %58 = arith.addf %57, %56 : vector<8x128xf32>
    %59 = arith.divf %57, %58 : vector<8x128xf32>
    %60 = vector.extract_strided_slice %53 {offsets = [0, 128], sizes = [8, 128], strides = [1, 1]} : vector<8x512xf32> to vector<8x128xf32>
    %61 = arith.negf %60 : vector<8x128xf32>
    %62 = math.exp %61 : vector<8x128xf32>
    %cst_25 = arith.constant 1.000000e+00 : f32
    %63 = vector.broadcast %cst_25 : f32 to vector<8x128xf32>
    %64 = arith.addf %63, %62 : vector<8x128xf32>
    %65 = arith.divf %63, %64 : vector<8x128xf32>
    %66 = vector.extract_strided_slice %53 {offsets = [0, 256], sizes = [8, 128], strides = [1, 1]} : vector<8x512xf32> to vector<8x128xf32>
    %67 = math.tanh %66 : vector<8x128xf32>
    %68 = vector.extract_strided_slice %53 {offsets = [0, 384], sizes = [8, 128], strides = [1, 1]} : vector<8x512xf32> to vector<8x128xf32>
    %69 = arith.negf %68 : vector<8x128xf32>
    %70 = math.exp %69 : vector<8x128xf32>
    %cst_26 = arith.constant 1.000000e+00 : f32
    %71 = vector.broadcast %cst_26 : f32 to vector<8x128xf32>
    %72 = arith.addf %71, %70 : vector<8x128xf32>
    %73 = arith.divf %71, %72 : vector<8x128xf32>
    %74 = arith.mulf %65, %42 : vector<8x128xf32>
    %75 = arith.mulf %59, %67 : vector<8x128xf32>
    %76 = arith.addf %74, %75 : vector<8x128xf32>
    %77 = math.tanh %76 : vector<8x128xf32>
    %78 = arith.mulf %73, %77 : vector<8x128xf32>
    %79 = arith.index_cast %48 : i32 to index
    %c0_27 = arith.constant 0 : index
    %80 = vector.load %arg15[%79, %c0_27] : memref<64x128xf32, #tpu.memory_space<vmem>>, vector<8x128xf32>
    tpu.vector_store %arg15[%79, %c0_27], %78 {strides = array<i32>} : memref<64x128xf32, #tpu.memory_space<vmem>>, vector<8x128xf32>,
    %c2_i32 = arith.constant 2 : i32
    %c8_i32_28 = arith.constant 8 : i32
    %81 = arith.muli %c2_i32, %c8_i32_28 : i32
    %82 = tpu.assume_multiple %81, 8 : i32
    %83 = arith.index_cast %82 : i32 to index
    %c0_29 = arith.constant 0 : index
    %84 = vector.load %arg14[%83, %c0_29] : memref<64x512xf32, #tpu.memory_space<vmem>>, vector<8x512xf32>
    %85 = arith.truncf %78 : vector<8x128xf32> to vector<8x128xbf16>
    %cst_30 = arith.constant dense<0.000000e+00> : vector<8x512xf32>
    %86 = tpu.matmul %85, %1, %cst_30 {dimension_numbers = #tpu.dot_dimension_numbers<[1], [0], [0], [1], [0, 0, 1, 1], [], []>} : vector<8x128xbf16>, vector<128x512xbf16>, vector<8x512xf32> -> vector<8x512xf32>
    %87 = arith.addf %84, %86 : vector<8x512xf32>
    %88 = vector.extract_strided_slice %87 {offsets = [0, 0], sizes = [8, 128], strides = [1, 1]} : vector<8x512xf32> to vector<8x128xf32>
    %89 = arith.negf %88 : vector<8x128xf32>
    %90 = math.exp %89 : vector<8x128xf32>
    %cst_31 = arith.constant 1.000000e+00 : f32
    %91 = vector.broadcast %cst_31 : f32 to vector<8x128xf32>
    %92 = arith.addf %91, %90 : vector<8x128xf32>
    %93 = arith.divf %91, %92 : vector<8x128xf32>
    %94 = vector.extract_strided_slice %87 {offsets = [0, 128], sizes = [8, 128], strides = [1, 1]} : vector<8x512xf32> to vector<8x128xf32>
    %95 = arith.negf %94 : vector<8x128xf32>
    %96 = math.exp %95 : vector<8x128xf32>
    %cst_32 = arith.constant 1.000000e+00 : f32
    %97 = vector.broadcast %cst_32 : f32 to vector<8x128xf32>
    %98 = arith.addf %97, %96 : vector<8x128xf32>
    %99 = arith.divf %97, %98 : vector<8x128xf32>
    %100 = vector.extract_strided_slice %87 {offsets = [0, 256], sizes = [8, 128], strides = [1, 1]} : vector<8x512xf32> to vector<8x128xf32>
    %101 = math.tanh %100 : vector<8x128xf32>
    %102 = vector.extract_strided_slice %87 {offsets = [0, 384], sizes = [8, 128], strides = [1, 1]} : vector<8x512xf32> to vector<8x128xf32>
    %103 = arith.negf %102 : vector<8x128xf32>
    %104 = math.exp %103 : vector<8x128xf32>
    %cst_33 = arith.constant 1.000000e+00 : f32
    %105 = vector.broadcast %cst_33 : f32 to vector<8x128xf32>
    %106 = arith.addf %105, %104 : vector<8x128xf32>
    %107 = arith.divf %105, %106 : vector<8x128xf32>
    %108 = arith.mulf %99, %76 : vector<8x128xf32>
    %109 = arith.mulf %93, %101 : vector<8x128xf32>
    %110 = arith.addf %108, %109 : vector<8x128xf32>
    %111 = math.tanh %110 : vector<8x128xf32>
    %112 = arith.mulf %107, %111 : vector<8x128xf32>
    %113 = arith.index_cast %82 : i32 to index
    %c0_34 = arith.constant 0 : index
    %114 = vector.load %arg15[%113, %c0_34] : memref<64x128xf32, #tpu.memory_space<vmem>>, vector<8x128xf32>
    tpu.vector_store %arg15[%113, %c0_34], %112 {strides = array<i32>} : memref<64x128xf32, #tpu.memory_space<vmem>>, vector<8x128xf32>,
    %c3_i32 = arith.constant 3 : i32
    %c8_i32_35 = arith.constant 8 : i32
    %115 = arith.muli %c3_i32, %c8_i32_35 : i32
    %116 = tpu.assume_multiple %115, 8 : i32
    %117 = arith.index_cast %116 : i32 to index
    %c0_36 = arith.constant 0 : index
    %118 = vector.load %arg14[%117, %c0_36] : memref<64x512xf32, #tpu.memory_space<vmem>>, vector<8x512xf32>
    %119 = arith.truncf %112 : vector<8x128xf32> to vector<8x128xbf16>
    %cst_37 = arith.constant dense<0.000000e+00> : vector<8x512xf32>
    %120 = tpu.matmul %119, %1, %cst_37 {dimension_numbers = #tpu.dot_dimension_numbers<[1], [0], [0], [1], [0, 0, 1, 1], [], []>} : vector<8x128xbf16>, vector<128x512xbf16>, vector<8x512xf32> -> vector<8x512xf32>
    %121 = arith.addf %118, %120 : vector<8x512xf32>
    %122 = vector.extract_strided_slice %121 {offsets = [0, 0], sizes = [8, 128], strides = [1, 1]} : vector<8x512xf32> to vector<8x128xf32>
    %123 = arith.negf %122 : vector<8x128xf32>
    %124 = math.exp %123 : vector<8x128xf32>
    %cst_38 = arith.constant 1.000000e+00 : f32
    %125 = vector.broadcast %cst_38 : f32 to vector<8x128xf32>
    %126 = arith.addf %125, %124 : vector<8x128xf32>
    %127 = arith.divf %125, %126 : vector<8x128xf32>
    %128 = vector.extract_strided_slice %121 {offsets = [0, 128], sizes = [8, 128], strides = [1, 1]} : vector<8x512xf32> to vector<8x128xf32>
    %129 = arith.negf %128 : vector<8x128xf32>
    %130 = math.exp %129 : vector<8x128xf32>
    %cst_39 = arith.constant 1.000000e+00 : f32
    %131 = vector.broadcast %cst_39 : f32 to vector<8x128xf32>
    %132 = arith.addf %131, %130 : vector<8x128xf32>
    %133 = arith.divf %131, %132 : vector<8x128xf32>
    %134 = vector.extract_strided_slice %121 {offsets = [0, 256], sizes = [8, 128], strides = [1, 1]} : vector<8x512xf32> to vector<8x128xf32>
    %135 = math.tanh %134 : vector<8x128xf32>
    %136 = vector.extract_strided_slice %121 {offsets = [0, 384], sizes = [8, 128], strides = [1, 1]} : vector<8x512xf32> to vector<8x128xf32>
    %137 = arith.negf %136 : vector<8x128xf32>
    %138 = math.exp %137 : vector<8x128xf32>
    %cst_40 = arith.constant 1.000000e+00 : f32
    %139 = vector.broadcast %cst_40 : f32 to vector<8x128xf32>
    %140 = arith.addf %139, %138 : vector<8x128xf32>
    %141 = arith.divf %139, %140 : vector<8x128xf32>
    %142 = arith.mulf %133, %110 : vector<8x128xf32>
    %143 = arith.mulf %127, %135 : vector<8x128xf32>
    %144 = arith.addf %142, %143 : vector<8x128xf32>
    %145 = math.tanh %144 : vector<8x128xf32>
    %146 = arith.mulf %141, %145 : vector<8x128xf32>
    %147 = arith.index_cast %116 : i32 to index
    %c0_41 = arith.constant 0 : index
    %148 = vector.load %arg15[%147, %c0_41] : memref<64x128xf32, #tpu.memory_space<vmem>>, vector<8x128xf32>
    tpu.vector_store %arg15[%147, %c0_41], %146 {strides = array<i32>} : memref<64x128xf32, #tpu.memory_space<vmem>>, vector<8x128xf32>,
    %c4_i32 = arith.constant 4 : i32
    %c8_i32_42 = arith.constant 8 : i32
    %149 = arith.muli %c4_i32, %c8_i32_42 : i32
    %150 = tpu.assume_multiple %149, 8 : i32
    %151 = arith.index_cast %150 : i32 to index
    %c0_43 = arith.constant 0 : index
    %152 = vector.load %arg14[%151, %c0_43] : memref<64x512xf32, #tpu.memory_space<vmem>>, vector<8x512xf32>
    %153 = arith.truncf %146 : vector<8x128xf32> to vector<8x128xbf16>
    %cst_44 = arith.constant dense<0.000000e+00> : vector<8x512xf32>
    %154 = tpu.matmul %153, %1, %cst_44 {dimension_numbers = #tpu.dot_dimension_numbers<[1], [0], [0], [1], [0, 0, 1, 1], [], []>} : vector<8x128xbf16>, vector<128x512xbf16>, vector<8x512xf32> -> vector<8x512xf32>
    %155 = arith.addf %152, %154 : vector<8x512xf32>
    %156 = vector.extract_strided_slice %155 {offsets = [0, 0], sizes = [8, 128], strides = [1, 1]} : vector<8x512xf32> to vector<8x128xf32>
    %157 = arith.negf %156 : vector<8x128xf32>
    %158 = math.exp %157 : vector<8x128xf32>
    %cst_45 = arith.constant 1.000000e+00 : f32
    %159 = vector.broadcast %cst_45 : f32 to vector<8x128xf32>
    %160 = arith.addf %159, %158 : vector<8x128xf32>
    %161 = arith.divf %159, %160 : vector<8x128xf32>
    %162 = vector.extract_strided_slice %155 {offsets = [0, 128], sizes = [8, 128], strides = [1, 1]} : vector<8x512xf32> to vector<8x128xf32>
    %163 = arith.negf %162 : vector<8x128xf32>
    %164 = math.exp %163 : vector<8x128xf32>
    %cst_46 = arith.constant 1.000000e+00 : f32
    %165 = vector.broadcast %cst_46 : f32 to vector<8x128xf32>
    %166 = arith.addf %165, %164 : vector<8x128xf32>
    %167 = arith.divf %165, %166 : vector<8x128xf32>
    %168 = vector.extract_strided_slice %155 {offsets = [0, 256], sizes = [8, 128], strides = [1, 1]} : vector<8x512xf32> to vector<8x128xf32>
    %169 = math.tanh %168 : vector<8x128xf32>
    %170 = vector.extract_strided_slice %155 {offsets = [0, 384], sizes = [8, 128], strides = [1, 1]} : vector<8x512xf32> to vector<8x128xf32>
    %171 = arith.negf %170 : vector<8x128xf32>
    %172 = math.exp %171 : vector<8x128xf32>
    %cst_47 = arith.constant 1.000000e+00 : f32
    %173 = vector.broadcast %cst_47 : f32 to vector<8x128xf32>
    %174 = arith.addf %173, %172 : vector<8x128xf32>
    %175 = arith.divf %173, %174 : vector<8x128xf32>
    %176 = arith.mulf %167, %144 : vector<8x128xf32>
    %177 = arith.mulf %161, %169 : vector<8x128xf32>
    %178 = arith.addf %176, %177 : vector<8x128xf32>
    %179 = math.tanh %178 : vector<8x128xf32>
    %180 = arith.mulf %175, %179 : vector<8x128xf32>
    %181 = arith.index_cast %150 : i32 to index
    %c0_48 = arith.constant 0 : index
    %182 = vector.load %arg15[%181, %c0_48] : memref<64x128xf32, #tpu.memory_space<vmem>>, vector<8x128xf32>
    tpu.vector_store %arg15[%181, %c0_48], %180 {strides = array<i32>} : memref<64x128xf32, #tpu.memory_space<vmem>>, vector<8x128xf32>,
    %c5_i32 = arith.constant 5 : i32
    %c8_i32_49 = arith.constant 8 : i32
    %183 = arith.muli %c5_i32, %c8_i32_49 : i32
    %184 = tpu.assume_multiple %183, 8 : i32
    %185 = arith.index_cast %184 : i32 to index
    %c0_50 = arith.constant 0 : index
    %186 = vector.load %arg14[%185, %c0_50] : memref<64x512xf32, #tpu.memory_space<vmem>>, vector<8x512xf32>
    %187 = arith.truncf %180 : vector<8x128xf32> to vector<8x128xbf16>
    %cst_51 = arith.constant dense<0.000000e+00> : vector<8x512xf32>
    %188 = tpu.matmul %187, %1, %cst_51 {dimension_numbers = #tpu.dot_dimension_numbers<[1], [0], [0], [1], [0, 0, 1, 1], [], []>} : vector<8x128xbf16>, vector<128x512xbf16>, vector<8x512xf32> -> vector<8x512xf32>
    %189 = arith.addf %186, %188 : vector<8x512xf32>
    %190 = vector.extract_strided_slice %189 {offsets = [0, 0], sizes = [8, 128], strides = [1, 1]} : vector<8x512xf32> to vector<8x128xf32>
    %191 = arith.negf %190 : vector<8x128xf32>
    %192 = math.exp %191 : vector<8x128xf32>
    %cst_52 = arith.constant 1.000000e+00 : f32
    %193 = vector.broadcast %cst_52 : f32 to vector<8x128xf32>
    %194 = arith.addf %193, %192 : vector<8x128xf32>
    %195 = arith.divf %193, %194 : vector<8x128xf32>
    %196 = vector.extract_strided_slice %189 {offsets = [0, 128], sizes = [8, 128], strides = [1, 1]} : vector<8x512xf32> to vector<8x128xf32>
    %197 = arith.negf %196 : vector<8x128xf32>
    %198 = math.exp %197 : vector<8x128xf32>
    %cst_53 = arith.constant 1.000000e+00 : f32
    %199 = vector.broadcast %cst_53 : f32 to vector<8x128xf32>
    %200 = arith.addf %199, %198 : vector<8x128xf32>
    %201 = arith.divf %199, %200 : vector<8x128xf32>
    %202 = vector.extract_strided_slice %189 {offsets = [0, 256], sizes = [8, 128], strides = [1, 1]} : vector<8x512xf32> to vector<8x128xf32>
    %203 = math.tanh %202 : vector<8x128xf32>
    %204 = vector.extract_strided_slice %189 {offsets = [0, 384], sizes = [8, 128], strides = [1, 1]} : vector<8x512xf32> to vector<8x128xf32>
    %205 = arith.negf %204 : vector<8x128xf32>
    %206 = math.exp %205 : vector<8x128xf32>
    %cst_54 = arith.constant 1.000000e+00 : f32
    %207 = vector.broadcast %cst_54 : f32 to vector<8x128xf32>
    %208 = arith.addf %207, %206 : vector<8x128xf32>
    %209 = arith.divf %207, %208 : vector<8x128xf32>
    %210 = arith.mulf %201, %178 : vector<8x128xf32>
    %211 = arith.mulf %195, %203 : vector<8x128xf32>
    %212 = arith.addf %210, %211 : vector<8x128xf32>
    %213 = math.tanh %212 : vector<8x128xf32>
    %214 = arith.mulf %209, %213 : vector<8x128xf32>
    %215 = arith.index_cast %184 : i32 to index
    %c0_55 = arith.constant 0 : index
    %216 = vector.load %arg15[%215, %c0_55] : memref<64x128xf32, #tpu.memory_space<vmem>>, vector<8x128xf32>
    tpu.vector_store %arg15[%215, %c0_55], %214 {strides = array<i32>} : memref<64x128xf32, #tpu.memory_space<vmem>>, vector<8x128xf32>,
    %c6_i32 = arith.constant 6 : i32
    %c8_i32_56 = arith.constant 8 : i32
    %217 = arith.muli %c6_i32, %c8_i32_56 : i32
    %218 = tpu.assume_multiple %217, 8 : i32
    %219 = arith.index_cast %218 : i32 to index
    %c0_57 = arith.constant 0 : index
    %220 = vector.load %arg14[%219, %c0_57] : memref<64x512xf32, #tpu.memory_space<vmem>>, vector<8x512xf32>
    %221 = arith.truncf %214 : vector<8x128xf32> to vector<8x128xbf16>
    %cst_58 = arith.constant dense<0.000000e+00> : vector<8x512xf32>
    %222 = tpu.matmul %221, %1, %cst_58 {dimension_numbers = #tpu.dot_dimension_numbers<[1], [0], [0], [1], [0, 0, 1, 1], [], []>} : vector<8x128xbf16>, vector<128x512xbf16>, vector<8x512xf32> -> vector<8x512xf32>
    %223 = arith.addf %220, %222 : vector<8x512xf32>
    %224 = vector.extract_strided_slice %223 {offsets = [0, 0], sizes = [8, 128], strides = [1, 1]} : vector<8x512xf32> to vector<8x128xf32>
    %225 = arith.negf %224 : vector<8x128xf32>
    %226 = math.exp %225 : vector<8x128xf32>
    %cst_59 = arith.constant 1.000000e+00 : f32
    %227 = vector.broadcast %cst_59 : f32 to vector<8x128xf32>
    %228 = arith.addf %227, %226 : vector<8x128xf32>
    %229 = arith.divf %227, %228 : vector<8x128xf32>
    %230 = vector.extract_strided_slice %223 {offsets = [0, 128], sizes = [8, 128], strides = [1, 1]} : vector<8x512xf32> to vector<8x128xf32>
    %231 = arith.negf %230 : vector<8x128xf32>
    %232 = math.exp %231 : vector<8x128xf32>
    %cst_60 = arith.constant 1.000000e+00 : f32
    %233 = vector.broadcast %cst_60 : f32 to vector<8x128xf32>
    %234 = arith.addf %233, %232 : vector<8x128xf32>
    %235 = arith.divf %233, %234 : vector<8x128xf32>
    %236 = vector.extract_strided_slice %223 {offsets = [0, 256], sizes = [8, 128], strides = [1, 1]} : vector<8x512xf32> to vector<8x128xf32>
    %237 = math.tanh %236 : vector<8x128xf32>
    %238 = vector.extract_strided_slice %223 {offsets = [0, 384], sizes = [8, 128], strides = [1, 1]} : vector<8x512xf32> to vector<8x128xf32>
    %239 = arith.negf %238 : vector<8x128xf32>
    %240 = math.exp %239 : vector<8x128xf32>
    %cst_61 = arith.constant 1.000000e+00 : f32
    %241 = vector.broadcast %cst_61 : f32 to vector<8x128xf32>
    %242 = arith.addf %241, %240 : vector<8x128xf32>
    %243 = arith.divf %241, %242 : vector<8x128xf32>
    %244 = arith.mulf %235, %212 : vector<8x128xf32>
    %245 = arith.mulf %229, %237 : vector<8x128xf32>
    %246 = arith.addf %244, %245 : vector<8x128xf32>
    %247 = math.tanh %246 : vector<8x128xf32>
    %248 = arith.mulf %243, %247 : vector<8x128xf32>
    %249 = arith.index_cast %218 : i32 to index
    %c0_62 = arith.constant 0 : index
    %250 = vector.load %arg15[%249, %c0_62] : memref<64x128xf32, #tpu.memory_space<vmem>>, vector<8x128xf32>
    tpu.vector_store %arg15[%249, %c0_62], %248 {strides = array<i32>} : memref<64x128xf32, #tpu.memory_space<vmem>>, vector<8x128xf32>,
    %c7_i32 = arith.constant 7 : i32
    %c8_i32_63 = arith.constant 8 : i32
    %251 = arith.muli %c7_i32, %c8_i32_63 : i32
    %252 = tpu.assume_multiple %251, 8 : i32
    %253 = arith.index_cast %252 : i32 to index
    %c0_64 = arith.constant 0 : index
    %254 = vector.load %arg14[%253, %c0_64] : memref<64x512xf32, #tpu.memory_space<vmem>>, vector<8x512xf32>
    %255 = arith.truncf %248 : vector<8x128xf32> to vector<8x128xbf16>
    %cst_65 = arith.constant dense<0.000000e+00> : vector<8x512xf32>
    %256 = tpu.matmul %255, %1, %cst_65 {dimension_numbers = #tpu.dot_dimension_numbers<[1], [0], [0], [1], [0, 0, 1, 1], [], []>} : vector<8x128xbf16>, vector<128x512xbf16>, vector<8x512xf32> -> vector<8x512xf32>
    %257 = arith.addf %254, %256 : vector<8x512xf32>
    %258 = vector.extract_strided_slice %257 {offsets = [0, 0], sizes = [8, 128], strides = [1, 1]} : vector<8x512xf32> to vector<8x128xf32>
    %259 = arith.negf %258 : vector<8x128xf32>
    %260 = math.exp %259 : vector<8x128xf32>
    %cst_66 = arith.constant 1.000000e+00 : f32
    %261 = vector.broadcast %cst_66 : f32 to vector<8x128xf32>
    %262 = arith.addf %261, %260 : vector<8x128xf32>
    %263 = arith.divf %261, %262 : vector<8x128xf32>
    %264 = vector.extract_strided_slice %257 {offsets = [0, 128], sizes = [8, 128], strides = [1, 1]} : vector<8x512xf32> to vector<8x128xf32>
    %265 = arith.negf %264 : vector<8x128xf32>
    %266 = math.exp %265 : vector<8x128xf32>
    %cst_67 = arith.constant 1.000000e+00 : f32
    %267 = vector.broadcast %cst_67 : f32 to vector<8x128xf32>
    %268 = arith.addf %267, %266 : vector<8x128xf32>
    %269 = arith.divf %267, %268 : vector<8x128xf32>
    %270 = vector.extract_strided_slice %257 {offsets = [0, 256], sizes = [8, 128], strides = [1, 1]} : vector<8x512xf32> to vector<8x128xf32>
    %271 = math.tanh %270 : vector<8x128xf32>
    %272 = vector.extract_strided_slice %257 {offsets = [0, 384], sizes = [8, 128], strides = [1, 1]} : vector<8x512xf32> to vector<8x128xf32>
    %273 = arith.negf %272 : vector<8x128xf32>
    %274 = math.exp %273 : vector<8x128xf32>
    %cst_68 = arith.constant 1.000000e+00 : f32
    %275 = vector.broadcast %cst_68 : f32 to vector<8x128xf32>
    %276 = arith.addf %275, %274 : vector<8x128xf32>
    %277 = arith.divf %275, %276 : vector<8x128xf32>
    %278 = arith.mulf %269, %246 : vector<8x128xf32>
    %279 = arith.mulf %263, %271 : vector<8x128xf32>
    %280 = arith.addf %278, %279 : vector<8x128xf32>
    %281 = math.tanh %280 : vector<8x128xf32>
    %282 = arith.mulf %277, %281 : vector<8x128xf32>
    %283 = arith.index_cast %252 : i32 to index
    %c0_69 = arith.constant 0 : index
    %284 = vector.load %arg15[%283, %c0_69] : memref<64x128xf32, #tpu.memory_space<vmem>>, vector<8x128xf32>
    tpu.vector_store %arg15[%283, %c0_69], %282 {strides = array<i32>} : memref<64x128xf32, #tpu.memory_space<vmem>>, vector<8x128xf32>,
    %c8_i32_70 = arith.constant 8 : i32
    %c0_71 = arith.constant 0 : index
    %c0_72 = arith.constant 0 : index
    %285 = vector.load %arg12[%c0_71, %c0_72] : memref<8x128xf32, #tpu.memory_space<vmem>>, vector<8x128xf32>
    tpu.vector_store %arg12[%c0_71, %c0_72], %282 {strides = array<i32>} : memref<8x128xf32, #tpu.memory_space<vmem>>, vector<8x128xf32>,
    %c0_73 = arith.constant 0 : index
    %c0_74 = arith.constant 0 : index
    %286 = vector.load %arg13[%c0_73, %c0_74] : memref<8x128xf32, #tpu.memory_space<vmem>>, vector<8x128xf32>
    tpu.vector_store %arg13[%c0_73, %c0_74], %280 {strides = array<i32>} : memref<8x128xf32, #tpu.memory_space<vmem>>, vector<8x128xf32>,
    %c0_75 = arith.constant 0 : index
    %c0_76 = arith.constant 0 : index
    %287 = vector.load %arg15[%c0_75, %c0_76] : memref<64x128xf32, #tpu.memory_space<vmem>>, vector<64x128xf32>
    %288 = arith.truncf %287 : vector<64x128xf32> to vector<64x128xbf16>
    %c0_77 = arith.constant 0 : index
    %c0_78 = arith.constant 0 : index
    %289 = vector.load %arg11[%c0_77, %c0_78] : memref<64x128xbf16, #tpu.memory_space<vmem>>, vector<64x128xbf16>
    tpu.vector_store %arg11[%c0_77, %c0_78], %288 {strides = array<i32>} : memref<64x128xbf16, #tpu.memory_space<vmem>>, vector<64x128xbf16>,
    return
  }
  func.func @transform_0(%arg0: i32) -> (i32, i32) {
    %c0_i32 = arith.constant 0 : i32
    %c0_i32_0 = arith.constant 0 : i32
    %c0_i32_1 = arith.constant 0 : i32
    return %c0_i32, %c0_i32_0 : i32, i32
  }
  func.func @transform_1(%arg0: i32) -> (i32, i32) {
    %c0_i32 = arith.constant 0 : i32
    %c0_i32_0 = arith.constant 0 : i32
    %c0_i32_1 = arith.constant 0 : i32
    return %c0_i32, %c0_i32_0 : i32, i32
  }
  func.func @transform_2(%arg0: i32) -> (i32, i32) {
    %c0_i32 = arith.constant 0 : i32
    %c0_i32_0 = arith.constant 0 : i32
    return %arg0, %c0_i32 : i32, i32
  }
  func.func @transform_3(%arg0: i32) -> (i32, i32) {
    %c0_i32 = arith.constant 0 : i32
    %c0_i32_0 = arith.constant 0 : i32
    %c0_i32_1 = arith.constant 0 : i32
    return %c0_i32, %c0_i32_0 : i32, i32
  }
  func.func @transform_4(%arg0: i32) -> (i32, i32) {
    %c0_i32 = arith.constant 0 : i32
    %c0_i32_0 = arith.constant 0 : i32
    %c0_i32_1 = arith.constant 0 : i32
    return %c0_i32, %c0_i32_0 : i32, i32
  }
  func.func @transform_5(%arg0: i32) -> (i32, i32) {
    %c0_i32 = arith.constant 0 : i32
    %c0_i32_0 = arith.constant 0 : i32
    %c0_i32_1 = arith.constant 0 : i32
    return %c0_i32, %c0_i32_0 : i32, i32
  }
  func.func @transform_6(%arg0: i32) -> (i32, i32) {
    %c0_i32 = arith.constant 0 : i32
    %c0_i32_0 = arith.constant 0 : i32
    %c0_i32_1 = arith.constant 0 : i32
    return %c0_i32, %c0_i32_0 : i32, i32
  }
  func.func @transform_7(%arg0: i32) -> (i32, i32) {
    %c0_i32 = arith.constant 0 : i32
    %c0_i32_0 = arith.constant 0 : i32
    %c0_i32_1 = arith.constant 0 : i32
    return %c0_i32, %c0_i32_0 : i32, i32
  }
  func.func @transform_8(%arg0: i32) -> (i32, i32) {
    %c0_i32 = arith.constant 0 : i32
    %c0_i32_0 = arith.constant 0 : i32
    %c0_i32_1 = arith.constant 0 : i32
    return %c0_i32, %c0_i32_0 : i32, i32
  }
  func.func @transform_9(%arg0: i32) -> (i32, i32) {
    %c0_i32 = arith.constant 0 : i32
    %c0_i32_0 = arith.constant 0 : i32
    %c0_i32_1 = arith.constant 0 : i32
    return %c0_i32, %c0_i32_0 : i32, i32
  }
  func.func @transform_10(%arg0: i32) -> (i32, i32) {
    %c0_i32 = arith.constant 0 : i32
    %c0_i32_0 = arith.constant 0 : i32
    return %arg0, %c0_i32 : i32, i32
  }
}

</mosaic_0001>

<llo_original>
// kernel: tpu_custom_call.1
$region0: #{tpu_custom_call.1}
  #allocation0 [shape = 'u32[]', space=smem, size = 0x4, offset = 0x4, fixed_abs, tag = 'smem constant byte address 0x4 - core index']
  #allocation1 [shape = 'u32[144,128]{1,0:T(1,128)}', space=vmem, size = 0x12000, scoped, tag = 'internal scratch']
  #allocation2 [shape = 'f32[8,128]{1,0:T(8,128)}', space=vmem, size = 0x1000, scoped, tag = 'scratch operand']
  #allocation3 [shape = 'f32[8,128]{1,0:T(8,128)}', space=vmem, size = 0x1000, scoped, tag = 'scratch operand']
  #allocation4 [shape = 'f32[64,512]{1,0:T(8,128)}', space=vmem, size = 0x20000, scoped, tag = 'scratch operand']
  #allocation5 [shape = 'f32[64,128]{1,0:T(8,128)}', space=vmem, size = 0x8000, scoped, tag = 'scratch operand']
  %s0 = inlined_call_operand.hbm [shape: bf16[8,128], index: 0, kind: input, shape index: {}]
  %s1 = inlined_call_operand.hbm [shape: bf16[8,128], index: 1, kind: input, shape index: {}]
  %s2 = inlined_call_operand.hbm [shape: bf16[64,128], index: 2, kind: input, shape index: {}]
  %s3 = inlined_call_operand.hbm [shape: bf16[128,512], index: 3, kind: input, shape index: {}]
  %s4 = inlined_call_operand.hbm [shape: bf16[128,512], index: 4, kind: input, shape index: {}]
  %s5 = inlined_call_operand.vmem [shape: f32[1,512], index: 5, kind: input, shape index: {}]
  %s6 = inlined_call_operand.hbm [shape: bf16[128,128], index: 6, kind: input, shape index: {}]
  %s7 = inlined_call_operand.vmem [shape: f32[1,128], index: 7, kind: input, shape index: {}]
  %s8 = inlined_call_operand.hbm [shape: bf16[128,128], index: 8, kind: input, shape index: {}]
  %s9 = inlined_call_operand.vmem [shape: f32[1,128], index: 9, kind: input, shape index: {}]
  %s10 = inlined_call_operand.hbm [shape: bf16[64,128], index: 10, kind: output, shape index: {}]
  %s11 = sld [smem:[#allocation0]]
  $region82: #{tpu_custom_call.1} parent=0
    _
  %s13 = ssub.s32 1, %s11
  %s14 = scalar_select 0, %s13, %s11
  $region1: #{tpu_custom_call.1} parent=0
    #allocation6 [shape = 'u8[2048]{0}', space=vmem, size = 0x800, scoped, tag = 'input window, operand 0, single buffered']
    #allocation7 [shape = 's32[1]{0}', space=sflag, size = 0x4, scoped, tag = 'scoped memory for tpu_custom_call.1']
    #allocation8 [shape = 's32[1]{0}', space=sflag, size = 0x4, scoped, tag = 'scoped memory for tpu_custom_call.1']
    #allocation9 [shape = 'u8[2048]{0}', space=vmem, size = 0x800, scoped, tag = 'input window, operand 1, single buffered']
    #allocation10 [shape = 's32[1]{0}', space=sflag, size = 0x4, scoped, tag = 'scoped memory for tpu_custom_call.1']
    #allocation11 [shape = 'u8[16384]{0}', space=vmem, size = 0x4000, scoped, tag = 'input window, operand 2, single buffered']
    #allocation12 [shape = 'u8[131072]{0}', space=vmem, size = 0x20000, scoped, tag = 'input window, operand 3, single buffered']
    #allocation13 [shape = 's32[1]{0}', space=sflag, size = 0x4, scoped, tag = 'scoped memory for tpu_custom_call.1']
    #allocation14 [shape = 'u8[131072]{0}', space=vmem, size = 0x20000, scoped, tag = 'input window, operand 4, single buffered']
    #allocation15 [shape = 'u8[32768]{0}', space=vmem, size = 0x8000, scoped, tag = 'input window, operand 6, single buffered']
    #allocation16 [shape = 's32[1]{0}', space=sflag, size = 0x4, scoped, tag = 'scoped memory for tpu_custom_call.1']
    #allocation17 [shape = 'u8[32768]{0}', space=vmem, size = 0x8000, scoped, tag = 'input window, operand 8, single buffered']
    #allocation18 [shape = 'u8[16384]{0}', space=vmem, size = 0x4000, scoped, tag = 'output window, operand 0, single buffered']
    %15 = vsyncpa [#allocation7], 0
    %16 = vsyncpa [#allocation10], 0
    %17 = vsyncpa [#allocation13], 0
    %18 = vsyncpa [#allocation16], 0
    %19 = vsyncpa [#allocation8], 0
    // Predicated region
    $region2: #{tpu_custom_call.1} parent=1 // pred_check
      _
    $region3: #{tpu_custom_call.1} parent=1 // pred_check_branch
      %21 = sbr.rel (0) target = $region5
    $region4: #{tpu_custom_call.1} parent=1 // pred_region
      %s23 = ssub.s32 64, 64
      %24 = vsyncadd [#allocation7], %s23
      %s26 = sshll.u32 [#allocation6], 4
      %s27 = int_to_ptr.vmem [resolvable:$true] %s26
      %29 = dma.hbm_to_vmem [thread:$0]  %s0, 64, %s27, [#allocation7]
    $region5: #{tpu_custom_call.1} parent=1 // pred_fallthru
      _
    // Predicated region
    $region6: #{tpu_custom_call.1} parent=1 // pred_check
      _
    $region7: #{tpu_custom_call.1} parent=1 // pred_check_branch
      %31 = sbr.rel (0) target = $region9
    $region8: #{tpu_custom_call.1} parent=1 // pred_region
      %s33 = ssub.s32 64, 64
      %34 = vsyncadd [#allocation10], %s33
      %s36 = sshll.u32 [#allocation9], 4
      %s37 = int_to_ptr.vmem [resolvable:$true] %s36
      %39 = dma.hbm_to_vmem [thread:$0]  %s1, 64, %s37, [#allocation10]
    $region9: #{tpu_custom_call.1} parent=1 // pred_fallthru
      _
    // Predicated region
    $region10: #{tpu_custom_call.1} parent=1 // pred_check
      _
    $region11: #{tpu_custom_call.1} parent=1 // pred_check_branch
      %41 = sbr.rel (0) target = $region13
    $region12: #{tpu_custom_call.1} parent=1 // pred_region
      %s43 = ssub.s32 512, 512
      %44 = vsyncadd [#allocation10], %s43
      %s45 = sshll.u32 [#allocation11], 4
      %s46 = int_to_ptr.vmem [resolvable:$true] %s45
      %51 = dma.hbm_to_vmem [thread:$0]  %s2, 512, %s46, [#allocation10], 64, 64, 4
    $region13: #{tpu_custom_call.1} parent=1 // pred_fallthru
      _
    // Predicated region
    $region14: #{tpu_custom_call.1} parent=1 // pred_check
      _
    $region15: #{tpu_custom_call.1} parent=1 // pred_check_branch
      %53 = sbr.rel (0) target = $region17
    $region16: #{tpu_custom_call.1} parent=1 // pred_region
      %s55 = ssub.s32 4096, 4096
      %56 = vsyncadd [#allocation13], %s55
      %s57 = sshll.u32 [#allocation12], 4
      %s58 = int_to_ptr.vmem [resolvable:$true] %s57
      %63 = dma.hbm_to_vmem [thread:$0]  %s3, 4096, %s58, [#allocation13], 256, 256, 16
    $region17: #{tpu_custom_call.1} parent=1 // pred_fallthru
      _
    // Predicated region
    $region18: #{tpu_custom_call.1} parent=1 // pred_check
      _
    $region19: #{tpu_custom_call.1} parent=1 // pred_check_branch
      %65 = sbr.rel (0) target = $region21
    $region20: #{tpu_custom_call.1} parent=1 // pred_region
      %s67 = ssub.s32 4096, 4096
      %68 = vsyncadd [#allocation13], %s67
      %s69 = sshll.u32 [#allocation14], 4
      %s70 = int_to_ptr.vmem [resolvable:$true] %s69
      %75 = dma.hbm_to_vmem [thread:$0]  %s4, 4096, %s70, [#allocation13], 256, 256, 16
    $region21: #{tpu_custom_call.1} parent=1 // pred_fallthru
      _
    // Predicated region
    $region22: #{tpu_custom_call.1} parent=1 // pred_check
      _
    $region23: #{tpu_custom_call.1} parent=1 // pred_check_branch
      %77 = sbr.rel (0) target = $region25
    $region24: #{tpu_custom_call.1} parent=1 // pred_region
      _
    $region25: #{tpu_custom_call.1} parent=1 // pred_fallthru
      _
    // Predicated region
    $region26: #{tpu_custom_call.1} parent=1 // pred_check
      _
    $region27: #{tpu_custom_call.1} parent=1 // pred_check_branch
      %79 = sbr.rel (0) target = $region29
    $region28: #{tpu_custom_call.1} parent=1 // pred_region
      %s81 = ssub.s32 1024, 1024
      %82 = vsyncadd [#allocation16], %s81
      %s83 = sshll.u32 [#allocation15], 4
      %s84 = int_to_ptr.vmem [resolvable:$true] %s83
      %89 = dma.hbm_to_vmem [thread:$0]  %s6, 1024, %s84, [#allocation16], 64, 64, 4
    $region29: #{tpu_custom_call.1} parent=1 // pred_fallthru
      _
    // Predicated region
    $region30: #{tpu_custom_call.1} parent=1 // pred_check
      _
    $region31: #{tpu_custom_call.1} parent=1 // pred_check_branch
      %91 = sbr.rel (0) target = $region33
    $region32: #{tpu_custom_call.1} parent=1 // pred_region
      _
    $region33: #{tpu_custom_call.1} parent=1 // pred_fallthru
      _
    // Predicated region
    $region34: #{tpu_custom_call.1} parent=1 // pred_check
      _
    $region35: #{tpu_custom_call.1} parent=1 // pred_check_branch
      %93 = sbr.rel (0) target = $region37
    $region36: #{tpu_custom_call.1} parent=1 // pred_region
      %s95 = ssub.s32 1024, 1024
      %96 = vsyncadd [#allocation16], %s95
      %s97 = sshll.u32 [#allocation17], 4
      %s98 = int_to_ptr.vmem [resolvable:$true] %s97
      %103 = dma.hbm_to_vmem [thread:$0]  %s8, 1024, %s98, [#allocation16], 64, 64, 4
    $region37: #{tpu_custom_call.1} parent=1 // pred_fallthru
      _
    // Predicated region
    $region38: #{tpu_custom_call.1} parent=1 // pred_check
      _
    $region39: #{tpu_custom_call.1} parent=1 // pred_check_branch
      %105 = sbr.rel (0) target = $region41
    $region40: #{tpu_custom_call.1} parent=1 // pred_region
      _
    $region41: #{tpu_custom_call.1} parent=1 // pred_fallthru
      _
    // Predicated region
    $region42: #{tpu_custom_call.1} parent=1 // pred_check
      _
    $region43: #{tpu_custom_call.1} parent=1 // pred_check_branch
      %107 = sbr.rel (0) target = $region45
    $region44: #{tpu_custom_call.1} parent=1 // pred_region
      %108 = dma.done [#allocation7], 64
    $region45: #{tpu_custom_call.1} parent=1 // pred_fallthru
      _
    // Predicated region
    $region46: #{tpu_custom_call.1} parent=1 // pred_check
      _
    $region47: #{tpu_custom_call.1} parent=1 // pred_check_branch
      %110 = sbr.rel (0) target = $region49
    $region48: #{tpu_custom_call.1} parent=1 // pred_region
      %111 = dma.done [#allocation10], 64
    $region49: #{tpu_custom_call.1} parent=1 // pred_fallthru
      _
    // Predicated region
    $region50: #{tpu_custom_call.1} parent=1 // pred_check
      _
    $region51: #{tpu_custom_call.1} parent=1 // pred_check_branch
      %113 = sbr.rel (0) target = $region53
    $region52: #{tpu_custom_call.1} parent=1 // pred_region
      %114 = dma.done [#allocation10], 512
    $region53: #{tpu_custom_call.1} parent=1 // pred_fallthru
      _
    // Predicated region
    $region54: #{tpu_custom_call.1} parent=1 // pred_check
      _
    $region55: #{tpu_custom_call.1} parent=1 // pred_check_branch
      %116 = sbr.rel (0) target = $region57
    $region56: #{tpu_custom_call.1} parent=1 // pred_region
      %117 = dma.done [#allocation13], 4096
    $region57: #{tpu_custom_call.1} parent=1 // pred_fallthru
      _
    // Predicated region
    $region58: #{tpu_custom_call.1} parent=1 // pred_check
      _
    $region59: #{tpu_custom_call.1} parent=1 // pred_check_branch
      %119 = sbr.rel (0) target = $region61
    $region60: #{tpu_custom_call.1} parent=1 // pred_region
      %120 = dma.done [#allocation13], 4096
    $region61: #{tpu_custom_call.1} parent=1 // pred_fallthru
      _
    // Predicated region
    $region62: #{tpu_custom_call.1} parent=1 // pred_check
      _
    $region63: #{tpu_custom_call.1} parent=1 // pred_check_branch
      %122 = sbr.rel (0) target = $region65
    $region64: #{tpu_custom_call.1} parent=1 // pred_region
      %123 = dma.done [#allocation16], 1024
    $region65: #{tpu_custom_call.1} parent=1 // pred_fallthru
      _
    // Predicated region
    $region66: #{tpu_custom_call.1} parent=1 // pred_check
      _
    $region67: #{tpu_custom_call.1} parent=1 // pred_check_branch
      %125 = sbr.rel (0) target = $region69
    $region68: #{tpu_custom_call.1} parent=1 // pred_region
      %126 = dma.done [#allocation16], 1024
    $region69: #{tpu_custom_call.1} parent=1 // pred_fallthru
      _
    %v128 = vld [vmem:[#allocation12] sm:$0xff]
    %v129 = vld [vmem:[#allocation12 + $0x8] sm:$0xff]
    %v130 = vld [vmem:[#allocation12 + $0x10] sm:$0xff]
    %v131 = vld [vmem:[#allocation12 + $0x18] sm:$0xff]
    %v132 = vld [vmem:[#allocation12 + $0x20] sm:$0xff]
    %v133 = vld [vmem:[#allocation12 + $0x28] sm:$0xff]
    %v134 = vld [vmem:[#allocation12 + $0x30] sm:$0xff]
    %v135 = vld [vmem:[#allocation12 + $0x38] sm:$0xff]
    %v136 = vld [vmem:[#allocation12 + $0x40] sm:$0xff]
    %v137 = vld [vmem:[#allocation12 + $0x48] sm:$0xff]
    %v138 = vld [vmem:[#allocation12 + $0x50] sm:$0xff]
    %v139 = vld [vmem:[#allocation12 + $0x58] sm:$0xff]
    %v140 = vld [vmem:[#allocation12 + $0x60] sm:$0xff]
    %v141 = vld [vmem:[#allocation12 + $0x68] sm:$0xff]
    %v142 = vld [vmem:[#allocation12 + $0x70] sm:$0xff]
    %v143 = vld [vmem:[#allocation12 + $0x78] sm:$0xff]
    %v144 = vld [vmem:[#allocation12 + $0x80] sm:$0xff]
    %v145 = vld [vmem:[#allocation12 + $0x88] sm:$0xff]
    %v146 = vld [vmem:[#allocation12 + $0x90] sm:$0xff]
    %v147 = vld [vmem:[#allocation12 + $0x98] sm:$0xff]
    %v148 = vld [vmem:[#allocation12 + $0xa0] sm:$0xff]
    %v149 = vld [vmem:[#allocation12 + $0xa8] sm:$0xff]
    %v150 = vld [vmem:[#allocation12 + $0xb0] sm:$0xff]
    %v151 = vld [vmem:[#allocation12 + $0xb8] sm:$0xff]
    %v152 = vld [vmem:[#allocation12 + $0xc0] sm:$0xff]
    %v153 = vld [vmem:[#allocation12 + $0xc8] sm:$0xff]
    %v154 = vld [vmem:[#allocation12 + $0xd0] sm:$0xff]
    %v155 = vld [vmem:[#allocation12 + $0xd8] sm:$0xff]
    %v156 = vld [vmem:[#allocation12 + $0xe0] sm:$0xff]
    %v157 = vld [vmem:[#allocation12 + $0xe8] sm:$0xff]
    %v158 = vld [vmem:[#allocation12 + $0xf0] sm:$0xff]
    %v159 = vld [vmem:[#allocation12 + $0xf8] sm:$0xff]
    %v160 = vld [vmem:[#allocation14] sm:$0xff]
    %v161 = vld [vmem:[#allocation14 + $0x8] sm:$0xff]
    %v162 = vld [vmem:[#allocation14 + $0x10] sm:$0xff]
    %v163 = vld [vmem:[#allocation14 + $0x18] sm:$0xff]
    %v164 = vld [vmem:[#allocation14 + $0x20] sm:$0xff]
    %v165 = vld [vmem:[#allocation14 + $0x28] sm:$0xff]
    %v166 = vld [vmem:[#allocation14 + $0x30] sm:$0xff]
    %v167 = vld [vmem:[#allocation14 + $0x38] sm:$0xff]
    %v168 = vld [vmem:[#allocation14 + $0x40] sm:$0xff]
    %v169 = vld [vmem:[#allocation14 + $0x48] sm:$0xff]
    %v170 = vld [vmem:[#allocation14 + $0x50] sm:$0xff]
    %v171 = vld [vmem:[#allocation14 + $0x58] sm:$0xff]
    %v172 = vld [vmem:[#allocation14 + $0x60] sm:$0xff]
    %v173 = vld [vmem:[#allocation14 + $0x68] sm:$0xff]
    %v174 = vld [vmem:[#allocation14 + $0x70] sm:$0xff]
    %v175 = vld [vmem:[#allocation14 + $0x78] sm:$0xff]
    %v176 = vld [vmem:[#allocation14 + $0x80] sm:$0xff]
    %v177 = vld [vmem:[#allocation14 + $0x88] sm:$0xff]
    %v178 = vld [vmem:[#allocation14 + $0x90] sm:$0xff]
    %v179 = vld [vmem:[#allocation14 + $0x98] sm:$0xff]
    %v180 = vld [vmem:[#allocation14 + $0xa0] sm:$0xff]
    %v181 = vld [vmem:[#allocation14 + $0xa8] sm:$0xff]
    %v182 = vld [vmem:[#allocation14 + $0xb0] sm:$0xff]
    %v183 = vld [vmem:[#allocation14 + $0xb8] sm:$0xff]
    %v184 = vld [vmem:[#allocation14 + $0xc0] sm:$0xff]
    %v185 = vld [vmem:[#allocation14 + $0xc8] sm:$0xff]
    %v186 = vld [vmem:[#allocation14 + $0xd0] sm:$0xff]
    %v187 = vld [vmem:[#allocation14 + $0xd8] sm:$0xff]
    %v188 = vld [vmem:[#allocation14 + $0xe0] sm:$0xff]
    %v189 = vld [vmem:[#allocation14 + $0xe8] sm:$0xff]
    %v190 = vld [vmem:[#allocation14 + $0xf0] sm:$0xff]
    %v191 = vld [vmem:[#allocation14 + $0xf8] sm:$0xff]
    %v192 = vld [vmem:[%s5] sm:$0xf]
    %p193 = scmp.eq.s32.totalorder 0, 0
    // Predicated region
    $region70: #{tpu_custom_call.1} parent=1 // pred_check
      %p194 = pneg %p193
    $region71: #{tpu_custom_call.1} parent=1 // pred_check_branch
      %196 = sbr.rel (%p194) target = $region73
    $region72: #{tpu_custom_call.1} parent=1 // pred_region
      %v197 = vld [vmem:[#allocation9] sm:$0xf]
      %v198 = vld [vmem:[#allocation15] sm:$0xf]
      %v199 = vld [vmem:[#allocation15 + $0x4] sm:$0xf]
      %v200 = vld [vmem:[#allocation15 + $0x8] sm:$0xf]
      %v201 = vld [vmem:[#allocation15 + $0xc] sm:$0xf]
      %v202 = vld [vmem:[#allocation15 + $0x10] sm:$0xf]
      %v203 = vld [vmem:[#allocation15 + $0x14] sm:$0xf]
      %v204 = vld [vmem:[#allocation15 + $0x18] sm:$0xf]
      %v205 = vld [vmem:[#allocation15 + $0x1c] sm:$0xf]
      %v206 = vld [vmem:[#allocation15 + $0x20] sm:$0xf]
      %v207 = vld [vmem:[#allocation15 + $0x24] sm:$0xf]
      %v208 = vld [vmem:[#allocation15 + $0x28] sm:$0xf]
      %v209 = vld [vmem:[#allocation15 + $0x2c] sm:$0xf]
      %v210 = vld [vmem:[#allocation15 + $0x30] sm:$0xf]
      %v211 = vld [vmem:[#allocation15 + $0x34] sm:$0xf]
      %v212 = vld [vmem:[#allocation15 + $0x38] sm:$0xf]
      %v213 = vld [vmem:[#allocation15 + $0x3c] sm:$0xf]
      %v214 = vld [vmem:[%s7] sm:$0x1]
      %v216 = vlaneseq
      %v217 = vshrl.u32 %v216, 7
      %v218 = vsub.s32 0, %v217
      %v219 = vrot.slane %v214, %v218
      %v237 = vunpack.c.l.b16 %v198
      %v238 = vunpack.c.l.b16 %v199
      %v239 = vunpack.c.l.b16 %v200
      %v240 = vunpack.c.l.b16 %v201
      %v241 = vunpack.c.l.b16 %v202
      %v242 = vunpack.c.l.b16 %v203
      %v243 = vunpack.c.l.b16 %v204
      %v244 = vunpack.c.l.b16 %v205
      %v245 = vunpack.c.l.b16 %v206
      %v246 = vunpack.c.l.b16 %v207
      %v247 = vunpack.c.l.b16 %v208
      %v248 = vunpack.c.l.b16 %v209
      %v249 = vunpack.c.l.b16 %v210
      %v250 = vunpack.c.l.b16 %v211
      %v251 = vunpack.c.l.b16 %v212
      %v252 = vunpack.c.l.b16 %v213
      %v253 = vpack.c.b16 %v238, %v237
      %v254 = vpack.c.b16 %v240, %v239
      %v255 = vpack.c.b16 %v242, %v241
      %v256 = vpack.c.b16 %v244, %v243
      %v257 = vpack.c.b16 %v246, %v245
      %v258 = vpack.c.b16 %v248, %v247
      %v259 = vpack.c.b16 %v250, %v249
      %v260 = vpack.c.b16 %v252, %v251
      %269 = vmatprep.subr.bf16.mxu0 0
      %270 = vmatpush1.bf16.msra.mxu0 %v260
      %271 = vmatprep.subr.bf16.mxu0 0
      %272 = vmatpush1.bf16.msra.mxu0 %v259
      %273 = vmatprep.subr.bf16.mxu0 0
      %274 = vmatpush1.bf16.msra.mxu0 %v258
      %275 = vmatprep.subr.bf16.mxu0 0
      %276 = vmatpush1.bf16.msra.mxu0 %v257
      %277 = vmatprep.subr.bf16.mxu0 0
      %278 = vmatpush1.bf16.msra.mxu0 %v256
      %279 = vmatprep.subr.bf16.mxu0 0
      %280 = vmatpush1.bf16.msra.mxu0 %v255
      %281 = vmatprep.subr.bf16.mxu0 0
      %282 = vmatpush1.bf16.msra.mxu0 %v254
      %283 = vmatprep.subr.bf16.mxu0 0
      %284 = vmatpush1.bf16.msra.mxu0 %v253
      %285 = vmatprep.subr.bf16.mxu0 0
      %286 = vmatpush2.bf16.msra.mxu0 0
      %287 = vmatprep.subr.bf16.mxu0 0
      %288 = vmatpush2.bf16.msra.mxu0 0
      %289 = vmatprep.subr.bf16.mxu0 0
      %290 = vmatpush2.bf16.msra.mxu0 0
      %291 = vmatprep.subr.bf16.mxu0 0
      %292 = vmatpush2.bf16.msra.mxu0 0
      %293 = vmatprep.subr.bf16.mxu0 0
      %294 = vmatpush2.bf16.msra.mxu0 0
      %295 = vmatprep.subr.bf16.mxu0 0
      %296 = vmatpush2.bf16.msra.mxu0 0
      %297 = vmatprep.subr.bf16.mxu0 0
      %298 = vmatpush2.bf16.msra.mxu0 0
      %299 = vmatprep.subr.bf16.mxu0 0
      %300 = vmatpush2.bf16.msra.mxu0 0
      %301 = vmatprep.mubr.bf16.mxu0 0
      %302 = vmatmul.mubr.bf16.gmra.mxu0 %v197
      %v303 = vpop.f32.mrf.mxu0
      %v304 = vadd.f32 %v219, %v303
      %v305 = vpop.f32.mrf.mxu0
      %v306 = vpop.f32.mrf.mxu0
      %v307 = vpop.f32.mrf.mxu0
      %308 = vdwg.mxu0
      %v309 = vld [vmem:[#allocation17] sm:$0xf]
      %v310 = vld [vmem:[#allocation17 + $0x4] sm:$0xf]
      %v311 = vld [vmem:[#allocation17 + $0x8] sm:$0xf]
      %v312 = vld [vmem:[#allocation17 + $0xc] sm:$0xf]
      %v313 = vld [vmem:[#allocation17 + $0x10] sm:$0xf]
      %v314 = vld [vmem:[#allocation17 + $0x14] sm:$0xf]
      %v315 = vld [vmem:[#allocation17 + $0x18] sm:$0xf]
      %v316 = vld [vmem:[#allocation17 + $0x1c] sm:$0xf]
      %v317 = vld [vmem:[#allocation17 + $0x20] sm:$0xf]
      %v318 = vld [vmem:[#allocation17 + $0x24] sm:$0xf]
      %v319 = vld [vmem:[#allocation17 + $0x28] sm:$0xf]
      %v320 = vld [vmem:[#allocation17 + $0x2c] sm:$0xf]
      %v321 = vld [vmem:[#allocation17 + $0x30] sm:$0xf]
      %v322 = vld [vmem:[#allocation17 + $0x34] sm:$0xf]
      %v323 = vld [vmem:[#allocation17 + $0x38] sm:$0xf]
      %v324 = vld [vmem:[#allocation17 + $0x3c] sm:$0xf]
      %v325 = vld [vmem:[%s9] sm:$0x1]
      %v327 = vlaneseq
      %v328 = vshrl.u32 %v327, 7
      %v329 = vsub.s32 0, %v328
      %v330 = vrot.slane %v325, %v329
      %v348 = vunpack.c.l.b16 %v309
      %v349 = vunpack.c.l.b16 %v310
      %v350 = vunpack.c.l.b16 %v311
      %v351 = vunpack.c.l.b16 %v312
      %v352 = vunpack.c.l.b16 %v313
      %v353 = vunpack.c.l.b16 %v314
      %v354 = vunpack.c.l.b16 %v315
      %v355 = vunpack.c.l.b16 %v316
      %v356 = vunpack.c.l.b16 %v317
      %v357 = vunpack.c.l.b16 %v318
      %v358 = vunpack.c.l.b16 %v319
      %v359 = vunpack.c.l.b16 %v320
      %v360 = vunpack.c.l.b16 %v321
      %v361 = vunpack.c.l.b16 %v322
      %v362 = vunpack.c.l.b16 %v323
      %v363 = vunpack.c.l.b16 %v324
      %v364 = vpack.c.b16 %v349, %v348
      %v365 = vpack.c.b16 %v351, %v350
      %v366 = vpack.c.b16 %v353, %v352
      %v367 = vpack.c.b16 %v355, %v354
      %v368 = vpack.c.b16 %v357, %v356
      %v369 = vpack.c.b16 %v359, %v358
      %v370 = vpack.c.b16 %v361, %v360
      %v371 = vpack.c.b16 %v363, %v362
      %380 = vmatprep.subr.bf16.mxu0 0
      %381 = vmatpush1.bf16.msra.mxu0 %v371
      %382 = vmatprep.subr.bf16.mxu0 0
      %383 = vmatpush1.bf16.msra.mxu0 %v370
      %384 = vmatprep.subr.bf16.mxu0 0
      %385 = vmatpush1.bf16.msra.mxu0 %v369
      %386 = vmatprep.subr.bf16.mxu0 0
      %387 = vmatpush1.bf16.msra.mxu0 %v368
      %388 = vmatprep.subr.bf16.mxu0 0
      %389 = vmatpush1.bf16.msra.mxu0 %v367
      %390 = vmatprep.subr.bf16.mxu0 0
      %391 = vmatpush1.bf16.msra.mxu0 %v366
      %392 = vmatprep.subr.bf16.mxu0 0
      %393 = vmatpush1.bf16.msra.mxu0 %v365
      %394 = vmatprep.subr.bf16.mxu0 0
      %395 = vmatpush1.bf16.msra.mxu0 %v364
      %396 = vmatprep.subr.bf16.mxu0 0
      %397 = vmatpush2.bf16.msra.mxu0 0
      %398 = vmatprep.subr.bf16.mxu0 0
      %399 = vmatpush2.bf16.msra.mxu0 0
      %400 = vmatprep.subr.bf16.mxu0 0
      %401 = vmatpush2.bf16.msra.mxu0 0
      %402 = vmatprep.subr.bf16.mxu0 0
      %403 = vmatpush2.bf16.msra.mxu0 0
      %404 = vmatprep.subr.bf16.mxu0 0
      %405 = vmatpush2.bf16.msra.mxu0 0
      %406 = vmatprep.subr.bf16.mxu0 0
      %407 = vmatpush2.bf16.msra.mxu0 0
      %408 = vmatprep.subr.bf16.mxu0 0
      %409 = vmatpush2.bf16.msra.mxu0 0
      %410 = vmatprep.subr.bf16.mxu0 0
      %411 = vmatpush2.bf16.msra.mxu0 0
      %412 = vmatprep.mubr.bf16.mxu0 0
      %413 = vmatmul.mubr.bf16.gmra.mxu0 %v197
      %v414 = vpop.f32.mrf.mxu0
      %v415 = vadd.f32 %v330, %v414
      %v416 = vpop.f32.mrf.mxu0
      %v417 = vpop.f32.mrf.mxu0
      %v418 = vpop.f32.mrf.mxu0
      %419 = vdwg.mxu0
      %v420 = vld [vmem:[#allocation6] sm:$0xf]
      %v421 = vpack.c.bf16 %v304, %v304
      %v454 = vunpack.c.l.b16 %v160
      %v455 = vunpack.c.h.b16 %v160
      %v456 = vunpack.c.l.b16 %v161
      %v457 = vunpack.c.h.b16 %v161
      %v458 = vunpack.c.l.b16 %v162
      %v459 = vunpack.c.h.b16 %v162
      %v460 = vunpack.c.l.b16 %v163
      %v461 = vunpack.c.h.b16 %v163
      %v462 = vunpack.c.l.b16 %v164
      %v463 = vunpack.c.h.b16 %v164
      %v464 = vunpack.c.l.b16 %v165
      %v465 = vunpack.c.h.b16 %v165
      %v466 = vunpack.c.l.b16 %v166
      %v467 = vunpack.c.h.b16 %v166
      %v468 = vunpack.c.l.b16 %v167
      %v469 = vunpack.c.h.b16 %v167
      %v470 = vunpack.c.l.b16 %v168
      %v471 = vunpack.c.h.b16 %v168
      %v472 = vunpack.c.l.b16 %v169
      %v473 = vunpack.c.h.b16 %v169
      %v474 = vunpack.c.l.b16 %v170
      %v475 = vunpack.c.h.b16 %v170
      %v476 = vunpack.c.l.b16 %v171
      %v477 = vunpack.c.h.b16 %v171
      %v478 = vunpack.c.l.b16 %v172
      %v479 = vunpack.c.h.b16 %v172
      %v480 = vunpack.c.l.b16 %v173
      %v481 = vunpack.c.h.b16 %v173
      %v482 = vunpack.c.l.b16 %v174
      %v483 = vunpack.c.h.b16 %v174
      %v484 = vunpack.c.l.b16 %v175
      %v485 = vunpack.c.h.b16 %v175
      %v486 = vunpack.c.l.b16 %v176
      %v487 = vunpack.c.h.b16 %v176
      %v488 = vunpack.c.l.b16 %v177
      %v489 = vunpack.c.h.b16 %v177
      %v490 = vunpack.c.l.b16 %v178
      %v491 = vunpack.c.h.b16 %v178
      %v492 = vunpack.c.l.b16 %v179
      %v493 = vunpack.c.h.b16 %v179
      %v494 = vunpack.c.l.b16 %v180
      %v495 = vunpack.c.h.b16 %v180
      %v496 = vunpack.c.l.b16 %v181
      %v497 = vunpack.c.h.b16 %v181
      %v498 = vunpack.c.l.b16 %v182
      %v499 = vunpack.c.h.b16 %v182
      %v500 = vunpack.c.l.b16 %v183
      %v501 = vunpack.c.h.b16 %v183
      %v502 = vunpack.c.l.b16 %v184
      %v503 = vunpack.c.h.b16 %v184
      %v504 = vunpack.c.l.b16 %v185
      %v505 = vunpack.c.h.b16 %v185
      %v506 = vunpack.c.l.b16 %v186
      %v507 = vunpack.c.h.b16 %v186
      %v508 = vunpack.c.l.b16 %v187
      %v509 = vunpack.c.h.b16 %v187
      %v510 = vunpack.c.l.b16 %v188
      %v511 = vunpack.c.h.b16 %v188
      %v512 = vunpack.c.l.b16 %v189
      %v513 = vunpack.c.h.b16 %v189
      %v514 = vunpack.c.l.b16 %v190
      %v515 = vunpack.c.h.b16 %v190
      %v516 = vunpack.c.l.b16 %v191
      %v517 = vunpack.c.h.b16 %v191
      %v518 = vpack.c.b16 %v458, %v454
      %v519 = vpack.c.b16 %v459, %v455
      %v520 = vpack.c.b16 %v460, %v456
      %v521 = vpack.c.b16 %v461, %v457
      %v522 = vpack.c.b16 %v466, %v462
      %v523 = vpack.c.b16 %v467, %v463
      %v524 = vpack.c.b16 %v468, %v464
      %v525 = vpack.c.b16 %v469, %v465
      %v526 = vpack.c.b16 %v474, %v470
      %v527 = vpack.c.b16 %v475, %v471
      %v528 = vpack.c.b16 %v476, %v472
      %v529 = vpack.c.b16 %v477, %v473
      %v530 = vpack.c.b16 %v482, %v478
      %v531 = vpack.c.b16 %v483, %v479
      %v532 = vpack.c.b16 %v484, %v480
      %v533 = vpack.c.b16 %v485, %v481
      %v534 = vpack.c.b16 %v490, %v486
      %v535 = vpack.c.b16 %v491, %v487
      %v536 = vpack.c.b16 %v492, %v488
      %v537 = vpack.c.b16 %v493, %v489
      %v538 = vpack.c.b16 %v498, %v494
      %v539 = vpack.c.b16 %v499, %v495
      %v540 = vpack.c.b16 %v500, %v496
      %v541 = vpack.c.b16 %v501, %v497
      %v542 = vpack.c.b16 %v506, %v502
      %v543 = vpack.c.b16 %v507, %v503
      %v544 = vpack.c.b16 %v508, %v504
      %v545 = vpack.c.b16 %v509, %v505
      %v546 = vpack.c.b16 %v514, %v510
      %v547 = vpack.c.b16 %v515, %v511
      %v548 = vpack.c.b16 %v516, %v512
      %v549 = vpack.c.b16 %v517, %v513
      %582 = vmatprep.subr.bf16.mxu0 %v547
      %583 = vmatpush1.bf16.msra.mxu0 %v546
      %584 = vmatprep.subr.bf16.mxu0 %v543
      %585 = vmatpush1.bf16.msra.mxu0 %v542
      %586 = vmatprep.subr.bf16.mxu0 %v539
      %587 = vmatpush1.bf16.msra.mxu0 %v538
      %588 = vmatprep.subr.bf16.mxu0 %v535
      %589 = vmatpush1.bf16.msra.mxu0 %v534
      %590 = vmatprep.subr.bf16.mxu0 %v531
      %591 = vmatpush1.bf16.msra.mxu0 %v530
      %592 = vmatprep.subr.bf16.mxu0 %v527
      %593 = vmatpush1.bf16.msra.mxu0 %v526
      %594 = vmatprep.subr.bf16.mxu0 %v523
      %595 = vmatpush1.bf16.msra.mxu0 %v522
      %596 = vmatprep.subr.bf16.mxu0 %v519
      %597 = vmatpush1.bf16.msra.mxu0 %v518
      %598 = vmatprep.subr.bf16.mxu0 0
      %599 = vmatpush2.bf16.msra.mxu0 0
      %600 = vmatprep.subr.bf16.mxu0 0
      %601 = vmatpush2.bf16.msra.mxu0 0
      %602 = vmatprep.subr.bf16.mxu0 0
      %603 = vmatpush2.bf16.msra.mxu0 0
      %604 = vmatprep.subr.bf16.mxu0 0
      %605 = vmatpush2.bf16.msra.mxu0 0
      %606 = vmatprep.subr.bf16.mxu0 0
      %607 = vmatpush2.bf16.msra.mxu0 0
      %608 = vmatprep.subr.bf16.mxu0 0
      %609 = vmatpush2.bf16.msra.mxu0 0
      %610 = vmatprep.subr.bf16.mxu0 0
      %611 = vmatpush2.bf16.msra.mxu0 0
      %612 = vmatprep.subr.bf16.mxu0 0
      %613 = vmatpush2.bf16.msra.mxu0 0
      %614 = vmatprep.mubr.bf16.mxu0 0
      %615 = vmatmul.mubr.bf16.gmra.mxu0 %v421
      %v616 = vpop.f32.mrf.mxu0
      %v617 = vadd.f32 0.0, %v616
      %v618 = vpop.f32.mrf.mxu0
      %v619 = vadd.f32 0.0, %v618
      %v620 = vpop.f32.mrf.mxu0
      %v621 = vpop.f32.mrf.mxu0
      %622 = vdwg.mxu0
      %623 = vmatprep.subr.bf16.mxu0 %v549
      %624 = vmatpush1.bf16.msra.mxu0 %v548
      %625 = vmatprep.subr.bf16.mxu0 %v545
      %626 = vmatpush1.bf16.msra.mxu0 %v544
      %627 = vmatprep.subr.bf16.mxu0 %v541
      %628 = vmatpush1.bf16.msra.mxu0 %v540
      %629 = vmatprep.subr.bf16.mxu0 %v537
      %630 = vmatpush1.bf16.msra.mxu0 %v536
      %631 = vmatprep.subr.bf16.mxu0 %v533
      %632 = vmatpush1.bf16.msra.mxu0 %v532
      %633 = vmatprep.subr.bf16.mxu0 %v529
      %634 = vmatpush1.bf16.msra.mxu0 %v528
      %635 = vmatprep.subr.bf16.mxu0 %v525
      %636 = vmatpush1.bf16.msra.mxu0 %v524
      %637 = vmatprep.subr.bf16.mxu0 %v521
      %638 = vmatpush1.bf16.msra.mxu0 %v520
      %639 = vmatprep.subr.bf16.mxu0 0
      %640 = vmatpush2.bf16.msra.mxu0 0
      %641 = vmatprep.subr.bf16.mxu0 0
      %642 = vmatpush2.bf16.msra.mxu0 0
      %643 = vmatprep.subr.bf16.mxu0 0
      %644 = vmatpush2.bf16.msra.mxu0 0
      %645 = vmatprep.subr.bf16.mxu0 0
      %646 = vmatpush2.bf16.msra.mxu0 0
      %647 = vmatprep.subr.bf16.mxu0 0
      %648 = vmatpush2.bf16.msra.mxu0 0
      %649 = vmatprep.subr.bf16.mxu0 0
      %650 = vmatpush2.bf16.msra.mxu0 0
      %651 = vmatprep.subr.bf16.mxu0 0
      %652 = vmatpush2.bf16.msra.mxu0 0
      %653 = vmatprep.subr.bf16.mxu0 0
      %654 = vmatpush2.bf16.msra.mxu0 0
      %655 = vmatprep.mubr.bf16.mxu0 0
      %656 = vmatmul.mubr.bf16.gmra.mxu0 %v421
      %v657 = vpop.f32.mrf.mxu0
      %v658 = vadd.f32 0.0, %v657
      %v659 = vpop.f32.mrf.mxu0
      %v660 = vadd.f32 0.0, %v659
      %v661 = vpop.f32.mrf.mxu0
      %v662 = vpop.f32.mrf.mxu0
      %663 = vdwg.mxu0
      %v696 = vunpack.c.l.b16 %v128
      %v697 = vunpack.c.h.b16 %v128
      %v698 = vunpack.c.l.b16 %v129
      %v699 = vunpack.c.h.b16 %v129
      %v700 = vunpack.c.l.b16 %v130
      %v701 = vunpack.c.h.b16 %v130
      %v702 = vunpack.c.l.b16 %v131
      %v703 = vunpack.c.h.b16 %v131
      %v704 = vunpack.c.l.b16 %v132
      %v705 = vunpack.c.h.b16 %v132
      %v706 = vunpack.c.l.b16 %v133
      %v707 = vunpack.c.h.b16 %v133
      %v708 = vunpack.c.l.b16 %v134
      %v709 = vunpack.c.h.b16 %v134
      %v710 = vunpack.c.l.b16 %v135
      %v711 = vunpack.c.h.b16 %v135
      %v712 = vunpack.c.l.b16 %v136
      %v713 = vunpack.c.h.b16 %v136
      %v714 = vunpack.c.l.b16 %v137
      %v715 = vunpack.c.h.b16 %v137
      %v716 = vunpack.c.l.b16 %v138
      %v717 = vunpack.c.h.b16 %v138
      %v718 = vunpack.c.l.b16 %v139
      %v719 = vunpack.c.h.b16 %v139
      %v720 = vunpack.c.l.b16 %v140
      %v721 = vunpack.c.h.b16 %v140
      %v722 = vunpack.c.l.b16 %v141
      %v723 = vunpack.c.h.b16 %v141
      %v724 = vunpack.c.l.b16 %v142
      %v725 = vunpack.c.h.b16 %v142
      %v726 = vunpack.c.l.b16 %v143
      %v727 = vunpack.c.h.b16 %v143
      %v728 = vunpack.c.l.b16 %v144
      %v729 = vunpack.c.h.b16 %v144
      %v730 = vunpack.c.l.b16 %v145
      %v731 = vunpack.c.h.b16 %v145
      %v732 = vunpack.c.l.b16 %v146
      %v733 = vunpack.c.h.b16 %v146
      %v734 = vunpack.c.l.b16 %v147
      %v735 = vunpack.c.h.b16 %v147
      %v736 = vunpack.c.l.b16 %v148
      %v737 = vunpack.c.h.b16 %v148
      %v738 = vunpack.c.l.b16 %v149
      %v739 = vunpack.c.h.b16 %v149
      %v740 = vunpack.c.l.b16 %v150
      %v741 = vunpack.c.h.b16 %v150
      %v742 = vunpack.c.l.b16 %v151
      %v743 = vunpack.c.h.b16 %v151
      %v744 = vunpack.c.l.b16 %v152
      %v745 = vunpack.c.h.b16 %v152
      %v746 = vunpack.c.l.b16 %v153
      %v747 = vunpack.c.h.b16 %v153
      %v748 = vunpack.c.l.b16 %v154
      %v749 = vunpack.c.h.b16 %v154
      %v750 = vunpack.c.l.b16 %v155
      %v751 = vunpack.c.h.b16 %v155
      %v752 = vunpack.c.l.b16 %v156
      %v753 = vunpack.c.h.b16 %v156
      %v754 = vunpack.c.l.b16 %v157
      %v755 = vunpack.c.h.b16 %v157
      %v756 = vunpack.c.l.b16 %v158
      %v757 = vunpack.c.h.b16 %v158
      %v758 = vunpack.c.l.b16 %v159
      %v759 = vunpack.c.h.b16 %v159
      %v760 = vpack.c.b16 %v700, %v696
      %v761 = vpack.c.b16 %v701, %v697
      %v762 = vpack.c.b16 %v702, %v698
      %v763 = vpack.c.b16 %v703, %v699
      %v764 = vpack.c.b16 %v708, %v704
      %v765 = vpack.c.b16 %v709, %v705
      %v766 = vpack.c.b16 %v710, %v706
      %v767 = vpack.c.b16 %v711, %v707
      %v768 = vpack.c.b16 %v716, %v712
      %v769 = vpack.c.b16 %v717, %v713
      %v770 = vpack.c.b16 %v718, %v714
      %v771 = vpack.c.b16 %v719, %v715
      %v772 = vpack.c.b16 %v724, %v720
      %v773 = vpack.c.b16 %v725, %v721
      %v774 = vpack.c.b16 %v726, %v722
      %v775 = vpack.c.b16 %v727, %v723
      %v776 = vpack.c.b16 %v732, %v728
      %v777 = vpack.c.b16 %v733, %v729
      %v778 = vpack.c.b16 %v734, %v730
      %v779 = vpack.c.b16 %v735, %v731
      %v780 = vpack.c.b16 %v740, %v736
      %v781 = vpack.c.b16 %v741, %v737
      %v782 = vpack.c.b16 %v742, %v738
      %v783 = vpack.c.b16 %v743, %v739
      %v784 = vpack.c.b16 %v748, %v744
      %v785 = vpack.c.b16 %v749, %v745
      %v786 = vpack.c.b16 %v750, %v746
      %v787 = vpack.c.b16 %v751, %v747
      %v788 = vpack.c.b16 %v756, %v752
      %v789 = vpack.c.b16 %v757, %v753
      %v790 = vpack.c.b16 %v758, %v754
      %v791 = vpack.c.b16 %v759, %v755
      %824 = vmatprep.subr.bf16.mxu0 %v789
      %825 = vmatpush1.bf16.msra.mxu0 %v788
      %826 = vmatprep.subr.bf16.mxu0 %v785
      %827 = vmatpush1.bf16.msra.mxu0 %v784
      %828 = vmatprep.subr.bf16.mxu0 %v781
      %829 = vmatpush1.bf16.msra.mxu0 %v780
      %830 = vmatprep.subr.bf16.mxu0 %v777
      %831 = vmatpush1.bf16.msra.mxu0 %v776
      %832 = vmatprep.subr.bf16.mxu0 %v773
      %833 = vmatpush1.bf16.msra.mxu0 %v772
      %834 = vmatprep.subr.bf16.mxu0 %v769
      %835 = vmatpush1.bf16.msra.mxu0 %v768
      %836 = vmatprep.subr.bf16.mxu0 %v765
      %837 = vmatpush1.bf16.msra.mxu0 %v764
      %838 = vmatprep.subr.bf16.mxu0 %v761
      %839 = vmatpush1.bf16.msra.mxu0 %v760
      %840 = vmatprep.subr.bf16.mxu0 0
      %841 = vmatpush2.bf16.msra.mxu0 0
      %842 = vmatprep.subr.bf16.mxu0 0
      %843 = vmatpush2.bf16.msra.mxu0 0
      %844 = vmatprep.subr.bf16.mxu0 0
      %845 = vmatpush2.bf16.msra.mxu0 0
      %846 = vmatprep.subr.bf16.mxu0 0
      %847 = vmatpush2.bf16.msra.mxu0 0
      %848 = vmatprep.subr.bf16.mxu0 0
      %849 = vmatpush2.bf16.msra.mxu0 0
      %850 = vmatprep.subr.bf16.mxu0 0
      %851 = vmatpush2.bf16.msra.mxu0 0
      %852 = vmatprep.subr.bf16.mxu0 0
      %853 = vmatpush2.bf16.msra.mxu0 0
      %854 = vmatprep.subr.bf16.mxu0 0
      %855 = vmatpush2.bf16.msra.mxu0 0
      %856 = vmatprep.mubr.bf16.mxu0 0
      %857 = vmatmul.mubr.bf16.gmra.mxu0 %v420
      %v858 = vpop.f32.mrf.mxu0
      %v859 = vadd.f32 %v617, %v858
      %v860 = vpop.f32.mrf.mxu0
      %v861 = vadd.f32 %v619, %v860
      %v862 = vpop.f32.mrf.mxu0
      %v863 = vpop.f32.mrf.mxu0
      %864 = vdwg.mxu0
      %865 = vmatprep.subr.bf16.mxu0 %v791
      %866 = vmatpush1.bf16.msra.mxu0 %v790
      %867 = vmatprep.subr.bf16.mxu0 %v787
      %868 = vmatpush1.bf16.msra.mxu0 %v786
      %869 = vmatprep.subr.bf16.mxu0 %v783
      %870 = vmatpush1.bf16.msra.mxu0 %v782
      %871 = vmatprep.subr.bf16.mxu0 %v779
      %872 = vmatpush1.bf16.msra.mxu0 %v778
      %873 = vmatprep.subr.bf16.mxu0 %v775
      %874 = vmatpush1.bf16.msra.mxu0 %v774
      %875 = vmatprep.subr.bf16.mxu0 %v771
      %876 = vmatpush1.bf16.msra.mxu0 %v770
      %877 = vmatprep.subr.bf16.mxu0 %v767
      %878 = vmatpush1.bf16.msra.mxu0 %v766
      %879 = vmatprep.subr.bf16.mxu0 %v763
      %880 = vmatpush1.bf16.msra.mxu0 %v762
      %881 = vmatprep.subr.bf16.mxu0 0
      %882 = vmatpush2.bf16.msra.mxu0 0
      %883 = vmatprep.subr.bf16.mxu0 0
      %884 = vmatpush2.bf16.msra.mxu0 0
      %885 = vmatprep.subr.bf16.mxu0 0
      %886 = vmatpush2.bf16.msra.mxu0 0
      %887 = vmatprep.subr.bf16.mxu0 0
      %888 = vmatpush2.bf16.msra.mxu0 0
      %889 = vmatprep.subr.bf16.mxu0 0
      %890 = vmatpush2.bf16.msra.mxu0 0
      %891 = vmatprep.subr.bf16.mxu0 0
      %892 = vmatpush2.bf16.msra.mxu0 0
      %893 = vmatprep.subr.bf16.mxu0 0
      %894 = vmatpush2.bf16.msra.mxu0 0
      %895 = vmatprep.subr.bf16.mxu0 0
      %896 = vmatpush2.bf16.msra.mxu0 0
      %897 = vmatprep.mubr.bf16.mxu0 0
      %898 = vmatmul.mubr.bf16.gmra.mxu0 %v420
      %v899 = vpop.f32.mrf.mxu0
      %v900 = vadd.f32 %v658, %v899
      %v901 = vpop.f32.mrf.mxu0
      %v902 = vadd.f32 %v660, %v901
      %v903 = vpop.f32.mrf.mxu0
      %v904 = vpop.f32.mrf.mxu0
      %905 = vdwg.mxu0
      %v907 = vlaneseq
      %v908 = vshrl.u32 %v907, 7
      %v909 = vsub.s32 0, %v908
      %v910 = vrot.slane %v192, %v909
      %v911 = vlaneseq
      %v912 = vshrl.u32 %v911, 7
      %v913 = vsub.s32 1, %v912
      %v914 = vrot.slane %v192, %v913
      %v915 = vlaneseq
      %v916 = vshrl.u32 %v915, 7
      %v917 = vsub.s32 2, %v916
      %v918 = vrot.slane %v192, %v917
      %v919 = vlaneseq
      %v920 = vshrl.u32 %v919, 7
      %v921 = vsub.s32 3, %v920
      %v922 = vrot.slane %v192, %v921
      %v927 = vadd.f32 %v859, %v910
      %v928 = vadd.f32 %v861, %v914
      %v929 = vadd.f32 %v900, %v918
      %v930 = vadd.f32 %v902, %v922
      %v931 = vxor.u32 %v927, 2147483648
      %v932 = vmul.f32 %v931, 1.442695
      %v933 = vpow.pop %v932
      %v934 = vadd.f32 %v933, 1.0
      %v935 = vrcp.pop %v934
      %v936 = vmul.f32 1.0, %v935
      %v937 = vxor.u32 %v928, 2147483648
      %v938 = vmul.f32 %v937, 1.442695
      %v939 = vpow.pop %v938
      %v940 = vadd.f32 %v939, 1.0
      %v941 = vrcp.pop %v940
      %v942 = vmul.f32 1.0, %v941
      %v943 = vtanh.pop %v929
      %v944 = vxor.u32 %v930, 2147483648
      %v945 = vmul.f32 %v944, 1.442695
      %v946 = vpow.pop %v945
      %v947 = vadd.f32 %v946, 1.0
      %v948 = vrcp.pop %v947
      %v949 = vmul.f32 1.0, %v948
      %v950 = vmul.f32 %v942, %v415
      %v951 = vmul.f32 %v936, %v943
      %v952 = vadd.f32 %v950, %v951
      %v953 = vtanh.pop %v952
      %v954 = vmul.f32 %v949, %v953
      %955 = vst [vmem:[#allocation2] sm:$0xff] %v954
      %956 = vst [vmem:[#allocation3] sm:$0xff] %v952
    $region73: #{tpu_custom_call.1} parent=1 // pred_fallthru
      _
    %v957 = vld [vmem:[#allocation11] sm:$0xf]
    %v958 = vld [vmem:[#allocation11 + $0x4] sm:$0xf]
    %v959 = vld [vmem:[#allocation11 + $0x8] sm:$0xf]
    %v960 = vld [vmem:[#allocation11 + $0xc] sm:$0xf]
    %v961 = vld [vmem:[#allocation11 + $0x10] sm:$0xf]
    %v962 = vld [vmem:[#allocation11 + $0x14] sm:$0xf]
    %v963 = vld [vmem:[#allocation11 + $0x18] sm:$0xf]
    %v964 = vld [vmem:[#allocation11 + $0x1c] sm:$0xf]
    %v966 = vlaneseq
    %v967 = vshrl.u32 %v966, 7
    %v968 = vsub.s32 0, %v967
    %v969 = vrot.slane %v192, %v968
    %v970 = vlaneseq
    %v971 = vshrl.u32 %v970, 7
    %v972 = vsub.s32 1, %v971
    %v973 = vrot.slane %v192, %v972
    %v974 = vlaneseq
    %v975 = vshrl.u32 %v974, 7
    %v976 = vsub.s32 2, %v975
    %v977 = vrot.slane %v192, %v976
    %v978 = vlaneseq
    %v979 = vshrl.u32 %v978, 7
    %v980 = vsub.s32 3, %v979
    %v981 = vrot.slane %v192, %v980
    %v994 = vunpack.c.l.b16 %v957
    %v995 = vunpack.c.l.b16 %v958
    %v996 = vunpack.c.l.b16 %v959
    %v997 = vunpack.c.l.b16 %v960
    %v998 = vunpack.c.l.b16 %v961
    %v999 = vunpack.c.l.b16 %v962
    %v1000 = vunpack.c.l.b16 %v963
    %v1001 = vunpack.c.l.b16 %v964
    %v1002 = vpack.c.b16 %v995, %v994
    %v1003 = vpack.c.b16 %v997, %v996
    %v1004 = vpack.c.b16 %v999, %v998
    %v1005 = vpack.c.b16 %v1001, %v1000
    %v1042 = vunpack.c.l.b16 %v128
    %v1043 = vunpack.c.h.b16 %v128
    %v1044 = vunpack.c.l.b16 %v129
    %v1045 = vunpack.c.h.b16 %v129
    %v1046 = vunpack.c.l.b16 %v130
    %v1047 = vunpack.c.h.b16 %v130
    %v1048 = vunpack.c.l.b16 %v131
    %v1049 = vunpack.c.h.b16 %v131
    %v1050 = vunpack.c.l.b16 %v132
    %v1051 = vunpack.c.h.b16 %v132
    %v1052 = vunpack.c.l.b16 %v133
    %v1053 = vunpack.c.h.b16 %v133
    %v1054 = vunpack.c.l.b16 %v134
    %v1055 = vunpack.c.h.b16 %v134
    %v1056 = vunpack.c.l.b16 %v135
    %v1057 = vunpack.c.h.b16 %v135
    %v1058 = vunpack.c.l.b16 %v136
    %v1059 = vunpack.c.h.b16 %v136
    %v1060 = vunpack.c.l.b16 %v137
    %v1061 = vunpack.c.h.b16 %v137
    %v1062 = vunpack.c.l.b16 %v138
    %v1063 = vunpack.c.h.b16 %v138
    %v1064 = vunpack.c.l.b16 %v139
    %v1065 = vunpack.c.h.b16 %v139
    %v1066 = vunpack.c.l.b16 %v140
    %v1067 = vunpack.c.h.b16 %v140
    %v1068 = vunpack.c.l.b16 %v141
    %v1069 = vunpack.c.h.b16 %v141
    %v1070 = vunpack.c.l.b16 %v142
    %v1071 = vunpack.c.h.b16 %v142
    %v1072 = vunpack.c.l.b16 %v143
    %v1073 = vunpack.c.h.b16 %v143
    %v1074 = vunpack.c.l.b16 %v144
    %v1075 = vunpack.c.h.b16 %v144
    %v1076 = vunpack.c.l.b16 %v145
    %v1077 = vunpack.c.h.b16 %v145
    %v1078 = vunpack.c.l.b16 %v146
    %v1079 = vunpack.c.h.b16 %v146
    %v1080 = vunpack.c.l.b16 %v147
    %v1081 = vunpack.c.h.b16 %v147
    %v1082 = vunpack.c.l.b16 %v148
    %v1083 = vunpack.c.h.b16 %v148
    %v1084 = vunpack.c.l.b16 %v149
    %v1085 = vunpack.c.h.b16 %v149
    %v1086 = vunpack.c.l.b16 %v150
    %v1087 = vunpack.c.h.b16 %v150
    %v1088 = vunpack.c.l.b16 %v151
    %v1089 = vunpack.c.h.b16 %v151
    %v1090 = vunpack.c.l.b16 %v152
    %v1091 = vunpack.c.h.b16 %v152
    %v1092 = vunpack.c.l.b16 %v153
    %v1093 = vunpack.c.h.b16 %v153
    %v1094 = vunpack.c.l.b16 %v154
    %v1095 = vunpack.c.h.b16 %v154
    %v1096 = vunpack.c.l.b16 %v155
    %v1097 = vunpack.c.h.b16 %v155
    %v1098 = vunpack.c.l.b16 %v156
    %v1099 = vunpack.c.h.b16 %v156
    %v1100 = vunpack.c.l.b16 %v157
    %v1101 = vunpack.c.h.b16 %v157
    %v1102 = vunpack.c.l.b16 %v158
    %v1103 = vunpack.c.h.b16 %v158
    %v1104 = vunpack.c.l.b16 %v159
    %v1105 = vunpack.c.h.b16 %v159
    %v1106 = vpack.c.b16 %v1046, %v1042
    %v1107 = vpack.c.b16 %v1047, %v1043
    %v1108 = vpack.c.b16 %v1048, %v1044
    %v1109 = vpack.c.b16 %v1049, %v1045
    %v1110 = vpack.c.b16 %v1054, %v1050
    %v1111 = vpack.c.b16 %v1055, %v1051
    %v1112 = vpack.c.b16 %v1056, %v1052
    %v1113 = vpack.c.b16 %v1057, %v1053
    %v1114 = vpack.c.b16 %v1062, %v1058
    %v1115 = vpack.c.b16 %v1063, %v1059
    %v1116 = vpack.c.b16 %v1064, %v1060
    %v1117 = vpack.c.b16 %v1065, %v1061
    %v1118 = vpack.c.b16 %v1070, %v1066
    %v1119 = vpack.c.b16 %v1071, %v1067
    %v1120 = vpack.c.b16 %v1072, %v1068
    %v1121 = vpack.c.b16 %v1073, %v1069
    %v1122 = vpack.c.b16 %v1078, %v1074
    %v1123 = vpack.c.b16 %v1079, %v1075
    %v1124 = vpack.c.b16 %v1080, %v1076
    %v1125 = vpack.c.b16 %v1081, %v1077
    %v1126 = vpack.c.b16 %v1086, %v1082
    %v1127 = vpack.c.b16 %v1087, %v1083
    %v1128 = vpack.c.b16 %v1088, %v1084
    %v1129 = vpack.c.b16 %v1089, %v1085
    %v1130 = vpack.c.b16 %v1094, %v1090
    %v1131 = vpack.c.b16 %v1095, %v1091
    %v1132 = vpack.c.b16 %v1096, %v1092
    %v1133 = vpack.c.b16 %v1097, %v1093
    %v1134 = vpack.c.b16 %v1102, %v1098
    %v1135 = vpack.c.b16 %v1103, %v1099
    %v1136 = vpack.c.b16 %v1104, %v1100
    %v1137 = vpack.c.b16 %v1105, %v1101
    %1170 = vmatprep.subr.bf16.mxu0 %v1135
    %1171 = vmatpush1.bf16.msra.mxu0 %v1134
    %1172 = vmatprep.subr.bf16.mxu0 %v1131
    %1173 = vmatpush1.bf16.msra.mxu0 %v1130
    %1174 = vmatprep.subr.bf16.mxu0 %v1127
    %1175 = vmatpush1.bf16.msra.mxu0 %v1126
    %1176 = vmatprep.subr.bf16.mxu0 %v1123
    %1177 = vmatpush1.bf16.msra.mxu0 %v1122
    %1178 = vmatprep.subr.bf16.mxu0 %v1119
    %1179 = vmatpush1.bf16.msra.mxu0 %v1118
    %1180 = vmatprep.subr.bf16.mxu0 %v1115
    %1181 = vmatpush1.bf16.msra.mxu0 %v1114
    %1182 = vmatprep.subr.bf16.mxu0 %v1111
    %1183 = vmatpush1.bf16.msra.mxu0 %v1110
    %1184 = vmatprep.subr.bf16.mxu0 %v1107
    %1185 = vmatpush1.bf16.msra.mxu0 %v1106
    %1186 = vmatprep.subr.bf16.mxu0 0
    %1187 = vmatpush2.bf16.msra.mxu0 0
    %1188 = vmatprep.subr.bf16.mxu0 0
    %1189 = vmatpush2.bf16.msra.mxu0 0
    %1190 = vmatprep.subr.bf16.mxu0 0
    %1191 = vmatpush2.bf16.msra.mxu0 0
    %1192 = vmatprep.subr.bf16.mxu0 0
    %1193 = vmatpush2.bf16.msra.mxu0 0
    %1194 = vmatprep.subr.bf16.mxu0 0
    %1195 = vmatpush2.bf16.msra.mxu0 0
    %1196 = vmatprep.subr.bf16.mxu0 0
    %1197 = vmatpush2.bf16.msra.mxu0 0
    %1198 = vmatprep.subr.bf16.mxu0 0
    %1199 = vmatpush2.bf16.msra.mxu0 0
    %1200 = vmatprep.subr.bf16.mxu0 0
    %1201 = vmatpush2.bf16.msra.mxu0 0
    %1202 = vmatprep.mubr.bf16.mxu0 0
    %1203 = vmatmul.mubr.bf16.gmra.mxu0 %v1002
    %v1204 = vpop.f32.mrf.mxu0
    %v1205 = vadd.f32 %v969, %v1204
    %v1206 = vpop.f32.mrf.mxu0
    %v1207 = vadd.f32 %v973, %v1206
    %v1208 = vpop.f32.mrf.mxu0
    %v1209 = vadd.f32 %v969, %v1208
    %v1210 = vpop.f32.mrf.mxu0
    %v1211 = vadd.f32 %v973, %v1210
    %1212 = vmatprep.mubr.bf16.mxu0 0
    %1213 = vmatmul.mubr.bf16.gmra.mxu0 %v1003
    %v1214 = vpop.f32.mrf.mxu0
    %v1215 = vadd.f32 %v969, %v1214
    %v1216 = vpop.f32.mrf.mxu0
    %v1217 = vadd.f32 %v973, %v1216
    %v1218 = vpop.f32.mrf.mxu0
    %v1219 = vadd.f32 %v969, %v1218
    %v1220 = vpop.f32.mrf.mxu0
    %v1221 = vadd.f32 %v973, %v1220
    %1222 = vmatprep.mubr.bf16.mxu0 0
    %1223 = vmatmul.mubr.bf16.gmra.mxu0 %v1004
    %v1224 = vpop.f32.mrf.mxu0
    %v1225 = vadd.f32 %v969, %v1224
    %v1226 = vpop.f32.mrf.mxu0
    %v1227 = vadd.f32 %v973, %v1226
    %v1228 = vpop.f32.mrf.mxu0
    %v1229 = vadd.f32 %v969, %v1228
    %v1230 = vpop.f32.mrf.mxu0
    %v1231 = vadd.f32 %v973, %v1230
    %1232 = vmatprep.mubr.bf16.mxu0 0
    %1233 = vmatmul.mubr.bf16.gmra.mxu0 %v1005
    %v1234 = vpop.f32.mrf.mxu0
    %v1235 = vadd.f32 %v969, %v1234
    %v1236 = vpop.f32.mrf.mxu0
    %v1237 = vadd.f32 %v973, %v1236
    %v1238 = vpop.f32.mrf.mxu0
    %v1239 = vadd.f32 %v969, %v1238
    %v1240 = vpop.f32.mrf.mxu0
    %v1241 = vadd.f32 %v973, %v1240
    %1242 = vdwg.mxu0
    %1243 = vmatprep.subr.bf16.mxu0 %v1137
    %1244 = vmatpush1.bf16.msra.mxu0 %v1136
    %1245 = vmatprep.subr.bf16.mxu0 %v1133
    %1246 = vmatpush1.bf16.msra.mxu0 %v1132
    %1247 = vmatprep.subr.bf16.mxu0 %v1129
    %1248 = vmatpush1.bf16.msra.mxu0 %v1128
    %1249 = vmatprep.subr.bf16.mxu0 %v1125
    %1250 = vmatpush1.bf16.msra.mxu0 %v1124
    %1251 = vmatprep.subr.bf16.mxu0 %v1121
    %1252 = vmatpush1.bf16.msra.mxu0 %v1120
    %1253 = vmatprep.subr.bf16.mxu0 %v1117
    %1254 = vmatpush1.bf16.msra.mxu0 %v1116
    %1255 = vmatprep.subr.bf16.mxu0 %v1113
    %1256 = vmatpush1.bf16.msra.mxu0 %v1112
    %1257 = vmatprep.subr.bf16.mxu0 %v1109
    %1258 = vmatpush1.bf16.msra.mxu0 %v1108
    %1259 = vmatprep.subr.bf16.mxu0 0
    %1260 = vmatpush2.bf16.msra.mxu0 0
    %1261 = vmatprep.subr.bf16.mxu0 0
    %1262 = vmatpush2.bf16.msra.mxu0 0
    %1263 = vmatprep.subr.bf16.mxu0 0
    %1264 = vmatpush2.bf16.msra.mxu0 0
    %1265 = vmatprep.subr.bf16.mxu0 0
    %1266 = vmatpush2.bf16.msra.mxu0 0
    %1267 = vmatprep.subr.bf16.mxu0 0
    %1268 = vmatpush2.bf16.msra.mxu0 0
    %1269 = vmatprep.subr.bf16.mxu0 0
    %1270 = vmatpush2.bf16.msra.mxu0 0
    %1271 = vmatprep.subr.bf16.mxu0 0
    %1272 = vmatpush2.bf16.msra.mxu0 0
    %1273 = vmatprep.subr.bf16.mxu0 0
    %1274 = vmatpush2.bf16.msra.mxu0 0
    %1275 = vmatprep.mubr.bf16.mxu0 0
    %1276 = vmatmul.mubr.bf16.gmra.mxu0 %v1002
    %v1277 = vpop.f32.mrf.mxu0
    %v1278 = vadd.f32 %v977, %v1277
    %v1279 = vpop.f32.mrf.mxu0
    %v1280 = vadd.f32 %v981, %v1279
    %v1281 = vpop.f32.mrf.mxu0
    %v1282 = vadd.f32 %v977, %v1281
    %v1283 = vpop.f32.mrf.mxu0
    %v1284 = vadd.f32 %v981, %v1283
    %1285 = vmatprep.mubr.bf16.mxu0 0
    %1286 = vmatmul.mubr.bf16.gmra.mxu0 %v1003
    %v1287 = vpop.f32.mrf.mxu0
    %v1288 = vadd.f32 %v977, %v1287
    %v1289 = vpop.f32.mrf.mxu0
    %v1290 = vadd.f32 %v981, %v1289
    %v1291 = vpop.f32.mrf.mxu0
    %v1292 = vadd.f32 %v977, %v1291
    %v1293 = vpop.f32.mrf.mxu0
    %v1294 = vadd.f32 %v981, %v1293
    %1295 = vmatprep.mubr.bf16.mxu0 0
    %1296 = vmatmul.mubr.bf16.gmra.mxu0 %v1004
    %v1297 = vpop.f32.mrf.mxu0
    %v1298 = vadd.f32 %v977, %v1297
    %v1299 = vpop.f32.mrf.mxu0
    %v1300 = vadd.f32 %v981, %v1299
    %v1301 = vpop.f32.mrf.mxu0
    %v1302 = vadd.f32 %v977, %v1301
    %v1303 = vpop.f32.mrf.mxu0
    %v1304 = vadd.f32 %v981, %v1303
    %1305 = vmatprep.mubr.bf16.mxu0 0
    %1306 = vmatmul.mubr.bf16.gmra.mxu0 %v1005
    %v1307 = vpop.f32.mrf.mxu0
    %v1308 = vadd.f32 %v977, %v1307
    %v1309 = vpop.f32.mrf.mxu0
    %v1310 = vadd.f32 %v981, %v1309
    %v1311 = vpop.f32.mrf.mxu0
    %v1312 = vadd.f32 %v977, %v1311
    %v1313 = vpop.f32.mrf.mxu0
    %v1314 = vadd.f32 %v981, %v1313
    %1315 = vdwg.mxu0
    %1316 = vst [vmem:[#allocation4] sm:$0xff] %v1205
    %1317 = vst [vmem:[#allocation4 + $0x8] sm:$0xff] %v1207
    %1318 = vst [vmem:[#allocation4 + $0x10] sm:$0xff] %v1278
    %1319 = vst [vmem:[#allocation4 + $0x18] sm:$0xff] %v1280
    %1320 = vst [vmem:[#allocation4 + $0x20] sm:$0xff] %v1209
    %1321 = vst [vmem:[#allocation4 + $0x28] sm:$0xff] %v1211
    %1322 = vst [vmem:[#allocation4 + $0x30] sm:$0xff] %v1282
    %1323 = vst [vmem:[#allocation4 + $0x38] sm:$0xff] %v1284
    %1324 = vst [vmem:[#allocation4 + $0x40] sm:$0xff] %v1215
    %1325 = vst [vmem:[#allocation4 + $0x48] sm:$0xff] %v1217
    %1326 = vst [vmem:[#allocation4 + $0x50] sm:$0xff] %v1288
    %1327 = vst [vmem:[#allocation4 + $0x58] sm:$0xff] %v1290
    %1328 = vst [vmem:[#allocation4 + $0x60] sm:$0xff] %v1219
    %1329 = vst [vmem:[#allocation4 + $0x68] sm:$0xff] %v1221
    %1330 = vst [vmem:[#allocation4 + $0x70] sm:$0xff] %v1292
    %1331 = vst [vmem:[#allocation4 + $0x78] sm:$0xff] %v1294
    %1332 = vst [vmem:[#allocation4 + $0x80] sm:$0xff] %v1225
    %1333 = vst [vmem:[#allocation4 + $0x88] sm:$0xff] %v1227
    %1334 = vst [vmem:[#allocation4 + $0x90] sm:$0xff] %v1298
    %1335 = vst [vmem:[#allocation4 + $0x98] sm:$0xff] %v1300
    %1336 = vst [vmem:[#allocation4 + $0xa0] sm:$0xff] %v1229
    %1337 = vst [vmem:[#allocation4 + $0xa8] sm:$0xff] %v1231
    %1338 = vst [vmem:[#allocation4 + $0xb0] sm:$0xff] %v1302
    %1339 = vst [vmem:[#allocation4 + $0xb8] sm:$0xff] %v1304
    %1340 = vst [vmem:[#allocation4 + $0xc0] sm:$0xff] %v1235
    %1341 = vst [vmem:[#allocation4 + $0xc8] sm:$0xff] %v1237
    %1342 = vst [vmem:[#allocation4 + $0xd0] sm:$0xff] %v1308
    %1343 = vst [vmem:[#allocation4 + $0xd8] sm:$0xff] %v1310
    %1344 = vst [vmem:[#allocation4 + $0xe0] sm:$0xff] %v1239
    %1345 = vst [vmem:[#allocation4 + $0xe8] sm:$0xff] %v1241
    %1346 = vst [vmem:[#allocation4 + $0xf0] sm:$0xff] %v1312
    %1347 = vst [vmem:[#allocation4 + $0xf8] sm:$0xff] %v1314
    %v1348 = vld [vmem:[#allocation2] sm:$0xff]
    %v1349 = vld [vmem:[#allocation3] sm:$0xff]
    %s1350 = smul.u32 0, 4
    %s1351 = smul.addr %s1350, 8
    %s1352 = scalar_lea.vmem [#allocation4], %s1351
    %v1353 = vld [vmem:[%s1352] sm:$0xff]
    %v1354 = vld [vmem:[%s1352 + $0x8] sm:$0xff]
    %v1355 = vld [vmem:[%s1352 + $0x10] sm:$0xff]
    %v1356 = vld [vmem:[%s1352 + $0x18] sm:$0xff]
    %v1357 = vpack.c.bf16 %v1348, %v1348
    %v1390 = vunpack.c.l.b16 %v160
    %v1391 = vunpack.c.h.b16 %v160
    %v1392 = vunpack.c.l.b16 %v161
    %v1393 = vunpack.c.h.b16 %v161
    %v1394 = vunpack.c.l.b16 %v162
    %v1395 = vunpack.c.h.b16 %v162
    %v1396 = vunpack.c.l.b16 %v163
    %v1397 = vunpack.c.h.b16 %v163
    %v1398 = vunpack.c.l.b16 %v164
    %v1399 = vunpack.c.h.b16 %v164
    %v1400 = vunpack.c.l.b16 %v165
    %v1401 = vunpack.c.h.b16 %v165
    %v1402 = vunpack.c.l.b16 %v166
    %v1403 = vunpack.c.h.b16 %v166
    %v1404 = vunpack.c.l.b16 %v167
    %v1405 = vunpack.c.h.b16 %v167
    %v1406 = vunpack.c.l.b16 %v168
    %v1407 = vunpack.c.h.b16 %v168
    %v1408 = vunpack.c.l.b16 %v169
    %v1409 = vunpack.c.h.b16 %v169
    %v1410 = vunpack.c.l.b16 %v170
    %v1411 = vunpack.c.h.b16 %v170
    %v1412 = vunpack.c.l.b16 %v171
    %v1413 = vunpack.c.h.b16 %v171
    %v1414 = vunpack.c.l.b16 %v172
    %v1415 = vunpack.c.h.b16 %v172
    %v1416 = vunpack.c.l.b16 %v173
    %v1417 = vunpack.c.h.b16 %v173
    %v1418 = vunpack.c.l.b16 %v174
    %v1419 = vunpack.c.h.b16 %v174
    %v1420 = vunpack.c.l.b16 %v175
    %v1421 = vunpack.c.h.b16 %v175
    %v1422 = vunpack.c.l.b16 %v176
    %v1423 = vunpack.c.h.b16 %v176
    %v1424 = vunpack.c.l.b16 %v177
    %v1425 = vunpack.c.h.b16 %v177
    %v1426 = vunpack.c.l.b16 %v178
    %v1427 = vunpack.c.h.b16 %v178
    %v1428 = vunpack.c.l.b16 %v179
    %v1429 = vunpack.c.h.b16 %v179
    %v1430 = vunpack.c.l.b16 %v180
    %v1431 = vunpack.c.h.b16 %v180
    %v1432 = vunpack.c.l.b16 %v181
    %v1433 = vunpack.c.h.b16 %v181
    %v1434 = vunpack.c.l.b16 %v182
    %v1435 = vunpack.c.h.b16 %v182
    %v1436 = vunpack.c.l.b16 %v183
    %v1437 = vunpack.c.h.b16 %v183
    %v1438 = vunpack.c.l.b16 %v184
    %v1439 = vunpack.c.h.b16 %v184
    %v1440 = vunpack.c.l.b16 %v185
    %v1441 = vunpack.c.h.b16 %v185
    %v1442 = vunpack.c.l.b16 %v186
    %v1443 = vunpack.c.h.b16 %v186
    %v1444 = vunpack.c.l.b16 %v187
    %v1445 = vunpack.c.h.b16 %v187
    %v1446 = vunpack.c.l.b16 %v188
    %v1447 = vunpack.c.h.b16 %v188
    %v1448 = vunpack.c.l.b16 %v189
    %v1449 = vunpack.c.h.b16 %v189
    %v1450 = vunpack.c.l.b16 %v190
    %v1451 = vunpack.c.h.b16 %v190
    %v1452 = vunpack.c.l.b16 %v191
    %v1453 = vunpack.c.h.b16 %v191
    %v1454 = vpack.c.b16 %v1394, %v1390
    %v1455 = vpack.c.b16 %v1395, %v1391
    %v1456 = vpack.c.b16 %v1396, %v1392
    %v1457 = vpack.c.b16 %v1397, %v1393
    %v1458 = vpack.c.b16 %v1402, %v1398
    %v1459 = vpack.c.b16 %v1403, %v1399
    %v1460 = vpack.c.b16 %v1404, %v1400
    %v1461 = vpack.c.b16 %v1405, %v1401
    %v1462 = vpack.c.b16 %v1410, %v1406
    %v1463 = vpack.c.b16 %v1411, %v1407
    %v1464 = vpack.c.b16 %v1412, %v1408
    %v1465 = vpack.c.b16 %v1413, %v1409
    %v1466 = vpack.c.b16 %v1418, %v1414
    %v1467 = vpack.c.b16 %v1419, %v1415
    %v1468 = vpack.c.b16 %v1420, %v1416
    %v1469 = vpack.c.b16 %v1421, %v1417
    %v1470 = vpack.c.b16 %v1426, %v1422
    %v1471 = vpack.c.b16 %v1427, %v1423
    %v1472 = vpack.c.b16 %v1428, %v1424
    %v1473 = vpack.c.b16 %v1429, %v1425
    %v1474 = vpack.c.b16 %v1434, %v1430
    %v1475 = vpack.c.b16 %v1435, %v1431
    %v1476 = vpack.c.b16 %v1436, %v1432
    %v1477 = vpack.c.b16 %v1437, %v1433
    %v1478 = vpack.c.b16 %v1442, %v1438
    %v1479 = vpack.c.b16 %v1443, %v1439
    %v1480 = vpack.c.b16 %v1444, %v1440
    %v1481 = vpack.c.b16 %v1445, %v1441
    %v1482 = vpack.c.b16 %v1450, %v1446
    %v1483 = vpack.c.b16 %v1451, %v1447
    %v1484 = vpack.c.b16 %v1452, %v1448
    %v1485 = vpack.c.b16 %v1453, %v1449
    %1518 = vmatprep.subr.bf16.mxu0 %v1483
    %1519 = vmatpush1.bf16.msra.mxu0 %v1482
    %1520 = vmatprep.subr.bf16.mxu0 %v1479
    %1521 = vmatpush1.bf16.msra.mxu0 %v1478
    %1522 = vmatprep.subr.bf16.mxu0 %v1475
    %1523 = vmatpush1.bf16.msra.mxu0 %v1474
    %1524 = vmatprep.subr.bf16.mxu0 %v1471
    %1525 = vmatpush1.bf16.msra.mxu0 %v1470
    %1526 = vmatprep.subr.bf16.mxu0 %v1467
    %1527 = vmatpush1.bf16.msra.mxu0 %v1466
    %1528 = vmatprep.subr.bf16.mxu0 %v1463
    %1529 = vmatpush1.bf16.msra.mxu0 %v1462
    %1530 = vmatprep.subr.bf16.mxu0 %v1459
    %1531 = vmatpush1.bf16.msra.mxu0 %v1458
    %1532 = vmatprep.subr.bf16.mxu0 %v1455
    %1533 = vmatpush1.bf16.msra.mxu0 %v1454
    %1534 = vmatprep.subr.bf16.mxu0 0
    %1535 = vmatpush2.bf16.msra.mxu0 0
    %1536 = vmatprep.subr.bf16.mxu0 0
    %1537 = vmatpush2.bf16.msra.mxu0 0
    %1538 = vmatprep.subr.bf16.mxu0 0
    %1539 = vmatpush2.bf16.msra.mxu0 0
    %1540 = vmatprep.subr.bf16.mxu0 0
    %1541 = vmatpush2.bf16.msra.mxu0 0
    %1542 = vmatprep.subr.bf16.mxu0 0
    %1543 = vmatpush2.bf16.msra.mxu0 0
    %1544 = vmatprep.subr.bf16.mxu0 0
    %1545 = vmatpush2.bf16.msra.mxu0 0
    %1546 = vmatprep.subr.bf16.mxu0 0
    %1547 = vmatpush2.bf16.msra.mxu0 0
    %1548 = vmatprep.subr.bf16.mxu0 0
    %1549 = vmatpush2.bf16.msra.mxu0 0
    %1550 = vmatprep.mubr.bf16.mxu0 0
    %1551 = vmatmul.mubr.bf16.gmra.mxu0 %v1357
    %v1552 = vpop.f32.mrf.mxu0
    %v1553 = vadd.f32 0.0, %v1552
    %v1554 = vpop.f32.mrf.mxu0
    %v1555 = vadd.f32 0.0, %v1554
    %v1556 = vpop.f32.mrf.mxu0
    %v1557 = vpop.f32.mrf.mxu0
    %1558 = vdwg.mxu0
    %1559 = vmatprep.subr.bf16.mxu0 %v1485
    %1560 = vmatpush1.bf16.msra.mxu0 %v1484
    %1561 = vmatprep.subr.bf16.mxu0 %v1481
    %1562 = vmatpush1.bf16.msra.mxu0 %v1480
    %1563 = vmatprep.subr.bf16.mxu0 %v1477
    %1564 = vmatpush1.bf16.msra.mxu0 %v1476
    %1565 = vmatprep.subr.bf16.mxu0 %v1473
    %1566 = vmatpush1.bf16.msra.mxu0 %v1472
    %1567 = vmatprep.subr.bf16.mxu0 %v1469
    %1568 = vmatpush1.bf16.msra.mxu0 %v1468
    %1569 = vmatprep.subr.bf16.mxu0 %v1465
    %1570 = vmatpush1.bf16.msra.mxu0 %v1464
    %1571 = vmatprep.subr.bf16.mxu0 %v1461
    %1572 = vmatpush1.bf16.msra.mxu0 %v1460
    %1573 = vmatprep.subr.bf16.mxu0 %v1457
    %1574 = vmatpush1.bf16.msra.mxu0 %v1456
    %1575 = vmatprep.subr.bf16.mxu0 0
    %1576 = vmatpush2.bf16.msra.mxu0 0
    %1577 = vmatprep.subr.bf16.mxu0 0
    %1578 = vmatpush2.bf16.msra.mxu0 0
    %1579 = vmatprep.subr.bf16.mxu0 0
    %1580 = vmatpush2.bf16.msra.mxu0 0
    %1581 = vmatprep.subr.bf16.mxu0 0
    %1582 = vmatpush2.bf16.msra.mxu0 0
    %1583 = vmatprep.subr.bf16.mxu0 0
    %1584 = vmatpush2.bf16.msra.mxu0 0
    %1585 = vmatprep.subr.bf16.mxu0 0
    %1586 = vmatpush2.bf16.msra.mxu0 0
    %1587 = vmatprep.subr.bf16.mxu0 0
    %1588 = vmatpush2.bf16.msra.mxu0 0
    %1589 = vmatprep.subr.bf16.mxu0 0
    %1590 = vmatpush2.bf16.msra.mxu0 0
    %1591 = vmatprep.mubr.bf16.mxu0 0
    %1592 = vmatmul.mubr.bf16.gmra.mxu0 %v1357
    %v1593 = vpop.f32.mrf.mxu0
    %v1594 = vadd.f32 0.0, %v1593
    %v1595 = vpop.f32.mrf.mxu0
    %v1596 = vadd.f32 0.0, %v1595
    %v1597 = vpop.f32.mrf.mxu0
    %v1598 = vpop.f32.mrf.mxu0
    %1599 = vdwg.mxu0
    %v1600 = vadd.f32 %v1353, %v1553
    %v1601 = vadd.f32 %v1354, %v1555
    %v1602 = vadd.f32 %v1355, %v1594
    %v1603 = vadd.f32 %v1356, %v1596
    %v1604 = vxor.u32 %v1600, 2147483648
    %v1605 = vmul.f32 %v1604, 1.442695
    %v1606 = vpow.pop %v1605
    %v1607 = vadd.f32 %v1606, 1.0
    %v1608 = vrcp.pop %v1607
    %v1609 = vmul.f32 1.0, %v1608
    %v1610 = vxor.u32 %v1601, 2147483648
    %v1611 = vmul.f32 %v1610, 1.442695
    %v1612 = vpow.pop %v1611
    %v1613 = vadd.f32 %v1612, 1.0
    %v1614 = vrcp.pop %v1613
    %v1615 = vmul.f32 1.0, %v1614
    %v1616 = vtanh.pop %v1602
    %v1617 = vxor.u32 %v1603, 2147483648
    %v1618 = vmul.f32 %v1617, 1.442695
    %v1619 = vpow.pop %v1618
    %v1620 = vadd.f32 %v1619, 1.0
    %v1621 = vrcp.pop %v1620
    %v1622 = vmul.f32 1.0, %v1621
    %v1623 = vmul.f32 %v1615, %v1349
    %v1624 = vmul.f32 %v1609, %v1616
    %v1625 = vadd.f32 %v1623, %v1624
    %v1626 = vtanh.pop %v1625
    %v1627 = vmul.f32 %v1622, %v1626
    %1628 = vst [vmem:[#allocation5] sm:$0xff] %v1627
    %s1629 = smul.u32 1, 4
    %s1630 = smul.addr %s1629, 8
    %s1631 = scalar_lea.vmem [#allocation4], %s1630
    %v1632 = vld [vmem:[%s1631] sm:$0xff]
    %v1633 = vld [vmem:[%s1631 + $0x8] sm:$0xff]
    %v1634 = vld [vmem:[%s1631 + $0x10] sm:$0xff]
    %v1635 = vld [vmem:[%s1631 + $0x18] sm:$0xff]
    %v1636 = vpack.c.bf16 %v1627, %v1627
    %1637 = vmatprep.subr.bf16.mxu0 %v1483
    %1638 = vmatpush1.bf16.msra.mxu0 %v1482
    %1639 = vmatprep.subr.bf16.mxu0 %v1479
    %1640 = vmatpush1.bf16.msra.mxu0 %v1478
    %1641 = vmatprep.subr.bf16.mxu0 %v1475
    %1642 = vmatpush1.bf16.msra.mxu0 %v1474
    %1643 = vmatprep.subr.bf16.mxu0 %v1471
    %1644 = vmatpush1.bf16.msra.mxu0 %v1470
    %1645 = vmatprep.subr.bf16.mxu0 %v1467
    %1646 = vmatpush1.bf16.msra.mxu0 %v1466
    %1647 = vmatprep.subr.bf16.mxu0 %v1463
    %1648 = vmatpush1.bf16.msra.mxu0 %v1462
    %1649 = vmatprep.subr.bf16.mxu0 %v1459
    %1650 = vmatpush1.bf16.msra.mxu0 %v1458
    %1651 = vmatprep.subr.bf16.mxu0 %v1455
    %1652 = vmatpush1.bf16.msra.mxu0 %v1454
    %1653 = vmatprep.subr.bf16.mxu0 0
    %1654 = vmatpush2.bf16.msra.mxu0 0
    %1655 = vmatprep.subr.bf16.mxu0 0
    %1656 = vmatpush2.bf16.msra.mxu0 0
    %1657 = vmatprep.subr.bf16.mxu0 0
    %1658 = vmatpush2.bf16.msra.mxu0 0
    %1659 = vmatprep.subr.bf16.mxu0 0
    %1660 = vmatpush2.bf16.msra.mxu0 0
    %1661 = vmatprep.subr.bf16.mxu0 0
    %1662 = vmatpush2.bf16.msra.mxu0 0
    %1663 = vmatprep.subr.bf16.mxu0 0
    %1664 = vmatpush2.bf16.msra.mxu0 0
    %1665 = vmatprep.subr.bf16.mxu0 0
    %1666 = vmatpush2.bf16.msra.mxu0 0
    %1667 = vmatprep.subr.bf16.mxu0 0
    %1668 = vmatpush2.bf16.msra.mxu0 0
    %1669 = vmatprep.mubr.bf16.mxu0 0
    %1670 = vmatmul.mubr.bf16.gmra.mxu0 %v1636
    %v1671 = vpop.f32.mrf.mxu0
    %v1672 = vadd.f32 0.0, %v1671
    %v1673 = vpop.f32.mrf.mxu0
    %v1674 = vadd.f32 0.0, %v1673
    %v1675 = vpop.f32.mrf.mxu0
    %v1676 = vpop.f32.mrf.mxu0
    %1677 = vdwg.mxu0
    %1678 = vmatprep.subr.bf16.mxu0 %v1485
    %1679 = vmatpush1.bf16.msra.mxu0 %v1484
    %1680 = vmatprep.subr.bf16.mxu0 %v1481
    %1681 = vmatpush1.bf16.msra.mxu0 %v1480
    %1682 = vmatprep.subr.bf16.mxu0 %v1477
    %1683 = vmatpush1.bf16.msra.mxu0 %v1476
    %1684 = vmatprep.subr.bf16.mxu0 %v1473
    %1685 = vmatpush1.bf16.msra.mxu0 %v1472
    %1686 = vmatprep.subr.bf16.mxu0 %v1469
    %1687 = vmatpush1.bf16.msra.mxu0 %v1468
    %1688 = vmatprep.subr.bf16.mxu0 %v1465
    %1689 = vmatpush1.bf16.msra.mxu0 %v1464
    %1690 = vmatprep.subr.bf16.mxu0 %v1461
    %1691 = vmatpush1.bf16.msra.mxu0 %v1460
    %1692 = vmatprep.subr.bf16.mxu0 %v1457
    %1693 = vmatpush1.bf16.msra.mxu0 %v1456
    %1694 = vmatprep.subr.bf16.mxu0 0
    %1695 = vmatpush2.bf16.msra.mxu0 0
    %1696 = vmatprep.subr.bf16.mxu0 0
    %1697 = vmatpush2.bf16.msra.mxu0 0
    %1698 = vmatprep.subr.bf16.mxu0 0
    %1699 = vmatpush2.bf16.msra.mxu0 0
    %1700 = vmatprep.subr.bf16.mxu0 0
    %1701 = vmatpush2.bf16.msra.mxu0 0
    %1702 = vmatprep.subr.bf16.mxu0 0
    %1703 = vmatpush2.bf16.msra.mxu0 0
    %1704 = vmatprep.subr.bf16.mxu0 0
    %1705 = vmatpush2.bf16.msra.mxu0 0
    %1706 = vmatprep.subr.bf16.mxu0 0
    %1707 = vmatpush2.bf16.msra.mxu0 0
    %1708 = vmatprep.subr.bf16.mxu0 0
    %1709 = vmatpush2.bf16.msra.mxu0 0
    %1710 = vmatprep.mubr.bf16.mxu0 0
    %1711 = vmatmul.mubr.bf16.gmra.mxu0 %v1636
    %v1712 = vpop.f32.mrf.mxu0
    %v1713 = vadd.f32 0.0, %v1712
    %v1714 = vpop.f32.mrf.mxu0
    %v1715 = vadd.f32 0.0, %v1714
    %v1716 = vpop.f32.mrf.mxu0
    %v1717 = vpop.f32.mrf.mxu0
    %1718 = vdwg.mxu0
    %v1719 = vadd.f32 %v1632, %v1672
    %v1720 = vadd.f32 %v1633, %v1674
    %v1721 = vadd.f32 %v1634, %v1713
    %v1722 = vadd.f32 %v1635, %v1715
    %v1723 = vxor.u32 %v1719, 2147483648
    %v1724 = vmul.f32 %v1723, 1.442695
    %v1725 = vpow.pop %v1724
    %v1726 = vadd.f32 %v1725, 1.0
    %v1727 = vrcp.pop %v1726
    %v1728 = vmul.f32 1.0, %v1727
    %v1729 = vxor.u32 %v1720, 2147483648
    %v1730 = vmul.f32 %v1729, 1.442695
    %v1731 = vpow.pop %v1730
    %v1732 = vadd.f32 %v1731, 1.0
    %v1733 = vrcp.pop %v1732
    %v1734 = vmul.f32 1.0, %v1733
    %v1735 = vtanh.pop %v1721
    %v1736 = vxor.u32 %v1722, 2147483648
    %v1737 = vmul.f32 %v1736, 1.442695
    %v1738 = vpow.pop %v1737
    %v1739 = vadd.f32 %v1738, 1.0
    %v1740 = vrcp.pop %v1739
    %v1741 = vmul.f32 1.0, %v1740
    %v1742 = vmul.f32 %v1734, %v1625
    %v1743 = vmul.f32 %v1728, %v1735
    %v1744 = vadd.f32 %v1742, %v1743
    %v1745 = vtanh.pop %v1744
    %v1746 = vmul.f32 %v1741, %v1745
    %s1747 = scalar_lea.vmem [#allocation5], 8
    %1748 = vst [vmem:[%s1747] sm:$0xff] %v1746
    %s1749 = smul.u32 2, 4
    %s1750 = smul.addr %s1749, 8
    %s1751 = scalar_lea.vmem [#allocation4], %s1750
    %v1752 = vld [vmem:[%s1751] sm:$0xff]
    %v1753 = vld [vmem:[%s1751 + $0x8] sm:$0xff]
    %v1754 = vld [vmem:[%s1751 + $0x10] sm:$0xff]
    %v1755 = vld [vmem:[%s1751 + $0x18] sm:$0xff]
    %v1756 = vpack.c.bf16 %v1746, %v1746
    %1757 = vmatprep.subr.bf16.mxu0 %v1483
    %1758 = vmatpush1.bf16.msra.mxu0 %v1482
    %1759 = vmatprep.subr.bf16.mxu0 %v1479
    %1760 = vmatpush1.bf16.msra.mxu0 %v1478
    %1761 = vmatprep.subr.bf16.mxu0 %v1475
    %1762 = vmatpush1.bf16.msra.mxu0 %v1474
    %1763 = vmatprep.subr.bf16.mxu0 %v1471
    %1764 = vmatpush1.bf16.msra.mxu0 %v1470
    %1765 = vmatprep.subr.bf16.mxu0 %v1467
    %1766 = vmatpush1.bf16.msra.mxu0 %v1466
    %1767 = vmatprep.subr.bf16.mxu0 %v1463
    %1768 = vmatpush1.bf16.msra.mxu0 %v1462
    %1769 = vmatprep.subr.bf16.mxu0 %v1459
    %1770 = vmatpush1.bf16.msra.mxu0 %v1458
    %1771 = vmatprep.subr.bf16.mxu0 %v1455
    %1772 = vmatpush1.bf16.msra.mxu0 %v1454
    %1773 = vmatprep.subr.bf16.mxu0 0
    %1774 = vmatpush2.bf16.msra.mxu0 0
    %1775 = vmatprep.subr.bf16.mxu0 0
    %1776 = vmatpush2.bf16.msra.mxu0 0
    %1777 = vmatprep.subr.bf16.mxu0 0
    %1778 = vmatpush2.bf16.msra.mxu0 0
    %1779 = vmatprep.subr.bf16.mxu0 0
    %1780 = vmatpush2.bf16.msra.mxu0 0
    %1781 = vmatprep.subr.bf16.mxu0 0
    %1782 = vmatpush2.bf16.msra.mxu0 0
    %1783 = vmatprep.subr.bf16.mxu0 0
    %1784 = vmatpush2.bf16.msra.mxu0 0
    %1785 = vmatprep.subr.bf16.mxu0 0
    %1786 = vmatpush2.bf16.msra.mxu0 0
    %1787 = vmatprep.subr.bf16.mxu0 0
    %1788 = vmatpush2.bf16.msra.mxu0 0
    %1789 = vmatprep.mubr.bf16.mxu0 0
    %1790 = vmatmul.mubr.bf16.gmra.mxu0 %v1756
    %v1791 = vpop.f32.mrf.mxu0
    %v1792 = vadd.f32 0.0, %v1791
    %v1793 = vpop.f32.mrf.mxu0
    %v1794 = vadd.f32 0.0, %v1793
    %v1795 = vpop.f32.mrf.mxu0
    %v1796 = vpop.f32.mrf.mxu0
    %1797 = vdwg.mxu0
    %1798 = vmatprep.subr.bf16.mxu0 %v1485
    %1799 = vmatpush1.bf16.msra.mxu0 %v1484
    %1800 = vmatprep.subr.bf16.mxu0 %v1481
    %1801 = vmatpush1.bf16.msra.mxu0 %v1480
    %1802 = vmatprep.subr.bf16.mxu0 %v1477
    %1803 = vmatpush1.bf16.msra.mxu0 %v1476
    %1804 = vmatprep.subr.bf16.mxu0 %v1473
    %1805 = vmatpush1.bf16.msra.mxu0 %v1472
    %1806 = vmatprep.subr.bf16.mxu0 %v1469
    %1807 = vmatpush1.bf16.msra.mxu0 %v1468
    %1808 = vmatprep.subr.bf16.mxu0 %v1465
    %1809 = vmatpush1.bf16.msra.mxu0 %v1464
    %1810 = vmatprep.subr.bf16.mxu0 %v1461
    %1811 = vmatpush1.bf16.msra.mxu0 %v1460
    %1812 = vmatprep.subr.bf16.mxu0 %v1457
    %1813 = vmatpush1.bf16.msra.mxu0 %v1456
    %1814 = vmatprep.subr.bf16.mxu0 0
    %1815 = vmatpush2.bf16.msra.mxu0 0
    %1816 = vmatprep.subr.bf16.mxu0 0
    %1817 = vmatpush2.bf16.msra.mxu0 0
    %1818 = vmatprep.subr.bf16.mxu0 0
    %1819 = vmatpush2.bf16.msra.mxu0 0
    %1820 = vmatprep.subr.bf16.mxu0 0
    %1821 = vmatpush2.bf16.msra.mxu0 0
    %1822 = vmatprep.subr.bf16.mxu0 0
    %1823 = vmatpush2.bf16.msra.mxu0 0
    %1824 = vmatprep.subr.bf16.mxu0 0
    %1825 = vmatpush2.bf16.msra.mxu0 0
    %1826 = vmatprep.subr.bf16.mxu0 0
    %1827 = vmatpush2.bf16.msra.mxu0 0
    %1828 = vmatprep.subr.bf16.mxu0 0
    %1829 = vmatpush2.bf16.msra.mxu0 0
    %1830 = vmatprep.mubr.bf16.mxu0 0
    %1831 = vmatmul.mubr.bf16.gmra.mxu0 %v1756
    %v1832 = vpop.f32.mrf.mxu0
    %v1833 = vadd.f32 0.0, %v1832
    %v1834 = vpop.f32.mrf.mxu0
    %v1835 = vadd.f32 0.0, %v1834
    %v1836 = vpop.f32.mrf.mxu0
    %v1837 = vpop.f32.mrf.mxu0
    %1838 = vdwg.mxu0
    %v1839 = vadd.f32 %v1752, %v1792
    %v1840 = vadd.f32 %v1753, %v1794
    %v1841 = vadd.f32 %v1754, %v1833
    %v1842 = vadd.f32 %v1755, %v1835
    %v1843 = vxor.u32 %v1839, 2147483648
    %v1844 = vmul.f32 %v1843, 1.442695
    %v1845 = vpow.pop %v1844
    %v1846 = vadd.f32 %v1845, 1.0
    %v1847 = vrcp.pop %v1846
    %v1848 = vmul.f32 1.0, %v1847
    %v1849 = vxor.u32 %v1840, 2147483648
    %v1850 = vmul.f32 %v1849, 1.442695
    %v1851 = vpow.pop %v1850
    %v1852 = vadd.f32 %v1851, 1.0
    %v1853 = vrcp.pop %v1852
    %v1854 = vmul.f32 1.0, %v1853
    %v1855 = vtanh.pop %v1841
    %v1856 = vxor.u32 %v1842, 2147483648
    %v1857 = vmul.f32 %v1856, 1.442695
    %v1858 = vpow.pop %v1857
    %v1859 = vadd.f32 %v1858, 1.0
    %v1860 = vrcp.pop %v1859
    %v1861 = vmul.f32 1.0, %v1860
    %v1862 = vmul.f32 %v1854, %v1744
    %v1863 = vmul.f32 %v1848, %v1855
    %v1864 = vadd.f32 %v1862, %v1863
    %v1865 = vtanh.pop %v1864
    %v1866 = vmul.f32 %v1861, %v1865
    %s1867 = scalar_lea.vmem [#allocation5], 16
    %1868 = vst [vmem:[%s1867] sm:$0xff] %v1866
    %s1869 = smul.u32 3, 4
    %s1870 = smul.addr %s1869, 8
    %s1871 = scalar_lea.vmem [#allocation4], %s1870
    %v1872 = vld [vmem:[%s1871] sm:$0xff]
    %v1873 = vld [vmem:[%s1871 + $0x8] sm:$0xff]
    %v1874 = vld [vmem:[%s1871 + $0x10] sm:$0xff]
    %v1875 = vld [vmem:[%s1871 + $0x18] sm:$0xff]
    %v1876 = vpack.c.bf16 %v1866, %v1866
    %1877 = vmatprep.subr.bf16.mxu0 %v1483
    %1878 = vmatpush1.bf16.msra.mxu0 %v1482
    %1879 = vmatprep.subr.bf16.mxu0 %v1479
    %1880 = vmatpush1.bf16.msra.mxu0 %v1478
    %1881 = vmatprep.subr.bf16.mxu0 %v1475
    %1882 = vmatpush1.bf16.msra.mxu0 %v1474
    %1883 = vmatprep.subr.bf16.mxu0 %v1471
    %1884 = vmatpush1.bf16.msra.mxu0 %v1470
    %1885 = vmatprep.subr.bf16.mxu0 %v1467
    %1886 = vmatpush1.bf16.msra.mxu0 %v1466
    %1887 = vmatprep.subr.bf16.mxu0 %v1463
    %1888 = vmatpush1.bf16.msra.mxu0 %v1462
    %1889 = vmatprep.subr.bf16.mxu0 %v1459
    %1890 = vmatpush1.bf16.msra.mxu0 %v1458
    %1891 = vmatprep.subr.bf16.mxu0 %v1455
    %1892 = vmatpush1.bf16.msra.mxu0 %v1454
    %1893 = vmatprep.subr.bf16.mxu0 0
    %1894 = vmatpush2.bf16.msra.mxu0 0
    %1895 = vmatprep.subr.bf16.mxu0 0
    %1896 = vmatpush2.bf16.msra.mxu0 0
    %1897 = vmatprep.subr.bf16.mxu0 0
    %1898 = vmatpush2.bf16.msra.mxu0 0
    %1899 = vmatprep.subr.bf16.mxu0 0
    %1900 = vmatpush2.bf16.msra.mxu0 0
    %1901 = vmatprep.subr.bf16.mxu0 0
    %1902 = vmatpush2.bf16.msra.mxu0 0
    %1903 = vmatprep.subr.bf16.mxu0 0
    %1904 = vmatpush2.bf16.msra.mxu0 0
    %1905 = vmatprep.subr.bf16.mxu0 0
    %1906 = vmatpush2.bf16.msra.mxu0 0
    %1907 = vmatprep.subr.bf16.mxu0 0
    %1908 = vmatpush2.bf16.msra.mxu0 0
    %1909 = vmatprep.mubr.bf16.mxu0 0
    %1910 = vmatmul.mubr.bf16.gmra.mxu0 %v1876
    %v1911 = vpop.f32.mrf.mxu0
    %v1912 = vadd.f32 0.0, %v1911
    %v1913 = vpop.f32.mrf.mxu0
    %v1914 = vadd.f32 0.0, %v1913
    %v1915 = vpop.f32.mrf.mxu0
    %v1916 = vpop.f32.mrf.mxu0
    %1917 = vdwg.mxu0
    %1918 = vmatprep.subr.bf16.mxu0 %v1485
    %1919 = vmatpush1.bf16.msra.mxu0 %v1484
    %1920 = vmatprep.subr.bf16.mxu0 %v1481
    %1921 = vmatpush1.bf16.msra.mxu0 %v1480
    %1922 = vmatprep.subr.bf16.mxu0 %v1477
    %1923 = vmatpush1.bf16.msra.mxu0 %v1476
    %1924 = vmatprep.subr.bf16.mxu0 %v1473
    %1925 = vmatpush1.bf16.msra.mxu0 %v1472
    %1926 = vmatprep.subr.bf16.mxu0 %v1469
    %1927 = vmatpush1.bf16.msra.mxu0 %v1468
    %1928 = vmatprep.subr.bf16.mxu0 %v1465
    %1929 = vmatpush1.bf16.msra.mxu0 %v1464
    %1930 = vmatprep.subr.bf16.mxu0 %v1461
    %1931 = vmatpush1.bf16.msra.mxu0 %v1460
    %1932 = vmatprep.subr.bf16.mxu0 %v1457
    %1933 = vmatpush1.bf16.msra.mxu0 %v1456
    %1934 = vmatprep.subr.bf16.mxu0 0
    %1935 = vmatpush2.bf16.msra.mxu0 0
    %1936 = vmatprep.subr.bf16.mxu0 0
    %1937 = vmatpush2.bf16.msra.mxu0 0
    %1938 = vmatprep.subr.bf16.mxu0 0
    %1939 = vmatpush2.bf16.msra.mxu0 0
    %1940 = vmatprep.subr.bf16.mxu0 0
    %1941 = vmatpush2.bf16.msra.mxu0 0
    %1942 = vmatprep.subr.bf16.mxu0 0
    %1943 = vmatpush2.bf16.msra.mxu0 0
    %1944 = vmatprep.subr.bf16.mxu0 0
    %1945 = vmatpush2.bf16.msra.mxu0 0
    %1946 = vmatprep.subr.bf16.mxu0 0
    %1947 = vmatpush2.bf16.msra.mxu0 0
    %1948 = vmatprep.subr.bf16.mxu0 0
    %1949 = vmatpush2.bf16.msra.mxu0 0
    %1950 = vmatprep.mubr.bf16.mxu0 0
    %1951 = vmatmul.mubr.bf16.gmra.mxu0 %v1876
    %v1952 = vpop.f32.mrf.mxu0
    %v1953 = vadd.f32 0.0, %v1952
    %v1954 = vpop.f32.mrf.mxu0
    %v1955 = vadd.f32 0.0, %v1954
    %v1956 = vpop.f32.mrf.mxu0
    %v1957 = vpop.f32.mrf.mxu0
    %1958 = vdwg.mxu0
    %v1959 = vadd.f32 %v1872, %v1912
    %v1960 = vadd.f32 %v1873, %v1914
    %v1961 = vadd.f32 %v1874, %v1953
    %v1962 = vadd.f32 %v1875, %v1955
    %v1963 = vxor.u32 %v1959, 2147483648
    %v1964 = vmul.f32 %v1963, 1.442695
    %v1965 = vpow.pop %v1964
    %v1966 = vadd.f32 %v1965, 1.0
    %v1967 = vrcp.pop %v1966
    %v1968 = vmul.f32 1.0, %v1967
    %v1969 = vxor.u32 %v1960, 2147483648
    %v1970 = vmul.f32 %v1969, 1.442695
    %v1971 = vpow.pop %v1970
    %v1972 = vadd.f32 %v1971, 1.0
    %v1973 = vrcp.pop %v1972
    %v1974 = vmul.f32 1.0, %v1973
    %v1975 = vtanh.pop %v1961
    %v1976 = vxor.u32 %v1962, 2147483648
    %v1977 = vmul.f32 %v1976, 1.442695
    %v1978 = vpow.pop %v1977
    %v1979 = vadd.f32 %v1978, 1.0
    %v1980 = vrcp.pop %v1979
    %v1981 = vmul.f32 1.0, %v1980
    %v1982 = vmul.f32 %v1974, %v1864
    %v1983 = vmul.f32 %v1968, %v1975
    %v1984 = vadd.f32 %v1982, %v1983
    %v1985 = vtanh.pop %v1984
    %v1986 = vmul.f32 %v1981, %v1985
    %s1987 = scalar_lea.vmem [#allocation5], 24
    %1988 = vst [vmem:[%s1987] sm:$0xff] %v1986
    %s1989 = smul.u32 4, 4
    %s1990 = smul.addr %s1989, 8
    %s1991 = scalar_lea.vmem [#allocation4], %s1990
    %v1992 = vld [vmem:[%s1991] sm:$0xff]
    %v1993 = vld [vmem:[%s1991 + $0x8] sm:$0xff]
    %v1994 = vld [vmem:[%s1991 + $0x10] sm:$0xff]
    %v1995 = vld [vmem:[%s1991 + $0x18] sm:$0xff]
    %v1996 = vpack.c.bf16 %v1986, %v1986
    %1997 = vmatprep.subr.bf16.mxu0 %v1483
    %1998 = vmatpush1.bf16.msra.mxu0 %v1482
    %1999 = vmatprep.subr.bf16.mxu0 %v1479
    %2000 = vmatpush1.bf16.msra.mxu0 %v1478
    %2001 = vmatprep.subr.bf16.mxu0 %v1475
    %2002 = vmatpush1.bf16.msra.mxu0 %v1474
    %2003 = vmatprep.subr.bf16.mxu0 %v1471
    %2004 = vmatpush1.bf16.msra.mxu0 %v1470
    %2005 = vmatprep.subr.bf16.mxu0 %v1467
    %2006 = vmatpush1.bf16.msra.mxu0 %v1466
    %2007 = vmatprep.subr.bf16.mxu0 %v1463
    %2008 = vmatpush1.bf16.msra.mxu0 %v1462
    %2009 = vmatprep.subr.bf16.mxu0 %v1459
    %2010 = vmatpush1.bf16.msra.mxu0 %v1458
    %2011 = vmatprep.subr.bf16.mxu0 %v1455
    %2012 = vmatpush1.bf16.msra.mxu0 %v1454
    %2013 = vmatprep.subr.bf16.mxu0 0
    %2014 = vmatpush2.bf16.msra.mxu0 0
    %2015 = vmatprep.subr.bf16.mxu0 0
    %2016 = vmatpush2.bf16.msra.mxu0 0
    %2017 = vmatprep.subr.bf16.mxu0 0
    %2018 = vmatpush2.bf16.msra.mxu0 0
    %2019 = vmatprep.subr.bf16.mxu0 0
    %2020 = vmatpush2.bf16.msra.mxu0 0
    %2021 = vmatprep.subr.bf16.mxu0 0
    %2022 = vmatpush2.bf16.msra.mxu0 0
    %2023 = vmatprep.subr.bf16.mxu0 0
    %2024 = vmatpush2.bf16.msra.mxu0 0
    %2025 = vmatprep.subr.bf16.mxu0 0
    %2026 = vmatpush2.bf16.msra.mxu0 0
    %2027 = vmatprep.subr.bf16.mxu0 0
    %2028 = vmatpush2.bf16.msra.mxu0 0
    %2029 = vmatprep.mubr.bf16.mxu0 0
    %2030 = vmatmul.mubr.bf16.gmra.mxu0 %v1996
    %v2031 = vpop.f32.mrf.mxu0
    %v2032 = vadd.f32 0.0, %v2031
    %v2033 = vpop.f32.mrf.mxu0
    %v2034 = vadd.f32 0.0, %v2033
    %v2035 = vpop.f32.mrf.mxu0
    %v2036 = vpop.f32.mrf.mxu0
    %2037 = vdwg.mxu0
    %2038 = vmatprep.subr.bf16.mxu0 %v1485
    %2039 = vmatpush1.bf16.msra.mxu0 %v1484
    %2040 = vmatprep.subr.bf16.mxu0 %v1481
    %2041 = vmatpush1.bf16.msra.mxu0 %v1480
    %2042 = vmatprep.subr.bf16.mxu0 %v1477
    %2043 = vmatpush1.bf16.msra.mxu0 %v1476
    %2044 = vmatprep.subr.bf16.mxu0 %v1473
    %2045 = vmatpush1.bf16.msra.mxu0 %v1472
    %2046 = vmatprep.subr.bf16.mxu0 %v1469
    %2047 = vmatpush1.bf16.msra.mxu0 %v1468
    %2048 = vmatprep.subr.bf16.mxu0 %v1465
    %2049 = vmatpush1.bf16.msra.mxu0 %v1464
    %2050 = vmatprep.subr.bf16.mxu0 %v1461
    %2051 = vmatpush1.bf16.msra.mxu0 %v1460
    %2052 = vmatprep.subr.bf16.mxu0 %v1457
    %2053 = vmatpush1.bf16.msra.mxu0 %v1456
    %2054 = vmatprep.subr.bf16.mxu0 0
    %2055 = vmatpush2.bf16.msra.mxu0 0
    %2056 = vmatprep.subr.bf16.mxu0 0
    %2057 = vmatpush2.bf16.msra.mxu0 0
    %2058 = vmatprep.subr.bf16.mxu0 0
    %2059 = vmatpush2.bf16.msra.mxu0 0
    %2060 = vmatprep.subr.bf16.mxu0 0
    %2061 = vmatpush2.bf16.msra.mxu0 0
    %2062 = vmatprep.subr.bf16.mxu0 0
    %2063 = vmatpush2.bf16.msra.mxu0 0
    %2064 = vmatprep.subr.bf16.mxu0 0
    %2065 = vmatpush2.bf16.msra.mxu0 0
    %2066 = vmatprep.subr.bf16.mxu0 0
    %2067 = vmatpush2.bf16.msra.mxu0 0
    %2068 = vmatprep.subr.bf16.mxu0 0
    %2069 = vmatpush2.bf16.msra.mxu0 0
    %2070 = vmatprep.mubr.bf16.mxu0 0
    %2071 = vmatmul.mubr.bf16.gmra.mxu0 %v1996
    %v2072 = vpop.f32.mrf.mxu0
    %v2073 = vadd.f32 0.0, %v2072
    %v2074 = vpop.f32.mrf.mxu0
    %v2075 = vadd.f32 0.0, %v2074
    %v2076 = vpop.f32.mrf.mxu0
    %v2077 = vpop.f32.mrf.mxu0
    %2078 = vdwg.mxu0
    %v2079 = vadd.f32 %v1992, %v2032
    %v2080 = vadd.f32 %v1993, %v2034
    %v2081 = vadd.f32 %v1994, %v2073
    %v2082 = vadd.f32 %v1995, %v2075
    %v2083 = vxor.u32 %v2079, 2147483648
    %v2084 = vmul.f32 %v2083, 1.442695
    %v2085 = vpow.pop %v2084
    %v2086 = vadd.f32 %v2085, 1.0
    %v2087 = vrcp.pop %v2086
    %v2088 = vmul.f32 1.0, %v2087
    %v2089 = vxor.u32 %v2080, 2147483648
    %v2090 = vmul.f32 %v2089, 1.442695
    %v2091 = vpow.pop %v2090
    %v2092 = vadd.f32 %v2091, 1.0
    %v2093 = vrcp.pop %v2092
    %v2094 = vmul.f32 1.0, %v2093
    %v2095 = vtanh.pop %v2081
    %v2096 = vxor.u32 %v2082, 2147483648
    %v2097 = vmul.f32 %v2096, 1.442695
    %v2098 = vpow.pop %v2097
    %v2099 = vadd.f32 %v2098, 1.0
    %v2100 = vrcp.pop %v2099
    %v2101 = vmul.f32 1.0, %v2100
    %v2102 = vmul.f32 %v2094, %v1984
    %v2103 = vmul.f32 %v2088, %v2095
    %v2104 = vadd.f32 %v2102, %v2103
    %v2105 = vtanh.pop %v2104
    %v2106 = vmul.f32 %v2101, %v2105
    %s2107 = scalar_lea.vmem [#allocation5], 32
    %2108 = vst [vmem:[%s2107] sm:$0xff] %v2106
    %s2109 = smul.u32 5, 4
    %s2110 = smul.addr %s2109, 8
    %s2111 = scalar_lea.vmem [#allocation4], %s2110
    %v2112 = vld [vmem:[%s2111] sm:$0xff]
    %v2113 = vld [vmem:[%s2111 + $0x8] sm:$0xff]
    %v2114 = vld [vmem:[%s2111 + $0x10] sm:$0xff]
    %v2115 = vld [vmem:[%s2111 + $0x18] sm:$0xff]
    %v2116 = vpack.c.bf16 %v2106, %v2106
    %2117 = vmatprep.subr.bf16.mxu0 %v1483
    %2118 = vmatpush1.bf16.msra.mxu0 %v1482
    %2119 = vmatprep.subr.bf16.mxu0 %v1479
    %2120 = vmatpush1.bf16.msra.mxu0 %v1478
    %2121 = vmatprep.subr.bf16.mxu0 %v1475
    %2122 = vmatpush1.bf16.msra.mxu0 %v1474
    %2123 = vmatprep.subr.bf16.mxu0 %v1471
    %2124 = vmatpush1.bf16.msra.mxu0 %v1470
    %2125 = vmatprep.subr.bf16.mxu0 %v1467
    %2126 = vmatpush1.bf16.msra.mxu0 %v1466
    %2127 = vmatprep.subr.bf16.mxu0 %v1463
    %2128 = vmatpush1.bf16.msra.mxu0 %v1462
    %2129 = vmatprep.subr.bf16.mxu0 %v1459
    %2130 = vmatpush1.bf16.msra.mxu0 %v1458
    %2131 = vmatprep.subr.bf16.mxu0 %v1455
    %2132 = vmatpush1.bf16.msra.mxu0 %v1454
    %2133 = vmatprep.subr.bf16.mxu0 0
    %2134 = vmatpush2.bf16.msra.mxu0 0
    %2135 = vmatprep.subr.bf16.mxu0 0
    %2136 = vmatpush2.bf16.msra.mxu0 0
    %2137 = vmatprep.subr.bf16.mxu0 0
    %2138 = vmatpush2.bf16.msra.mxu0 0
    %2139 = vmatprep.subr.bf16.mxu0 0
    %2140 = vmatpush2.bf16.msra.mxu0 0
    %2141 = vmatprep.subr.bf16.mxu0 0
    %2142 = vmatpush2.bf16.msra.mxu0 0
    %2143 = vmatprep.subr.bf16.mxu0 0
    %2144 = vmatpush2.bf16.msra.mxu0 0
    %2145 = vmatprep.subr.bf16.mxu0 0
    %2146 = vmatpush2.bf16.msra.mxu0 0
    %2147 = vmatprep.subr.bf16.mxu0 0
    %2148 = vmatpush2.bf16.msra.mxu0 0
    %2149 = vmatprep.mubr.bf16.mxu0 0
    %2150 = vmatmul.mubr.bf16.gmra.mxu0 %v2116
    %v2151 = vpop.f32.mrf.mxu0
    %v2152 = vadd.f32 0.0, %v2151
    %v2153 = vpop.f32.mrf.mxu0
    %v2154 = vadd.f32 0.0, %v2153
    %v2155 = vpop.f32.mrf.mxu0
    %v2156 = vpop.f32.mrf.mxu0
    %2157 = vdwg.mxu0
    %2158 = vmatprep.subr.bf16.mxu0 %v1485
    %2159 = vmatpush1.bf16.msra.mxu0 %v1484
    %2160 = vmatprep.subr.bf16.mxu0 %v1481
    %2161 = vmatpush1.bf16.msra.mxu0 %v1480
    %2162 = vmatprep.subr.bf16.mxu0 %v1477
    %2163 = vmatpush1.bf16.msra.mxu0 %v1476
    %2164 = vmatprep.subr.bf16.mxu0 %v1473
    %2165 = vmatpush1.bf16.msra.mxu0 %v1472
    %2166 = vmatprep.subr.bf16.mxu0 %v1469
    %2167 = vmatpush1.bf16.msra.mxu0 %v1468
    %2168 = vmatprep.subr.bf16.mxu0 %v1465
    %2169 = vmatpush1.bf16.msra.mxu0 %v1464
    %2170 = vmatprep.subr.bf16.mxu0 %v1461
    %2171 = vmatpush1.bf16.msra.mxu0 %v1460
    %2172 = vmatprep.subr.bf16.mxu0 %v1457
    %2173 = vmatpush1.bf16.msra.mxu0 %v1456
    %2174 = vmatprep.subr.bf16.mxu0 0
    %2175 = vmatpush2.bf16.msra.mxu0 0
    %2176 = vmatprep.subr.bf16.mxu0 0
    %2177 = vmatpush2.bf16.msra.mxu0 0
    %2178 = vmatprep.subr.bf16.mxu0 0
    %2179 = vmatpush2.bf16.msra.mxu0 0
    %2180 = vmatprep.subr.bf16.mxu0 0
    %2181 = vmatpush2.bf16.msra.mxu0 0
    %2182 = vmatprep.subr.bf16.mxu0 0
    %2183 = vmatpush2.bf16.msra.mxu0 0
    %2184 = vmatprep.subr.bf16.mxu0 0
    %2185 = vmatpush2.bf16.msra.mxu0 0
    %2186 = vmatprep.subr.bf16.mxu0 0
    %2187 = vmatpush2.bf16.msra.mxu0 0
    %2188 = vmatprep.subr.bf16.mxu0 0
    %2189 = vmatpush2.bf16.msra.mxu0 0
    %2190 = vmatprep.mubr.bf16.mxu0 0
    %2191 = vmatmul.mubr.bf16.gmra.mxu0 %v2116
    %v2192 = vpop.f32.mrf.mxu0
    %v2193 = vadd.f32 0.0, %v2192
    %v2194 = vpop.f32.mrf.mxu0
    %v2195 = vadd.f32 0.0, %v2194
    %v2196 = vpop.f32.mrf.mxu0
    %v2197 = vpop.f32.mrf.mxu0
    %2198 = vdwg.mxu0
    %v2199 = vadd.f32 %v2112, %v2152
    %v2200 = vadd.f32 %v2113, %v2154
    %v2201 = vadd.f32 %v2114, %v2193
    %v2202 = vadd.f32 %v2115, %v2195
    %v2203 = vxor.u32 %v2199, 2147483648
    %v2204 = vmul.f32 %v2203, 1.442695
    %v2205 = vpow.pop %v2204
    %v2206 = vadd.f32 %v2205, 1.0
    %v2207 = vrcp.pop %v2206
    %v2208 = vmul.f32 1.0, %v2207
    %v2209 = vxor.u32 %v2200, 2147483648
    %v2210 = vmul.f32 %v2209, 1.442695
    %v2211 = vpow.pop %v2210
    %v2212 = vadd.f32 %v2211, 1.0
    %v2213 = vrcp.pop %v2212
    %v2214 = vmul.f32 1.0, %v2213
    %v2215 = vtanh.pop %v2201
    %v2216 = vxor.u32 %v2202, 2147483648
    %v2217 = vmul.f32 %v2216, 1.442695
    %v2218 = vpow.pop %v2217
    %v2219 = vadd.f32 %v2218, 1.0
    %v2220 = vrcp.pop %v2219
    %v2221 = vmul.f32 1.0, %v2220
    %v2222 = vmul.f32 %v2214, %v2104
    %v2223 = vmul.f32 %v2208, %v2215
    %v2224 = vadd.f32 %v2222, %v2223
    %v2225 = vtanh.pop %v2224
    %v2226 = vmul.f32 %v2221, %v2225
    %s2227 = scalar_lea.vmem [#allocation5], 40
    %2228 = vst [vmem:[%s2227] sm:$0xff] %v2226
    %s2229 = smul.u32 6, 4
    %s2230 = smul.addr %s2229, 8
    %s2231 = scalar_lea.vmem [#allocation4], %s2230
    %v2232 = vld [vmem:[%s2231] sm:$0xff]
    %v2233 = vld [vmem:[%s2231 + $0x8] sm:$0xff]
    %v2234 = vld [vmem:[%s2231 + $0x10] sm:$0xff]
    %v2235 = vld [vmem:[%s2231 + $0x18] sm:$0xff]
    %v2236 = vpack.c.bf16 %v2226, %v2226
    %2237 = vmatprep.subr.bf16.mxu0 %v1483
    %2238 = vmatpush1.bf16.msra.mxu0 %v1482
    %2239 = vmatprep.subr.bf16.mxu0 %v1479
    %2240 = vmatpush1.bf16.msra.mxu0 %v1478
    %2241 = vmatprep.subr.bf16.mxu0 %v1475
    %2242 = vmatpush1.bf16.msra.mxu0 %v1474
    %2243 = vmatprep.subr.bf16.mxu0 %v1471
    %2244 = vmatpush1.bf16.msra.mxu0 %v1470
    %2245 = vmatprep.subr.bf16.mxu0 %v1467
    %2246 = vmatpush1.bf16.msra.mxu0 %v1466
    %2247 = vmatprep.subr.bf16.mxu0 %v1463
    %2248 = vmatpush1.bf16.msra.mxu0 %v1462
    %2249 = vmatprep.subr.bf16.mxu0 %v1459
    %2250 = vmatpush1.bf16.msra.mxu0 %v1458
    %2251 = vmatprep.subr.bf16.mxu0 %v1455
    %2252 = vmatpush1.bf16.msra.mxu0 %v1454
    %2253 = vmatprep.subr.bf16.mxu0 0
    %2254 = vmatpush2.bf16.msra.mxu0 0
    %2255 = vmatprep.subr.bf16.mxu0 0
    %2256 = vmatpush2.bf16.msra.mxu0 0
    %2257 = vmatprep.subr.bf16.mxu0 0
    %2258 = vmatpush2.bf16.msra.mxu0 0
    %2259 = vmatprep.subr.bf16.mxu0 0
    %2260 = vmatpush2.bf16.msra.mxu0 0
    %2261 = vmatprep.subr.bf16.mxu0 0
    %2262 = vmatpush2.bf16.msra.mxu0 0
    %2263 = vmatprep.subr.bf16.mxu0 0
    %2264 = vmatpush2.bf16.msra.mxu0 0
    %2265 = vmatprep.subr.bf16.mxu0 0
    %2266 = vmatpush2.bf16.msra.mxu0 0
    %2267 = vmatprep.subr.bf16.mxu0 0
    %2268 = vmatpush2.bf16.msra.mxu0 0
    %2269 = vmatprep.mubr.bf16.mxu0 0
    %2270 = vmatmul.mubr.bf16.gmra.mxu0 %v2236
    %v2271 = vpop.f32.mrf.mxu0
    %v2272 = vadd.f32 0.0, %v2271
    %v2273 = vpop.f32.mrf.mxu0
    %v2274 = vadd.f32 0.0, %v2273
    %v2275 = vpop.f32.mrf.mxu0
    %v2276 = vpop.f32.mrf.mxu0
    %2277 = vdwg.mxu0
    %2278 = vmatprep.subr.bf16.mxu0 %v1485
    %2279 = vmatpush1.bf16.msra.mxu0 %v1484
    %2280 = vmatprep.subr.bf16.mxu0 %v1481
    %2281 = vmatpush1.bf16.msra.mxu0 %v1480
    %2282 = vmatprep.subr.bf16.mxu0 %v1477
    %2283 = vmatpush1.bf16.msra.mxu0 %v1476
    %2284 = vmatprep.subr.bf16.mxu0 %v1473
    %2285 = vmatpush1.bf16.msra.mxu0 %v1472
    %2286 = vmatprep.subr.bf16.mxu0 %v1469
    %2287 = vmatpush1.bf16.msra.mxu0 %v1468
    %2288 = vmatprep.subr.bf16.mxu0 %v1465
    %2289 = vmatpush1.bf16.msra.mxu0 %v1464
    %2290 = vmatprep.subr.bf16.mxu0 %v1461
    %2291 = vmatpush1.bf16.msra.mxu0 %v1460
    %2292 = vmatprep.subr.bf16.mxu0 %v1457
    %2293 = vmatpush1.bf16.msra.mxu0 %v1456
    %2294 = vmatprep.subr.bf16.mxu0 0
    %2295 = vmatpush2.bf16.msra.mxu0 0
    %2296 = vmatprep.subr.bf16.mxu0 0
    %2297 = vmatpush2.bf16.msra.mxu0 0
    %2298 = vmatprep.subr.bf16.mxu0 0
    %2299 = vmatpush2.bf16.msra.mxu0 0
    %2300 = vmatprep.subr.bf16.mxu0 0
    %2301 = vmatpush2.bf16.msra.mxu0 0
    %2302 = vmatprep.subr.bf16.mxu0 0
    %2303 = vmatpush2.bf16.msra.mxu0 0
    %2304 = vmatprep.subr.bf16.mxu0 0
    %2305 = vmatpush2.bf16.msra.mxu0 0
    %2306 = vmatprep.subr.bf16.mxu0 0
    %2307 = vmatpush2.bf16.msra.mxu0 0
    %2308 = vmatprep.subr.bf16.mxu0 0
    %2309 = vmatpush2.bf16.msra.mxu0 0
    %2310 = vmatprep.mubr.bf16.mxu0 0
    %2311 = vmatmul.mubr.bf16.gmra.mxu0 %v2236
    %v2312 = vpop.f32.mrf.mxu0
    %v2313 = vadd.f32 0.0, %v2312
    %v2314 = vpop.f32.mrf.mxu0
    %v2315 = vadd.f32 0.0, %v2314
    %v2316 = vpop.f32.mrf.mxu0
    %v2317 = vpop.f32.mrf.mxu0
    %2318 = vdwg.mxu0
    %v2319 = vadd.f32 %v2232, %v2272
    %v2320 = vadd.f32 %v2233, %v2274
    %v2321 = vadd.f32 %v2234, %v2313
    %v2322 = vadd.f32 %v2235, %v2315
    %v2323 = vxor.u32 %v2319, 2147483648
    %v2324 = vmul.f32 %v2323, 1.442695
    %v2325 = vpow.pop %v2324
    %v2326 = vadd.f32 %v2325, 1.0
    %v2327 = vrcp.pop %v2326
    %v2328 = vmul.f32 1.0, %v2327
    %v2329 = vxor.u32 %v2320, 2147483648
    %v2330 = vmul.f32 %v2329, 1.442695
    %v2331 = vpow.pop %v2330
    %v2332 = vadd.f32 %v2331, 1.0
    %v2333 = vrcp.pop %v2332
    %v2334 = vmul.f32 1.0, %v2333
    %v2335 = vtanh.pop %v2321
    %v2336 = vxor.u32 %v2322, 2147483648
    %v2337 = vmul.f32 %v2336, 1.442695
    %v2338 = vpow.pop %v2337
    %v2339 = vadd.f32 %v2338, 1.0
    %v2340 = vrcp.pop %v2339
    %v2341 = vmul.f32 1.0, %v2340
    %v2342 = vmul.f32 %v2334, %v2224
    %v2343 = vmul.f32 %v2328, %v2335
    %v2344 = vadd.f32 %v2342, %v2343
    %v2345 = vtanh.pop %v2344
    %v2346 = vmul.f32 %v2341, %v2345
    %s2347 = scalar_lea.vmem [#allocation5], 48
    %2348 = vst [vmem:[%s2347] sm:$0xff] %v2346
    %s2349 = smul.u32 7, 4
    %s2350 = smul.addr %s2349, 8
    %s2351 = scalar_lea.vmem [#allocation4], %s2350
    %v2352 = vld [vmem:[%s2351] sm:$0xff]
    %v2353 = vld [vmem:[%s2351 + $0x8] sm:$0xff]
    %v2354 = vld [vmem:[%s2351 + $0x10] sm:$0xff]
    %v2355 = vld [vmem:[%s2351 + $0x18] sm:$0xff]
    %v2356 = vpack.c.bf16 %v2346, %v2346
    %2357 = vmatprep.subr.bf16.mxu0 %v1483
    %2358 = vmatpush1.bf16.msra.mxu0 %v1482
    %2359 = vmatprep.subr.bf16.mxu0 %v1479
    %2360 = vmatpush1.bf16.msra.mxu0 %v1478
    %2361 = vmatprep.subr.bf16.mxu0 %v1475
    %2362 = vmatpush1.bf16.msra.mxu0 %v1474
    %2363 = vmatprep.subr.bf16.mxu0 %v1471
    %2364 = vmatpush1.bf16.msra.mxu0 %v1470
    %2365 = vmatprep.subr.bf16.mxu0 %v1467
    %2366 = vmatpush1.bf16.msra.mxu0 %v1466
    %2367 = vmatprep.subr.bf16.mxu0 %v1463
    %2368 = vmatpush1.bf16.msra.mxu0 %v1462
    %2369 = vmatprep.subr.bf16.mxu0 %v1459
    %2370 = vmatpush1.bf16.msra.mxu0 %v1458
    %2371 = vmatprep.subr.bf16.mxu0 %v1455
    %2372 = vmatpush1.bf16.msra.mxu0 %v1454
    %2373 = vmatprep.subr.bf16.mxu0 0
    %2374 = vmatpush2.bf16.msra.mxu0 0
    %2375 = vmatprep.subr.bf16.mxu0 0
    %2376 = vmatpush2.bf16.msra.mxu0 0
    %2377 = vmatprep.subr.bf16.mxu0 0
    %2378 = vmatpush2.bf16.msra.mxu0 0
    %2379 = vmatprep.subr.bf16.mxu0 0
    %2380 = vmatpush2.bf16.msra.mxu0 0
    %2381 = vmatprep.subr.bf16.mxu0 0
    %2382 = vmatpush2.bf16.msra.mxu0 0
    %2383 = vmatprep.subr.bf16.mxu0 0
    %2384 = vmatpush2.bf16.msra.mxu0 0
    %2385 = vmatprep.subr.bf16.mxu0 0
    %2386 = vmatpush2.bf16.msra.mxu0 0
    %2387 = vmatprep.subr.bf16.mxu0 0
    %2388 = vmatpush2.bf16.msra.mxu0 0
    %2389 = vmatprep.mubr.bf16.mxu0 0
    %2390 = vmatmul.mubr.bf16.gmra.mxu0 %v2356
    %v2391 = vpop.f32.mrf.mxu0
    %v2392 = vadd.f32 0.0, %v2391
    %v2393 = vpop.f32.mrf.mxu0
    %v2394 = vadd.f32 0.0, %v2393
    %v2395 = vpop.f32.mrf.mxu0
    %v2396 = vpop.f32.mrf.mxu0
    %2397 = vdwg.mxu0
    %2398 = vmatprep.subr.bf16.mxu0 %v1485
    %2399 = vmatpush1.bf16.msra.mxu0 %v1484
    %2400 = vmatprep.subr.bf16.mxu0 %v1481
    %2401 = vmatpush1.bf16.msra.mxu0 %v1480
    %2402 = vmatprep.subr.bf16.mxu0 %v1477
    %2403 = vmatpush1.bf16.msra.mxu0 %v1476
    %2404 = vmatprep.subr.bf16.mxu0 %v1473
    %2405 = vmatpush1.bf16.msra.mxu0 %v1472
    %2406 = vmatprep.subr.bf16.mxu0 %v1469
    %2407 = vmatpush1.bf16.msra.mxu0 %v1468
    %2408 = vmatprep.subr.bf16.mxu0 %v1465
    %2409 = vmatpush1.bf16.msra.mxu0 %v1464
    %2410 = vmatprep.subr.bf16.mxu0 %v1461
    %2411 = vmatpush1.bf16.msra.mxu0 %v1460
    %2412 = vmatprep.subr.bf16.mxu0 %v1457
    %2413 = vmatpush1.bf16.msra.mxu0 %v1456
    %2414 = vmatprep.subr.bf16.mxu0 0
    %2415 = vmatpush2.bf16.msra.mxu0 0
    %2416 = vmatprep.subr.bf16.mxu0 0
    %2417 = vmatpush2.bf16.msra.mxu0 0
    %2418 = vmatprep.subr.bf16.mxu0 0
    %2419 = vmatpush2.bf16.msra.mxu0 0
    %2420 = vmatprep.subr.bf16.mxu0 0
    %2421 = vmatpush2.bf16.msra.mxu0 0
    %2422 = vmatprep.subr.bf16.mxu0 0
    %2423 = vmatpush2.bf16.msra.mxu0 0
    %2424 = vmatprep.subr.bf16.mxu0 0
    %2425 = vmatpush2.bf16.msra.mxu0 0
    %2426 = vmatprep.subr.bf16.mxu0 0
    %2427 = vmatpush2.bf16.msra.mxu0 0
    %2428 = vmatprep.subr.bf16.mxu0 0
    %2429 = vmatpush2.bf16.msra.mxu0 0
    %2430 = vmatprep.mubr.bf16.mxu0 0
    %2431 = vmatmul.mubr.bf16.gmra.mxu0 %v2356
    %v2432 = vpop.f32.mrf.mxu0
    %v2433 = vadd.f32 0.0, %v2432
    %v2434 = vpop.f32.mrf.mxu0
    %v2435 = vadd.f32 0.0, %v2434
    %v2436 = vpop.f32.mrf.mxu0
    %v2437 = vpop.f32.mrf.mxu0
    %2438 = vdwg.mxu0
    %v2439 = vadd.f32 %v2352, %v2392
    %v2440 = vadd.f32 %v2353, %v2394
    %v2441 = vadd.f32 %v2354, %v2433
    %v2442 = vadd.f32 %v2355, %v2435
    %v2443 = vxor.u32 %v2439, 2147483648
    %v2444 = vmul.f32 %v2443, 1.442695
    %v2445 = vpow.pop %v2444
    %v2446 = vadd.f32 %v2445, 1.0
    %v2447 = vrcp.pop %v2446
    %v2448 = vmul.f32 1.0, %v2447
    %v2449 = vxor.u32 %v2440, 2147483648
    %v2450 = vmul.f32 %v2449, 1.442695
    %v2451 = vpow.pop %v2450
    %v2452 = vadd.f32 %v2451, 1.0
    %v2453 = vrcp.pop %v2452
    %v2454 = vmul.f32 1.0, %v2453
    %v2455 = vtanh.pop %v2441
    %v2456 = vxor.u32 %v2442, 2147483648
    %v2457 = vmul.f32 %v2456, 1.442695
    %v2458 = vpow.pop %v2457
    %v2459 = vadd.f32 %v2458, 1.0
    %v2460 = vrcp.pop %v2459
    %v2461 = vmul.f32 1.0, %v2460
    %v2462 = vmul.f32 %v2454, %v2344
    %v2463 = vmul.f32 %v2448, %v2455
    %v2464 = vadd.f32 %v2462, %v2463
    %v2465 = vtanh.pop %v2464
    %v2466 = vmul.f32 %v2461, %v2465
    %s2467 = scalar_lea.vmem [#allocation5], 56
    %2468 = vst [vmem:[%s2467] sm:$0xff] %v2466
    %2469 = vst [vmem:[#allocation2] sm:$0xff] %v2466
    %2470 = vst [vmem:[#allocation3] sm:$0xff] %v2464
    %v2471 = vld [vmem:[#allocation5] sm:$0xff]
    %v2472 = vld [vmem:[#allocation5 + $0x8] sm:$0xff]
    %v2473 = vld [vmem:[#allocation5 + $0x10] sm:$0xff]
    %v2474 = vld [vmem:[#allocation5 + $0x18] sm:$0xff]
    %v2475 = vld [vmem:[#allocation5 + $0x20] sm:$0xff]
    %v2476 = vld [vmem:[#allocation5 + $0x28] sm:$0xff]
    %v2477 = vld [vmem:[#allocation5 + $0x30] sm:$0xff]
    %v2478 = vld [vmem:[#allocation5 + $0x38] sm:$0xff]
    %v2479 = vpack.c.bf16 %v2472, %v2471
    %v2480 = vpack.c.bf16 %v2474, %v2473
    %v2481 = vpack.c.bf16 %v2476, %v2475
    %v2482 = vpack.c.bf16 %v2478, %v2477
    %v2487 = vunpack.c.l.b16 %v2479
    %v2488 = vunpack.c.h.b16 %v2479
    %v2489 = vunpack.c.l.b16 %v2480
    %v2490 = vunpack.c.h.b16 %v2480
    %v2491 = vunpack.c.l.b16 %v2481
    %v2492 = vunpack.c.h.b16 %v2481
    %v2493 = vunpack.c.l.b16 %v2482
    %v2494 = vunpack.c.h.b16 %v2482
    %v2495 = vpack.c.b16 %v2487, %v2487
    %v2496 = vpack.c.b16 %v2488, %v2488
    %v2497 = vpack.c.b16 %v2489, %v2489
    %v2498 = vpack.c.b16 %v2490, %v2490
    %v2499 = vpack.c.b16 %v2491, %v2491
    %v2500 = vpack.c.b16 %v2492, %v2492
    %v2501 = vpack.c.b16 %v2493, %v2493
    %v2502 = vpack.c.b16 %v2494, %v2494
    %2511 = vst [vmem:[#allocation18] sm:$0xf] %v2495
    %2512 = vst [vmem:[#allocation18 + $0x4] sm:$0xf] %v2496
    %2513 = vst [vmem:[#allocation18 + $0x8] sm:$0xf] %v2497
    %2514 = vst [vmem:[#allocation18 + $0xc] sm:$0xf] %v2498
    %2515 = vst [vmem:[#allocation18 + $0x10] sm:$0xf] %v2499
    %2516 = vst [vmem:[#allocation18 + $0x14] sm:$0xf] %v2500
    %2517 = vst [vmem:[#allocation18 + $0x18] sm:$0xf] %v2501
    %2518 = vst [vmem:[#allocation18 + $0x1c] sm:$0xf] %v2502
    // Predicated region
    $region74: #{tpu_custom_call.1} parent=1 // pred_check
      _
    $region75: #{tpu_custom_call.1} parent=1 // pred_check_branch
      %2520 = sbr.rel (0) target = $region77
    $region76: #{tpu_custom_call.1} parent=1 // pred_region
      %s2522 = ssub.s32 512, 512
      %2523 = vsyncadd [#allocation8], %s2522
      %s2524 = sshll.u32 [#allocation18], 4
      %s2525 = int_to_ptr.vmem [resolvable:$true] %s2524
      %2530 = dma.vmem_to_hbm [thread:$0]  %s2525, 512, %s10, [#allocation8], 64, 64, 4
    $region77: #{tpu_custom_call.1} parent=1 // pred_fallthru
      _
    // Predicated region
    $region78: #{tpu_custom_call.1} parent=1 // pred_check
      _
    $region79: #{tpu_custom_call.1} parent=1 // pred_check_branch
      %2532 = sbr.rel (0) target = $region81
    $region80: #{tpu_custom_call.1} parent=1 // pred_region
      %2533 = dma.done [#allocation8], 512
    $region81: #{tpu_custom_call.1} parent=1 // pred_fallthru
      _
    %2534 = vsyncpa [#allocation7], 1
    %2535 = vsyncpa [#allocation10], 1
    %2536 = vsyncpa [#allocation13], 1
    %2537 = vsyncpa [#allocation16], 1
    %2538 = vsyncpa [#allocation8], 1

</llo_original>
